<compile_context>
chip_gen: v6e
topology: v6e:2x2x1
jax: 0.10.0
libtpu: 0.0.40
codegen_flags: <defaults>
</compile_context>

<pallas_src>
import jax
import jax.numpy as jnp
from jax.experimental import pallas as pl
from jax.experimental.pallas import tpu as pltpu

_NEG = -1e30  # logit for padded / extra-zeros vocab columns -> softmax prob 0


def attn_decoder_kernel(
    # scalar / HBM operands
    ids_ref,       # (B,)        int32  SMEM  token ids
    bg_ref,        # (1, 1)      f32    SMEM  W_gen bias
    emb_hbm_ref,   # (V, H)      f32    HBM   embedding table (row-gathered)
    # VMEM-resident operands (same block every grid step)
    h0_ref,        # (B, 2H)     f32
    c0_ref,        # (B, 2H)     f32
    enc_ref,       # (B, T, 2H)  f32
    story_ref,     # (B, T)      int32
    xz_ref,        # (B, NE)     f32
    wih_t_ref,     # (H, 8H)     f32
    whh_t_ref,     # (2H, 8H)    f32
    blstm_ref,     # (1, 8H)     f32
    w1h_t_ref,     # (2H, 2H)    f32
    w1e_t_ref,     # (2H, 2H)    f32
    b1_ref,        # (1, 2H)     f32
    w2_ref,        # (1, 2H)     f32
    wg_a_ref,      # (1, 2H)     f32
    wg_h_ref,      # (1, 2H)     f32
    wg_x_ref,      # (1, H)      f32
    # vocab-tiled operands (streamed, double-buffered by Pallas)
    fcw_h_ref,     # (2H, TV)    bf16
    fcw_a_ref,     # (2H, TV)    bf16
    fcb_ref,       # (1, TV)     f32
    # outputs
    out_ref,       # (NT, B, TV) f32   log(output), written on the last tile
    h_out_ref,     # (B, 2H)     f32
    c_out_ref,     # (B, 2H)     f32
    # scratch
    logits_sl_ref, # (NT, B, TV) f32   raw fc logits slab
    emb_x_ref,     # (B, H)      f32   gathered embedding rows
    h_st_ref,      # (B, 2H)     f32
    c_st_ref,      # (B, 2H)     f32
    a_app_ref,     # (B, 2H)     f32   context vector
    pgen_ref,      # (B, 1)      f32
    agen_ref,      # (B, T)      f32   (1 - p_gen) * a_t
    m_ref,         # (B, 1)      f32   running max
    l_ref,         # (B, 1)      f32   running sum(exp)
    gather_sem,    # (B,) DMA semaphores
):
    f32 = jnp.float32
    j = pl.program_id(0)
    n_tiles = pl.num_programs(0)

    b, two_h = h0_ref.shape
    t_k = enc_ref.shape[1]
    tile_v = fcb_ref.shape[1]
    voc = emb_hbm_ref.shape[0]
    n_extra = xz_ref.shape[1]

    # ------------------------------------------------------------------ #
    # Prologue (first vocab tile only): embedding gather, LSTM step,
    # additive attention, p_gen.  Results persist in VMEM scratch.
    # ------------------------------------------------------------------ #
    @pl.when(j == 0)
    def _prologue():
        # Row gather straight from HBM: O(B*H) bytes instead of the whole
        # (V, H) table / one-hot matmul.
        for bb in range(b):
            pltpu.make_async_copy(
                emb_hbm_ref.at[pl.ds(ids_ref[bb], 1), :],
                emb_x_ref.at[pl.ds(bb, 1), :],
                gather_sem.at[bb],
            ).start()
        for bb in range(b):
            pltpu.make_async_copy(
                emb_hbm_ref.at[pl.ds(ids_ref[bb], 1), :],
                emb_x_ref.at[pl.ds(bb, 1), :],
                gather_sem.at[bb],
            ).wait()
        x = emb_x_ref[...]                                         # (B, H)

        # -- single LSTM step (PyTorch gate order i, f, g, o) --
        h0 = h0_ref[...]
        c0 = c0_ref[...]
        gates = (jnp.dot(x, wih_t_ref[...], preferred_element_type=f32)
                 + jnp.dot(h0, whh_t_ref[...], preferred_element_type=f32)
                 + blstm_ref[...])                                 # (B, 8H)
        i_g = jax.nn.sigmoid(gates[:, 0 * two_h:1 * two_h])
        f_g = jax.nn.sigmoid(gates[:, 1 * two_h:2 * two_h])
        g_g = jnp.tanh(gates[:, 2 * two_h:3 * two_h])
        o_g = jax.nn.sigmoid(gates[:, 3 * two_h:4 * two_h])
        c_new = f_g * c0 + i_g * g_g
        h_new = o_g * jnp.tanh(c_new)
        h_st_ref[...] = h_new
        c_st_ref[...] = c_new

        # -- additive attention: e = w2 . tanh(W1h h + W1e enc + b1) --
        enc = enc_ref[...]                                         # (B, T, 2H)
        enc2d = enc.reshape(b * t_k, two_h)
        proj_e = jnp.dot(enc2d, w1e_t_ref[...],
                         preferred_element_type=f32).reshape(b, t_k, two_h)
        proj_h = jnp.dot(h_new, w1h_t_ref[...], preferred_element_type=f32)
        feat = jnp.tanh(proj_h[:, None, :] + proj_e + b1_ref[...][None, :, :])
        e_t = jnp.sum(feat * w2_ref[...][None, :, :], axis=-1)     # (B, T)

        e_max = jnp.max(e_t, axis=-1, keepdims=True)
        e_exp = jnp.exp(e_t - e_max)
        a_t = e_exp / jnp.sum(e_exp, axis=-1, keepdims=True)       # (B, T)

        # context vector as a batched MXU matmul (torch.bmm equivalent)
        a_app = jnp.einsum("bqt,btd->bqd", a_t[:, None, :], enc,
                           preferred_element_type=f32)[:, 0, :]    # (B, 2H)
        a_app_ref[...] = a_app

        # -- generation gate (wg split -> no lane concatenation) --
        pg_logit = (jnp.sum(a_app * wg_a_ref[...], axis=-1, keepdims=True)
                    + jnp.sum(h_new * wg_h_ref[...], axis=-1, keepdims=True)
                    + jnp.sum(x * wg_x_ref[...], axis=-1, keepdims=True)
                    + bg_ref[0, 0])
        p_gen = jnp.maximum(jax.nn.sigmoid(pg_logit), 1e-8)        # (B, 1)
        pgen_ref[...] = p_gen
        agen_ref[...] = (1.0 - p_gen) * a_t                        # (B, T)

        # online-softmax running stats over the (padded) vocab
        m_ref[...] = jnp.full((b, 1), _NEG, f32)
        l_ref[...] = jnp.zeros((b, 1), f32)

    # ------------------------------------------------------------------ #
    # Streaming (every tile): fc logits for this vocab tile (bf16 weights,
    # f32 accumulation), stash raw logits, update running max / sum.
    # ------------------------------------------------------------------ #
    h_new = h_st_ref[...]
    a_app = a_app_ref[...]
    logits = (jnp.dot(h_new.astype(jnp.bfloat16), fcw_h_ref[...],
                      preferred_element_type=f32)
              + jnp.dot(a_app.astype(jnp.bfloat16), fcw_a_ref[...],
                        preferred_element_type=f32)
              + fcb_ref[...])                                      # (B, TV)
    logits_sl_ref[j] = logits

    t_max = jnp.max(logits, axis=-1, keepdims=True)
    m_old = m_ref[...]
    m_new = jnp.maximum(m_old, t_max)
    l_ref[...] = (l_ref[...] * jnp.exp(m_old - m_new)
                  + jnp.sum(jnp.exp(logits - m_new), axis=-1, keepdims=True))
    m_ref[...] = m_new

    # ------------------------------------------------------------------ #
    # Finalize (last tile): normalize, apply p_gen, add extra_zeros and the
    # pointer scatter-add, clamp + log, write the output slab.
    # ------------------------------------------------------------------ #
    @pl.when(j == n_tiles - 1)
    def _finalize():
        logits_all = logits_sl_ref[...]                            # (NT, B, TV)
        m = m_ref[...][None, :, :]                                 # (1, B, 1)
        # TODO(synk): pl.reciprocal(l, approx=True) would push this divide to
        # the EUP on hardware; a plain divide keeps interpreter support.
        scale = (pgen_ref[...] / l_ref[...])[None, :, :]           # (1, B, 1)
        acc = jnp.exp(logits_all - m) * scale                      # p_gen * p_vocab

        col = (jax.lax.broadcasted_iota(jnp.int32, logits_all.shape, 0) * tile_v
               + jax.lax.broadcasted_iota(jnp.int32, logits_all.shape, 2))

        # extra_zeros region (columns voc .. voc + n_extra - 1)
        for kk in range(n_extra):
            acc = acc + jnp.where(col == voc + kk,
                                  xz_ref[:, kk:kk + 1][None, :, :], 0.0)

        # pointer-generator scatter_add of (1 - p_gen) * a_t onto story ids.
        # Static unroll over T_k keeps the working set at B x V_pad instead of
        # a (B, T_k, V_ext) one-hot.
        story = story_ref[...]
        agen = agen_ref[...]
        for t in range(t_k):
            acc = acc + jnp.where(col == story[:, t:t + 1][None, :, :],
                                  agen[:, t:t + 1][None, :, :], 0.0)

        out_ref[...] = jnp.log(jnp.maximum(acc, 1e-8))
        h_out_ref[...] = h_st_ref[...]
        c_out_ref[...] = c_st_ref[...]


def _round_up(x, m):
    return ((x + m - 1) // m) * m


def init_params(key, voc_size, hidden_dim):
    ks = jax.random.split(key, 12)
    s = 0.1
    two_h = 2 * hidden_dim
    f32 = jnp.float32
    return {
        "emb":  (jax.random.normal(ks[0], (voc_size, hidden_dim)) * s).astype(f32),
        "w_ih": (jax.random.normal(ks[1], (4 * two_h, hidden_dim)) * s).astype(f32),
        "w_hh": (jax.random.normal(ks[2], (4 * two_h, two_h)) * s).astype(f32),
        "b_ih": (jax.random.normal(ks[3], (4 * two_h,)) * s).astype(f32),
        "b_hh": (jax.random.normal(ks[4], (4 * two_h,)) * s).astype(f32),
        "w1":   (jax.random.normal(ks[5], (two_h, 2 * two_h)) * s).astype(f32),
        "b1":   (jax.random.normal(ks[6], (two_h,)) * s).astype(f32),
        "w2":   (jax.random.normal(ks[7], (1, two_h)) * s).astype(f32),
        "fc_w": (jax.random.normal(ks[8], (voc_size, 2 * two_h)) * s).astype(f32),
        "fc_b": (jax.random.normal(ks[9], (voc_size,)) * s).astype(f32),
        # W_gen: Linear(2H + 2H + H, 1)  -> weight shape (1, 5H)
        "wg":   (jax.random.normal(ks[10], (1, two_h + two_h + hidden_dim)) * s).astype(f32),
        "bg":   (jax.random.normal(ks[11], (1,)) * s).astype(f32),
    }


def attn_decoder(params, input_ids, decoder_hidden, cell, encoder_outputs,
                 story_extended, extra_zeros, *, tile_v=None):
    """One pointer-generator decoder step.  Returns (log_probs, (h, c))."""
    b, t_k, two_h = encoder_outputs.shape
    voc, hid = params["emb"].shape
    assert two_h == 2 * hid
    n_extra = extra_zeros.shape[1]
    v_ext = voc + n_extra

    # ---- vocab tiling: stream the fc weight from HBM in lane-dense tiles ----
    if tile_v is None:
        # sized so double-buffered bf16 weight tiles fit comfortably in v7x's
        # 64 MiB VMEM (and the 32 MiB default scoped limit) at real H/V sizes.
        tile_v = min(1024, _round_up(v_ext, 128))
    tile_v = _round_up(tile_v, 128)
    v_pad = _round_up(v_ext, tile_v)
    n_tiles = v_pad // tile_v

    f32 = jnp.float32
    bf16 = jnp.bfloat16

    # ---- glue: squeeze layer dim, pre-transpose / split / pad parameters ----
    h0 = decoder_hidden[0].astype(f32)                      # (B, 2H)
    c0 = cell[0].astype(f32)                                # (B, 2H)
    ids = input_ids.reshape(b).astype(jnp.int32)            # (B,)
    story = story_extended.astype(jnp.int32)                # (B, T)
    xz = extra_zeros.astype(f32)                            # (B, NE)
    enc = encoder_outputs.astype(f32)                       # (B, T, 2H)

    wih_t = params["w_ih"].T.astype(f32)                    # (H, 8H)
    whh_t = params["w_hh"].T.astype(f32)                    # (2H, 8H)
    b_lstm = (params["b_ih"] + params["b_hh"]).reshape(1, -1).astype(f32)
    w1h_t = params["w1"][:, :two_h].T.astype(f32)           # (2H, 2H)
    w1e_t = params["w1"][:, two_h:].T.astype(f32)           # (2H, 2H)
    b1 = params["b1"].reshape(1, -1).astype(f32)            # (1, 2H)
    w2 = params["w2"].astype(f32)                           # (1, 2H)
    wg = params["wg"].astype(f32)                           # (1, 5H)
    wg_a = wg[:, :two_h]                                    # (1, 2H)
    wg_h = wg[:, two_h:2 * two_h]                           # (1, 2H)
    wg_x = wg[:, 2 * two_h:]                                # (1, H)
    bg = params["bg"].reshape(1, 1).astype(f32)             # (1, 1) -> SMEM

    # fc split into hidden / attention halves (no lane concat in the kernel),
    # padded to the tiled width, streamed as bf16 (f32 accumulation on MXU).
    pad_w = ((0, 0), (0, v_pad - voc))
    fcw_h = jnp.pad(params["fc_w"][:, :two_h].T.astype(f32), pad_w).astype(bf16)
    fcw_a = jnp.pad(params["fc_w"][:, two_h:].T.astype(f32), pad_w).astype(bf16)
    # padded / extra-zeros columns get a huge negative bias -> softmax prob 0
    fcb = jnp.pad(params["fc_b"].astype(f32), (0, v_pad - voc),
                  constant_values=_NEG).reshape(1, v_pad)

    emb = params["emb"].astype(f32)                         # stays in HBM

    kernel_inputs = (ids, bg, emb,
                     h0, c0, enc, story, xz,
                     wih_t, whh_t, b_lstm,
                     w1h_t, w1e_t, b1, w2,
                     wg_a, wg_h, wg_x,
                     fcw_h, fcw_a, fcb)

    def _full(shape):
        zeros = (0,) * len(shape)
        return pl.BlockSpec(shape, lambda j: zeros)

    in_specs = [
        pl.BlockSpec(memory_space=pltpu.MemorySpace.SMEM),   # ids
        pl.BlockSpec(memory_space=pltpu.MemorySpace.SMEM),   # bg
        pl.BlockSpec(memory_space=pl.ANY),                   # emb (HBM)
        _full(h0.shape), _full(c0.shape), _full(enc.shape),
        _full(story.shape), _full(xz.shape),
        _full(wih_t.shape), _full(whh_t.shape), _full(b_lstm.shape),
        _full(w1h_t.shape), _full(w1e_t.shape), _full(b1.shape), _full(w2.shape),
        _full(wg_a.shape), _full(wg_h.shape), _full(wg_x.shape),
        pl.BlockSpec((two_h, tile_v), lambda j: (0, j)),     # fcw_h tile
        pl.BlockSpec((two_h, tile_v), lambda j: (0, j)),     # fcw_a tile
        pl.BlockSpec((1, tile_v), lambda j: (0, j)),         # fcb tile
    ]

    out_shapes = (
        jax.ShapeDtypeStruct((n_tiles, b, tile_v), f32),     # log-prob slab
        jax.ShapeDtypeStruct((b, two_h), f32),               # new hidden
        jax.ShapeDtypeStruct((b, two_h), f32),               # new cell
    )
    out_specs = (
        pl.BlockSpec((n_tiles, b, tile_v), lambda j: (0, 0, 0)),
        pl.BlockSpec((b, two_h), lambda j: (0, 0)),
        pl.BlockSpec((b, two_h), lambda j: (0, 0)),
    )

    scratch_shapes = [
        pltpu.VMEM((n_tiles, b, tile_v), f32),   # raw logits slab
        pltpu.VMEM((b, hid), f32),               # gathered embedding rows
        pltpu.VMEM((b, two_h), f32),             # h_new
        pltpu.VMEM((b, two_h), f32),             # c_new
        pltpu.VMEM((b, two_h), f32),             # context vector
        pltpu.VMEM((b, 1), f32),                 # p_gen
        pltpu.VMEM((b, t_k), f32),               # (1 - p_gen) * a_t
        pltpu.VMEM((b, 1), f32),                 # running max
        pltpu.VMEM((b, 1), f32),                 # running sum
        pltpu.SemaphoreType.DMA((b,)),           # embedding gather semaphores
    ]

    cost = pl.CostEstimate(
        flops=int(2 * b * (2 * two_h) * v_pad            # fc matmuls
                  + 2 * b * t_k * two_h * two_h          # attention projection
                  + 2 * b * (hid + two_h) * 4 * two_h),  # LSTM gates
        transcendentals=int(b * (2 * v_pad + 3 * t_k + 6 * two_h)),
        bytes_accessed=int(2 * two_h * v_pad * 2         # bf16 fc weight stream
                           + enc.size * 4
                           + n_tiles * b * tile_v * 4    # output slab
                           + b * hid * 4),               # gathered emb rows
    )

    log_slab, h_new, c_new = pl.pallas_call(
        attn_decoder_kernel,
        out_shape=out_shapes,
        grid=(n_tiles,),
        in_specs=in_specs,
        out_specs=out_specs,
        scratch_shapes=scratch_shapes,
        compiler_params=pltpu.CompilerParams(
            # the vocab axis carries resident scratch / running softmax state
            dimension_semantics=("arbitrary",)),
        cost_estimate=cost,
    )(*kernel_inputs)

    # (NT, B, TV) -> (B, V_pad) -> slice the real extended vocab
    log_out = log_slab.transpose(1, 0, 2).reshape(b, v_pad)[:, :v_ext]
    # restore the PyTorch (num_layers=1, B, 2H) convention for hidden / cell
    return log_out, (h_new[None, :, :], c_new[None, :, :])


def attn_decoder_ref(params, input_ids, decoder_hidden, cell, encoder_outputs,
                     story_extended, extra_zeros):
    """Pure-JAX reference mirroring the PyTorch module (bf16-rounded fc_w)."""
    f32 = jnp.float32
    x = params["emb"][input_ids].astype(f32)                 # (B, H)
    h0 = decoder_hidden[0].astype(f32)
    c0 = cell[0].astype(f32)
    two_h = h0.shape[1]

    gates = (x @ params["w_ih"].T + params["b_ih"]
             + h0 @ params["w_hh"].T + params["b_hh"])
    i_g = jax.nn.sigmoid(gates[:, :two_h])
    f_g = jax.nn.sigmoid(gates[:, two_h:2 * two_h])
    g_g = jnp.tanh(gates[:, 2 * two_h:3 * two_h])
    o_g = jax.nn.sigmoid(gates[:, 3 * two_h:])
    c1 = f_g * c0 + i_g * g_g
    h1 = o_g * jnp.tanh(c1)

    b, t_k, n = encoder_outputs.shape
    enc = encoder_outputs.astype(f32)
    att_in = jnp.concatenate(
        [jnp.broadcast_to(h1[:, None, :], (b, t_k, n)), enc], axis=2)
    feat = jnp.tanh(att_in @ params["w1"].T + params["b1"])
    e_t = (feat @ params["w2"].T)[..., 0]
    a_t = jax.nn.softmax(e_t, axis=1)
    a_app = jnp.einsum("bt,btd->bd", a_t, enc)

    fc_w = params["fc_w"].astype(jnp.bfloat16).astype(f32)   # match kernel dtype
    s_t_h_t = jnp.concatenate([h1, a_app], axis=1)
    p_vocab = jax.nn.softmax(s_t_h_t @ fc_w.T + params["fc_b"], axis=1)

    cat_gen = jnp.concatenate([a_app, h1, x], axis=1)
    p_gen = jnp.maximum(
        jax.nn.sigmoid(cat_gen @ params["wg"].T + params["bg"]), 1e-8)
    p_vocab = p_vocab * p_gen
    a_pg = (1.0 - p_gen) * a_t

    p_cat = jnp.concatenate([p_vocab, extra_zeros.astype(f32)], axis=1)
    v_ext = p_cat.shape[1]
    oh = jax.nn.one_hot(story_extended, v_ext, dtype=f32)
    out = jnp.maximum(p_cat + jnp.einsum("bt,btv->bv", a_pg, oh), 1e-8)
    return jnp.log(out), (h1[None], c1[None])


if __name__ == "__main__":
    VOC, HID, B, TK, NEXTRA = 200, 16, 2, 8, 8

    key = jax.random.PRNGKey(0)
    k_p, k_in, k_h, k_c, k_enc, k_story = jax.random.split(key, 6)

    params = init_params(k_p, VOC, HID)
    input_ids = jax.random.randint(k_in, (B,), 0, VOC)
    decoder_hidden = jax.random.normal(k_h, (1, B, 2 * HID), jnp.float32)
    cell = jax.random.normal(k_c, (1, B, 2 * HID), jnp.float32)
    encoder_outputs = jax.random.normal(k_enc, (B, TK, 2 * HID), jnp.float32)
    story_extended = jax.random.randint(k_story, (B, TK), 0, VOC + NEXTRA)
    extra_zeros = jnp.zeros((B, NEXTRA), jnp.float32)

    # tile_v=128 forces a multi-tile vocab grid so the streaming path runs.
    log_out, (h_new, c_new) = attn_decoder(
        params, input_ids, decoder_hidden, cell,
        encoder_outputs, story_extended, extra_zeros, tile_v=128)
    jax.block_until_ready((log_out, h_new, c_new))

    ref_out, (ref_h, ref_c) = attn_decoder_ref(
        params, input_ids, decoder_hidden, cell,
        encoder_outputs, story_extended, extra_zeros)

    assert log_out.shape == (B, VOC + NEXTRA)
    assert h_new.shape == (1, B, 2 * HID) and c_new.shape == (1, B, 2 * HID)
    assert bool(jnp.all(jnp.isfinite(log_out)))
    assert bool(jnp.allclose(h_new, ref_h, atol=2e-2, rtol=2e-2))
    assert bool(jnp.allclose(c_new, ref_c, atol=2e-2, rtol=2e-2))
    assert bool(jnp.allclose(log_out, ref_out, atol=5e-2, rtol=5e-2))
    print("KERNEL_OK")
</pallas_src>

<mosaic_0001>
module attributes {stable_mosaic.version = 11 : i64} {
  func.func @attn_decoder_kernel(%arg0: i32, %arg1: memref<2xi32, #tpu.memory_space<smem>>, %arg2: memref<1x1xf32, #tpu.memory_space<smem>>, %arg3: memref<200x16xf32, #tpu.memory_space<any>>, %arg4: memref<2x32xf32, #tpu.memory_space<vmem>>, %arg5: memref<2x32xf32, #tpu.memory_space<vmem>>, %arg6: memref<2x8x32xf32, #tpu.memory_space<vmem>>, %arg7: memref<2x8xi32, #tpu.memory_space<vmem>>, %arg8: memref<2x8xf32, #tpu.memory_space<vmem>>, %arg9: memref<16x128xf32, #tpu.memory_space<vmem>>, %arg10: memref<32x128xf32, #tpu.memory_space<vmem>>, %arg11: memref<1x128xf32, #tpu.memory_space<vmem>>, %arg12: memref<32x32xf32, #tpu.memory_space<vmem>>, %arg13: memref<32x32xf32, #tpu.memory_space<vmem>>, %arg14: memref<1x32xf32, #tpu.memory_space<vmem>>, %arg15: memref<1x32xf32, #tpu.memory_space<vmem>>, %arg16: memref<1x32xf32, #tpu.memory_space<vmem>>, %arg17: memref<1x32xf32, #tpu.memory_space<vmem>>, %arg18: memref<1x16xf32, #tpu.memory_space<vmem>>, %arg19: memref<32x128xbf16, #tpu.memory_space<vmem>>, %arg20: memref<32x128xbf16, #tpu.memory_space<vmem>>, %arg21: memref<1x128xf32, #tpu.memory_space<vmem>>, %arg22: memref<2x2x128xf32, #tpu.memory_space<vmem>>, %arg23: memref<2x32xf32, #tpu.memory_space<vmem>>, %arg24: memref<2x32xf32, #tpu.memory_space<vmem>>, %arg25: memref<2x2x128xf32, #tpu.memory_space<vmem>>, %arg26: memref<2x16xf32, #tpu.memory_space<vmem>>, %arg27: memref<2x32xf32, #tpu.memory_space<vmem>>, %arg28: memref<2x32xf32, #tpu.memory_space<vmem>>, %arg29: memref<2x32xf32, #tpu.memory_space<vmem>>, %arg30: memref<2x1xf32, #tpu.memory_space<vmem>>, %arg31: memref<2x8xf32, #tpu.memory_space<vmem>>, %arg32: memref<2x1xf32, #tpu.memory_space<vmem>>, %arg33: memref<2x1xf32, #tpu.memory_space<vmem>>, %arg34: memref<2x!tpu.dma_semaphore, #tpu.memory_space<semaphore_mem>>) attributes {dimension_semantics = [#tpu.dimension_semantics<arbitrary>], iteration_bounds = array<i64: 2>, scalar_prefetch = 0 : i64, scratch_operands = 10 : i64, tpu.core_type = #tpu.core_type<tc>, window_params = [{transform_indices = @transform_0, window_bounds = array<i64: 2>}, {transform_indices = @transform_1, window_bounds = array<i64: 1, 1>}, {}, {pipeline_mode = #tpu.pipeline_mode<synchronous>, transform_indices = @transform_3, window_bounds = array<i64: 2, 32>}, {pipeline_mode = #tpu.pipeline_mode<synchronous>, transform_indices = @transform_4, window_bounds = array<i64: 2, 32>}, {pipeline_mode = #tpu.pipeline_mode<synchronous>, transform_indices = @transform_5, window_bounds = array<i64: 2, 8, 32>}, {pipeline_mode = #tpu.pipeline_mode<synchronous>, transform_indices = @transform_6, window_bounds = array<i64: 2, 8>}, {pipeline_mode = #tpu.pipeline_mode<synchronous>, transform_indices = @transform_7, window_bounds = array<i64: 2, 8>}, {pipeline_mode = #tpu.pipeline_mode<synchronous>, transform_indices = @transform_8, window_bounds = array<i64: 16, 128>}, {pipeline_mode = #tpu.pipeline_mode<synchronous>, transform_indices = @transform_9, window_bounds = array<i64: 32, 128>}, {pipeline_mode = #tpu.pipeline_mode<synchronous>, transform_indices = @transform_10, window_bounds = array<i64: 1, 128>}, {pipeline_mode = #tpu.pipeline_mode<synchronous>, transform_indices = @transform_11, window_bounds = array<i64: 32, 32>}, {pipeline_mode = #tpu.pipeline_mode<synchronous>, transform_indices = @transform_12, window_bounds = array<i64: 32, 32>}, {pipeline_mode = #tpu.pipeline_mode<synchronous>, transform_indices = @transform_13, window_bounds = array<i64: 1, 32>}, {pipeline_mode = #tpu.pipeline_mode<synchronous>, transform_indices = @transform_14, window_bounds = array<i64: 1, 32>}, {pipeline_mode = #tpu.pipeline_mode<synchronous>, transform_indices = @transform_15, window_bounds = array<i64: 1, 32>}, {pipeline_mode = #tpu.pipeline_mode<synchronous>, transform_indices = @transform_16, window_bounds = array<i64: 1, 32>}, {pipeline_mode = #tpu.pipeline_mode<synchronous>, transform_indices = @transform_17, window_bounds = array<i64: 1, 16>}, {transform_indices = @transform_18, window_bounds = array<i64: 32, 128>}, {transform_indices = @transform_19, window_bounds = array<i64: 32, 128>}, {transform_indices = @transform_20, window_bounds = array<i64: 1, 128>}, {pipeline_mode = #tpu.pipeline_mode<synchronous>, transform_indices = @transform_21, window_bounds = array<i64: 2, 2, 128>}, {pipeline_mode = #tpu.pipeline_mode<synchronous>, transform_indices = @transform_22, window_bounds = array<i64: 2, 32>}, {pipeline_mode = #tpu.pipeline_mode<synchronous>, transform_indices = @transform_23, window_bounds = array<i64: 2, 32>}]} {
    %c0_i32 = arith.constant 0 : i32
    %0 = arith.cmpi eq, %arg0, %c0_i32 : i32
    %1 = arith.extui %0 : i1 to i32
    %c0_i32_0 = arith.constant 0 : i32
    %2 = arith.cmpi ne, %1, %c0_i32_0 : i32
    scf.if %2 {
      %c0_24 = arith.constant 0 : index
      %38 = memref.load %arg1[%c0_24] : memref<2xi32, #tpu.memory_space<smem>>
      %c0_i32_25 = arith.constant 0 : i32
      %c0_i32_26 = arith.constant 0 : i32
      %39 = tpu.memref_slice %arg3[%38, %c0_i32_26] : memref<200x16xf32, #tpu.memory_space<any>> -> memref<1x16xf32, #tpu.memory_space<any>>
      %c0_i32_27 = arith.constant 0 : i32
      %c0_i32_28 = arith.constant 0 : i32
      %40 = tpu.memref_slice %arg26[%c0_i32_27, %c0_i32_28] : memref<2x16xf32, #tpu.memory_space<vmem>> -> memref<1x16xf32, #tpu.memory_space<vmem>>
      %41 = tpu.memref_slice %arg34[%c0_i32_25] : memref<2x!tpu.dma_semaphore, #tpu.memory_space<semaphore_mem>> -> memref<1x!tpu.dma_semaphore, #tpu.memory_space<semaphore_mem>>
      %42 = tpu.memref_squeeze %41 : memref<1x!tpu.dma_semaphore, #tpu.memory_space<semaphore_mem>> -> memref<!tpu.dma_semaphore, #tpu.memory_space<semaphore_mem>>
      tpu.enqueue_dma source(%39 : memref<1x16xf32, #tpu.memory_space<any>>) target(%40 : memref<1x16xf32, #tpu.memory_space<vmem>>) target_semaphore(%42 : memref<!tpu.dma_semaphore, #tpu.memory_space<semaphore_mem>>)
      %c1 = arith.constant 1 : index
      %43 = memref.load %arg1[%c1] : memref<2xi32, #tpu.memory_space<smem>>
      %c1_i32_29 = arith.constant 1 : i32
      %c0_i32_30 = arith.constant 0 : i32
      %44 = tpu.memref_slice %arg3[%43, %c0_i32_30] : memref<200x16xf32, #tpu.memory_space<any>> -> memref<1x16xf32, #tpu.memory_space<any>>
      %c1_i32_31 = arith.constant 1 : i32
      %c0_i32_32 = arith.constant 0 : i32
      %45 = tpu.memref_slice %arg26[%c1_i32_31, %c0_i32_32] : memref<2x16xf32, #tpu.memory_space<vmem>> -> memref<1x16xf32, #tpu.memory_space<vmem>>
      %46 = tpu.memref_slice %arg34[%c1_i32_29] : memref<2x!tpu.dma_semaphore, #tpu.memory_space<semaphore_mem>> -> memref<1x!tpu.dma_semaphore, #tpu.memory_space<semaphore_mem>>
      %47 = tpu.memref_squeeze %46 : memref<1x!tpu.dma_semaphore, #tpu.memory_space<semaphore_mem>> -> memref<!tpu.dma_semaphore, #tpu.memory_space<semaphore_mem>>
      tpu.enqueue_dma source(%44 : memref<1x16xf32, #tpu.memory_space<any>>) target(%45 : memref<1x16xf32, #tpu.memory_space<vmem>>) target_semaphore(%47 : memref<!tpu.dma_semaphore, #tpu.memory_space<semaphore_mem>>)
      %c0_33 = arith.constant 0 : index
      %48 = memref.load %arg1[%c0_33] : memref<2xi32, #tpu.memory_space<smem>>
      %c0_i32_34 = arith.constant 0 : i32
      %c0_i32_35 = arith.constant 0 : i32
      %49 = tpu.memref_slice %arg3[%48, %c0_i32_35] : memref<200x16xf32, #tpu.memory_space<any>> -> memref<1x16xf32, #tpu.memory_space<any>>
      %c0_i32_36 = arith.constant 0 : i32
      %c0_i32_37 = arith.constant 0 : i32
      %50 = tpu.memref_slice %arg26[%c0_i32_36, %c0_i32_37] : memref<2x16xf32, #tpu.memory_space<vmem>> -> memref<1x16xf32, #tpu.memory_space<vmem>>
      %51 = tpu.memref_slice %arg34[%c0_i32_34] : memref<2x!tpu.dma_semaphore, #tpu.memory_space<semaphore_mem>> -> memref<1x!tpu.dma_semaphore, #tpu.memory_space<semaphore_mem>>
      %52 = tpu.memref_squeeze %51 : memref<1x!tpu.dma_semaphore, #tpu.memory_space<semaphore_mem>> -> memref<!tpu.dma_semaphore, #tpu.memory_space<semaphore_mem>>
      tpu.wait_dma2 semaphore(%52 : memref<!tpu.dma_semaphore, #tpu.memory_space<semaphore_mem>>) src(%49 : memref<1x16xf32, #tpu.memory_space<any>>) dst(%50 : memref<1x16xf32, #tpu.memory_space<vmem>>)
      %c1_38 = arith.constant 1 : index
      %53 = memref.load %arg1[%c1_38] : memref<2xi32, #tpu.memory_space<smem>>
      %c1_i32_39 = arith.constant 1 : i32
      %c0_i32_40 = arith.constant 0 : i32
      %54 = tpu.memref_slice %arg3[%53, %c0_i32_40] : memref<200x16xf32, #tpu.memory_space<any>> -> memref<1x16xf32, #tpu.memory_space<any>>
      %c1_i32_41 = arith.constant 1 : i32
      %c0_i32_42 = arith.constant 0 : i32
      %55 = tpu.memref_slice %arg26[%c1_i32_41, %c0_i32_42] : memref<2x16xf32, #tpu.memory_space<vmem>> -> memref<1x16xf32, #tpu.memory_space<vmem>>
      %56 = tpu.memref_slice %arg34[%c1_i32_39] : memref<2x!tpu.dma_semaphore, #tpu.memory_space<semaphore_mem>> -> memref<1x!tpu.dma_semaphore, #tpu.memory_space<semaphore_mem>>
      %57 = tpu.memref_squeeze %56 : memref<1x!tpu.dma_semaphore, #tpu.memory_space<semaphore_mem>> -> memref<!tpu.dma_semaphore, #tpu.memory_space<semaphore_mem>>
      tpu.wait_dma2 semaphore(%57 : memref<!tpu.dma_semaphore, #tpu.memory_space<semaphore_mem>>) src(%54 : memref<1x16xf32, #tpu.memory_space<any>>) dst(%55 : memref<1x16xf32, #tpu.memory_space<vmem>>)
      %c0_43 = arith.constant 0 : index
      %c0_44 = arith.constant 0 : index
      %58 = vector.load %arg26[%c0_43, %c0_44] : memref<2x16xf32, #tpu.memory_space<vmem>>, vector<2x16xf32>
      %c0_45 = arith.constant 0 : index
      %c0_46 = arith.constant 0 : index
      %59 = vector.load %arg4[%c0_45, %c0_46] : memref<2x32xf32, #tpu.memory_space<vmem>>, vector<2x32xf32>
      %c0_47 = arith.constant 0 : index
      %c0_48 = arith.constant 0 : index
      %60 = vector.load %arg5[%c0_47, %c0_48] : memref<2x32xf32, #tpu.memory_space<vmem>>, vector<2x32xf32>
      %c0_49 = arith.constant 0 : index
      %c0_50 = arith.constant 0 : index
      %61 = vector.load %arg9[%c0_49, %c0_50] : memref<16x128xf32, #tpu.memory_space<vmem>>, vector<16x128xf32>
      %cst_51 = arith.constant dense<0.000000e+00> : vector<2x128xf32>
      %62 = tpu.matmul %58, %61, %cst_51 {dimension_numbers = #tpu.dot_dimension_numbers<[1], [0], [0], [1], [0, 0, 1, 1], [], []>} : vector<2x16xf32>, vector<16x128xf32>, vector<2x128xf32> -> vector<2x128xf32>
      %c0_52 = arith.constant 0 : index
      %c0_53 = arith.constant 0 : index
      %63 = vector.load %arg10[%c0_52, %c0_53] : memref<32x128xf32, #tpu.memory_space<vmem>>, vector<32x128xf32>
      %cst_54 = arith.constant dense<0.000000e+00> : vector<2x128xf32>
      %64 = tpu.matmul %59, %63, %cst_54 {dimension_numbers = #tpu.dot_dimension_numbers<[1], [0], [0], [1], [0, 0, 1, 1], [], []>} : vector<2x32xf32>, vector<32x128xf32>, vector<2x128xf32> -> vector<2x128xf32>
      %65 = arith.addf %62, %64 : vector<2x128xf32>
      %c0_55 = arith.constant 0 : index
      %c0_56 = arith.constant 0 : index
      %66 = vector.load %arg11[%c0_55, %c0_56] : memref<1x128xf32, #tpu.memory_space<vmem>>, vector<1x128xf32>
      %67 = vector.broadcast %66 : vector<1x128xf32> to vector<2x128xf32>
      %68 = arith.addf %65, %67 : vector<2x128xf32>
      %69 = vector.extract_strided_slice %68 {offsets = [0, 0], sizes = [2, 32], strides = [1, 1]} : vector<2x128xf32> to vector<2x32xf32>
      %70 = arith.negf %69 : vector<2x32xf32>
      %71 = math.exp %70 : vector<2x32xf32>
      %cst_57 = arith.constant 1.000000e+00 : f32
      %72 = vector.broadcast %cst_57 : f32 to vector<2x32xf32>
      %73 = arith.addf %72, %71 : vector<2x32xf32>
      %74 = arith.divf %72, %73 : vector<2x32xf32>
      %75 = vector.extract_strided_slice %68 {offsets = [0, 32], sizes = [2, 32], strides = [1, 1]} : vector<2x128xf32> to vector<2x32xf32>
      %76 = arith.negf %75 : vector<2x32xf32>
      %77 = math.exp %76 : vector<2x32xf32>
      %cst_58 = arith.constant 1.000000e+00 : f32
      %78 = vector.broadcast %cst_58 : f32 to vector<2x32xf32>
      %79 = arith.addf %78, %77 : vector<2x32xf32>
      %80 = arith.divf %78, %79 : vector<2x32xf32>
      %81 = vector.extract_strided_slice %68 {offsets = [0, 64], sizes = [2, 32], strides = [1, 1]} : vector<2x128xf32> to vector<2x32xf32>
      %82 = math.tanh %81 : vector<2x32xf32>
      %83 = vector.extract_strided_slice %68 {offsets = [0, 96], sizes = [2, 32], strides = [1, 1]} : vector<2x128xf32> to vector<2x32xf32>
      %84 = arith.negf %83 : vector<2x32xf32>
      %85 = math.exp %84 : vector<2x32xf32>
      %cst_59 = arith.constant 1.000000e+00 : f32
      %86 = vector.broadcast %cst_59 : f32 to vector<2x32xf32>
      %87 = arith.addf %86, %85 : vector<2x32xf32>
      %88 = arith.divf %86, %87 : vector<2x32xf32>
      %89 = arith.mulf %80, %60 : vector<2x32xf32>
      %90 = arith.mulf %74, %82 : vector<2x32xf32>
      %91 = arith.addf %89, %90 : vector<2x32xf32>
      %92 = math.tanh %91 : vector<2x32xf32>
      %93 = arith.mulf %88, %92 : vector<2x32xf32>
      %c0_60 = arith.constant 0 : index
      %c0_61 = arith.constant 0 : index
      %94 = vector.load %arg27[%c0_60, %c0_61] : memref<2x32xf32, #tpu.memory_space<vmem>>, vector<2x32xf32>
      tpu.vector_store %arg27[%c0_60, %c0_61], %93 {strides = array<i32>} : memref<2x32xf32, #tpu.memory_space<vmem>>, vector<2x32xf32>,
      %c0_62 = arith.constant 0 : index
      %c0_63 = arith.constant 0 : index
      %95 = vector.load %arg28[%c0_62, %c0_63] : memref<2x32xf32, #tpu.memory_space<vmem>>, vector<2x32xf32>
      tpu.vector_store %arg28[%c0_62, %c0_63], %91 {strides = array<i32>} : memref<2x32xf32, #tpu.memory_space<vmem>>, vector<2x32xf32>,
      %c0_64 = arith.constant 0 : index
      %c0_65 = arith.constant 0 : index
      %c0_66 = arith.constant 0 : index
      %96 = vector.load %arg6[%c0_64, %c0_65, %c0_66] : memref<2x8x32xf32, #tpu.memory_space<vmem>>, vector<2x8x32xf32>
      %97 = vector.shape_cast %96 : vector<2x8x32xf32> to vector<16x32xf32>
      %c0_67 = arith.constant 0 : index
      %c0_68 = arith.constant 0 : index
      %98 = vector.load %arg13[%c0_67, %c0_68] : memref<32x32xf32, #tpu.memory_space<vmem>>, vector<32x32xf32>
      %cst_69 = arith.constant dense<0.000000e+00> : vector<16x32xf32>
      %99 = tpu.matmul %97, %98, %cst_69 {dimension_numbers = #tpu.dot_dimension_numbers<[1], [0], [0], [1], [0, 0, 1, 1], [], []>} : vector<16x32xf32>, vector<32x32xf32>, vector<16x32xf32> -> vector<16x32xf32>
      %100 = vector.shape_cast %99 : vector<16x32xf32> to vector<2x8x32xf32>
      %c0_70 = arith.constant 0 : index
      %c0_71 = arith.constant 0 : index
      %101 = vector.load %arg12[%c0_70, %c0_71] : memref<32x32xf32, #tpu.memory_space<vmem>>, vector<32x32xf32>
      %cst_72 = arith.constant dense<0.000000e+00> : vector<2x32xf32>
      %102 = tpu.matmul %93, %101, %cst_72 {dimension_numbers = #tpu.dot_dimension_numbers<[1], [0], [0], [1], [0, 0, 1, 1], [], []>} : vector<2x32xf32>, vector<32x32xf32>, vector<2x32xf32> -> vector<2x32xf32>
      %103 = vector.shape_cast %102 : vector<2x32xf32> to vector<2x1x32xf32>
      %104 = vector.broadcast %103 : vector<2x1x32xf32> to vector<2x8x32xf32>
      %105 = arith.addf %104, %100 : vector<2x8x32xf32>
      %c0_73 = arith.constant 0 : index
      %c0_74 = arith.constant 0 : index
      %106 = vector.load %arg14[%c0_73, %c0_74] : memref<1x32xf32, #tpu.memory_space<vmem>>, vector<1x32xf32>
      %107 = vector.shape_cast %106 : vector<1x32xf32> to vector<1x1x32xf32>
      %108 = vector.broadcast %107 : vector<1x1x32xf32> to vector<2x8x32xf32>
      %109 = arith.addf %105, %108 : vector<2x8x32xf32>
      %110 = math.tanh %109 : vector<2x8x32xf32>
      %c0_75 = arith.constant 0 : index
      %c0_76 = arith.constant 0 : index
      %111 = vector.load %arg15[%c0_75, %c0_76] : memref<1x32xf32, #tpu.memory_space<vmem>>, vector<1x32xf32>
      %112 = vector.shape_cast %111 : vector<1x32xf32> to vector<1x1x32xf32>
      %113 = vector.broadcast %112 : vector<1x1x32xf32> to vector<2x8x32xf32>
      %114 = arith.mulf %110, %113 : vector<2x8x32xf32>
      %cst_77 = arith.constant dense<0.000000e+00> : vector<2x8xf32>
      %115 = vector.multi_reduction <add>, %114, %cst_77 [2] : vector<2x8x32xf32> to vector<2x8xf32>
      %cst_78 = arith.constant dense<0xFF800000> : vector<2xf32>
      %116 = vector.multi_reduction <maximumf>, %115, %cst_78 [1] : vector<2x8xf32> to vector<2xf32>
      %117 = vector.shape_cast %116 : vector<2xf32> to vector<2x1xf32>
      %118 = vector.broadcast %117 : vector<2x1xf32> to vector<2x8xf32>
      %119 = arith.subf %115, %118 : vector<2x8xf32>
      %120 = math.exp %119 : vector<2x8xf32>
      %cst_79 = arith.constant dense<0.000000e+00> : vector<2xf32>
      %121 = vector.multi_reduction <add>, %120, %cst_79 [1] : vector<2x8xf32> to vector<2xf32>
      %122 = vector.shape_cast %121 : vector<2xf32> to vector<2x1xf32>
      %123 = vector.broadcast %122 : vector<2x1xf32> to vector<2x8xf32>
      %124 = arith.divf %120, %123 : vector<2x8xf32>
      %125 = vector.shape_cast %124 : vector<2x8xf32> to vector<2x1x8xf32>
      "tpu.trace_start"() <{level = 10 : i32, message = "bqt,btd->bqd"}> : () -> ()
      %cst_80 = arith.constant dense<0.000000e+00> : vector<2x1x32xf32>
      %126 = tpu.matmul %125, %96, %cst_80 {dimension_numbers = #tpu.dot_dimension_numbers<[2], [1], [1], [2], [0, 0, 0, 1, 1, 2], [0], [0]>} : vector<2x1x8xf32>, vector<2x8x32xf32>, vector<2x1x32xf32> -> vector<2x1x32xf32>
      "tpu.trace_stop"() : () -> ()
      %127 = vector.shape_cast %126 : vector<2x1x32xf32> to vector<2x32xf32>
      %c0_81 = arith.constant 0 : index
      %c0_82 = arith.constant 0 : index
      %128 = vector.load %arg29[%c0_81, %c0_82] : memref<2x32xf32, #tpu.memory_space<vmem>>, vector<2x32xf32>
      tpu.vector_store %arg29[%c0_81, %c0_82], %127 {strides = array<i32>} : memref<2x32xf32, #tpu.memory_space<vmem>>, vector<2x32xf32>,
      %c0_83 = arith.constant 0 : index
      %c0_84 = arith.constant 0 : index
      %129 = vector.load %arg16[%c0_83, %c0_84] : memref<1x32xf32, #tpu.memory_space<vmem>>, vector<1x32xf32>
      %130 = vector.broadcast %129 : vector<1x32xf32> to vector<2x32xf32>
      %131 = arith.mulf %127, %130 : vector<2x32xf32>
      %cst_85 = arith.constant dense<0.000000e+00> : vector<2xf32>
      %132 = vector.multi_reduction <add>, %131, %cst_85 [1] : vector<2x32xf32> to vector<2xf32>
      %133 = vector.shape_cast %132 : vector<2xf32> to vector<2x1xf32>
      %c0_86 = arith.constant 0 : index
      %c0_87 = arith.constant 0 : index
      %134 = vector.load %arg17[%c0_86, %c0_87] : memref<1x32xf32, #tpu.memory_space<vmem>>, vector<1x32xf32>
      %135 = vector.broadcast %134 : vector<1x32xf32> to vector<2x32xf32>
      %136 = arith.mulf %93, %135 : vector<2x32xf32>
      %cst_88 = arith.constant dense<0.000000e+00> : vector<2xf32>
      %137 = vector.multi_reduction <add>, %136, %cst_88 [1] : vector<2x32xf32> to vector<2xf32>
      %138 = vector.shape_cast %137 : vector<2xf32> to vector<2x1xf32>
      %139 = arith.addf %133, %138 : vector<2x1xf32>
      %c0_89 = arith.constant 0 : index
      %c0_90 = arith.constant 0 : index
      %140 = vector.load %arg18[%c0_89, %c0_90] : memref<1x16xf32, #tpu.memory_space<vmem>>, vector<1x16xf32>
      %141 = vector.broadcast %140 : vector<1x16xf32> to vector<2x16xf32>
      %142 = arith.mulf %58, %141 : vector<2x16xf32>
      %cst_91 = arith.constant dense<0.000000e+00> : vector<2xf32>
      %143 = vector.multi_reduction <add>, %142, %cst_91 [1] : vector<2x16xf32> to vector<2xf32>
      %144 = vector.shape_cast %143 : vector<2xf32> to vector<2x1xf32>
      %145 = arith.addf %139, %144 : vector<2x1xf32>
      %c0_92 = arith.constant 0 : index
      %c0_93 = arith.constant 0 : index
      %146 = memref.load %arg2[%c0_92, %c0_93] : memref<1x1xf32, #tpu.memory_space<smem>>
      %147 = vector.broadcast %146 : f32 to vector<2x1xf32>
      %148 = arith.addf %145, %147 : vector<2x1xf32>
      %149 = arith.negf %148 : vector<2x1xf32>
      %150 = math.exp %149 : vector<2x1xf32>
      %cst_94 = arith.constant 1.000000e+00 : f32
      %151 = vector.broadcast %cst_94 : f32 to vector<2x1xf32>
      %152 = arith.addf %151, %150 : vector<2x1xf32>
      %153 = arith.divf %151, %152 : vector<2x1xf32>
      %cst_95 = arith.constant 9.99999993E-9 : f32
      %154 = vector.broadcast %cst_95 : f32 to vector<2x1xf32>
      %155 = arith.maximumf %153, %154 : vector<2x1xf32>
      %c0_96 = arith.constant 0 : index
      %c0_97 = arith.constant 0 : index
      %156 = vector.load %arg30[%c0_96, %c0_97] : memref<2x1xf32, #tpu.memory_space<vmem>>, vector<2x1xf32>
      tpu.vector_store %arg30[%c0_96, %c0_97], %155 {strides = array<i32>} : memref<2x1xf32, #tpu.memory_space<vmem>>, vector<2x1xf32>,
      %cst_98 = arith.constant 1.000000e+00 : f32
      %157 = vector.broadcast %cst_98 : f32 to vector<2x1xf32>
      %158 = arith.subf %157, %155 : vector<2x1xf32>
      %159 = vector.broadcast %158 : vector<2x1xf32> to vector<2x8xf32>
      %160 = arith.mulf %159, %124 : vector<2x8xf32>
      %c0_99 = arith.constant 0 : index
      %c0_100 = arith.constant 0 : index
      %161 = vector.load %arg31[%c0_99, %c0_100] : memref<2x8xf32, #tpu.memory_space<vmem>>, vector<2x8xf32>
      tpu.vector_store %arg31[%c0_99, %c0_100], %160 {strides = array<i32>} : memref<2x8xf32, #tpu.memory_space<vmem>>, vector<2x8xf32>,
      %cst_101 = arith.constant -1.000000e+30 : f32
      %162 = vector.broadcast %cst_101 : f32 to vector<2x1xf32>
      %c0_102 = arith.constant 0 : index
      %c0_103 = arith.constant 0 : index
      %163 = vector.load %arg32[%c0_102, %c0_103] : memref<2x1xf32, #tpu.memory_space<vmem>>, vector<2x1xf32>
      tpu.vector_store %arg32[%c0_102, %c0_103], %162 {strides = array<i32>} : memref<2x1xf32, #tpu.memory_space<vmem>>, vector<2x1xf32>,
      %cst_104 = arith.constant 0.000000e+00 : f32
      %164 = vector.broadcast %cst_104 : f32 to vector<2x1xf32>
      %c0_105 = arith.constant 0 : index
      %c0_106 = arith.constant 0 : index
      %165 = vector.load %arg33[%c0_105, %c0_106] : memref<2x1xf32, #tpu.memory_space<vmem>>, vector<2x1xf32>
      tpu.vector_store %arg33[%c0_105, %c0_106], %164 {strides = array<i32>} : memref<2x1xf32, #tpu.memory_space<vmem>>, vector<2x1xf32>,
    } else {
    }
    %c0 = arith.constant 0 : index
    %c0_1 = arith.constant 0 : index
    %3 = vector.load %arg27[%c0, %c0_1] : memref<2x32xf32, #tpu.memory_space<vmem>>, vector<2x32xf32>
    %c0_2 = arith.constant 0 : index
    %c0_3 = arith.constant 0 : index
    %4 = vector.load %arg29[%c0_2, %c0_3] : memref<2x32xf32, #tpu.memory_space<vmem>>, vector<2x32xf32>
    %5 = arith.truncf %3 : vector<2x32xf32> to vector<2x32xbf16>
    %c0_4 = arith.constant 0 : index
    %c0_5 = arith.constant 0 : index
    %6 = vector.load %arg19[%c0_4, %c0_5] : memref<32x128xbf16, #tpu.memory_space<vmem>>, vector<32x128xbf16>
    %cst = arith.constant dense<0.000000e+00> : vector<2x128xf32>
    %7 = tpu.matmul %5, %6, %cst {dimension_numbers = #tpu.dot_dimension_numbers<[1], [0], [0], [1], [0, 0, 1, 1], [], []>} : vector<2x32xbf16>, vector<32x128xbf16>, vector<2x128xf32> -> vector<2x128xf32>
    %8 = arith.truncf %4 : vector<2x32xf32> to vector<2x32xbf16>
    %c0_6 = arith.constant 0 : index
    %c0_7 = arith.constant 0 : index
    %9 = vector.load %arg20[%c0_6, %c0_7] : memref<32x128xbf16, #tpu.memory_space<vmem>>, vector<32x128xbf16>
    %cst_8 = arith.constant dense<0.000000e+00> : vector<2x128xf32>
    %10 = tpu.matmul %8, %9, %cst_8 {dimension_numbers = #tpu.dot_dimension_numbers<[1], [0], [0], [1], [0, 0, 1, 1], [], []>} : vector<2x32xbf16>, vector<32x128xbf16>, vector<2x128xf32> -> vector<2x128xf32>
    %11 = arith.addf %7, %10 : vector<2x128xf32>
    %c0_9 = arith.constant 0 : index
    %c0_10 = arith.constant 0 : index
    %12 = vector.load %arg21[%c0_9, %c0_10] : memref<1x128xf32, #tpu.memory_space<vmem>>, vector<1x128xf32>
    %13 = vector.broadcast %12 : vector<1x128xf32> to vector<2x128xf32>
    %14 = arith.addf %11, %13 : vector<2x128xf32>
    %15 = arith.index_cast %arg0 : i32 to index
    %c0_11 = arith.constant 0 : index
    %c0_12 = arith.constant 0 : index
    %16 = vector.load %arg25[%15, %c0_11, %c0_12] : memref<2x2x128xf32, #tpu.memory_space<vmem>>, vector<1x2x128xf32>
    %17 = vector.shape_cast %16 : vector<1x2x128xf32> to vector<2x128xf32>
    %18 = vector.shape_cast %14 : vector<2x128xf32> to vector<1x2x128xf32>
    tpu.vector_store %arg25[%15, %c0_11, %c0_12], %18 {strides = array<i32>} : memref<2x2x128xf32, #tpu.memory_space<vmem>>, vector<1x2x128xf32>,
    %cst_13 = arith.constant dense<0xFF800000> : vector<2xf32>
    %19 = vector.multi_reduction <maximumf>, %14, %cst_13 [1] : vector<2x128xf32> to vector<2xf32>
    %20 = vector.shape_cast %19 : vector<2xf32> to vector<2x1xf32>
    %c0_14 = arith.constant 0 : index
    %c0_15 = arith.constant 0 : index
    %21 = vector.load %arg32[%c0_14, %c0_15] : memref<2x1xf32, #tpu.memory_space<vmem>>, vector<2x1xf32>
    %22 = arith.maximumf %21, %20 : vector<2x1xf32>
    %c0_16 = arith.constant 0 : index
    %c0_17 = arith.constant 0 : index
    %23 = vector.load %arg33[%c0_16, %c0_17] : memref<2x1xf32, #tpu.memory_space<vmem>>, vector<2x1xf32>
    %24 = arith.subf %21, %22 : vector<2x1xf32>
    %25 = math.exp %24 : vector<2x1xf32>
    %26 = arith.mulf %23, %25 : vector<2x1xf32>
    %27 = vector.broadcast %22 : vector<2x1xf32> to vector<2x128xf32>
    %28 = arith.subf %14, %27 : vector<2x128xf32>
    %29 = math.exp %28 : vector<2x128xf32>
    %cst_18 = arith.constant dense<0.000000e+00> : vector<2xf32>
    %30 = vector.multi_reduction <add>, %29, %cst_18 [1] : vector<2x128xf32> to vector<2xf32>
    %31 = vector.shape_cast %30 : vector<2xf32> to vector<2x1xf32>
    %32 = arith.addf %26, %31 : vector<2x1xf32>
    %c0_19 = arith.constant 0 : index
    %c0_20 = arith.constant 0 : index
    %33 = vector.load %arg33[%c0_19, %c0_20] : memref<2x1xf32, #tpu.memory_space<vmem>>, vector<2x1xf32>
    tpu.vector_store %arg33[%c0_19, %c0_20], %32 {strides = array<i32>} : memref<2x1xf32, #tpu.memory_space<vmem>>, vector<2x1xf32>,
    %c0_21 = arith.constant 0 : index
    %c0_22 = arith.constant 0 : index
    %34 = vector.load %arg32[%c0_21, %c0_22] : memref<2x1xf32, #tpu.memory_space<vmem>>, vector<2x1xf32>
    tpu.vector_store %arg32[%c0_21, %c0_22], %22 {strides = array<i32>} : memref<2x1xf32, #tpu.memory_space<vmem>>, vector<2x1xf32>,
    %c1_i32 = arith.constant 1 : i32
    %35 = arith.cmpi eq, %arg0, %c1_i32 : i32
    %36 = arith.extui %35 : i1 to i32
    %c0_i32_23 = arith.constant 0 : i32
    %37 = arith.cmpi ne, %36, %c0_i32_23 : i32
    scf.if %37 {
      %c0_24 = arith.constant 0 : index
      %c0_25 = arith.constant 0 : index
      %c0_26 = arith.constant 0 : index
      %38 = vector.load %arg25[%c0_24, %c0_25, %c0_26] : memref<2x2x128xf32, #tpu.memory_space<vmem>>, vector<2x2x128xf32>
      %c0_27 = arith.constant 0 : index
      %c0_28 = arith.constant 0 : index
      %39 = vector.load %arg32[%c0_27, %c0_28] : memref<2x1xf32, #tpu.memory_space<vmem>>, vector<2x1xf32>
      %40 = vector.shape_cast %39 : vector<2x1xf32> to vector<1x2x1xf32>
      %c0_29 = arith.constant 0 : index
      %c0_30 = arith.constant 0 : index
      %41 = vector.load %arg30[%c0_29, %c0_30] : memref<2x1xf32, #tpu.memory_space<vmem>>, vector<2x1xf32>
      %c0_31 = arith.constant 0 : index
      %c0_32 = arith.constant 0 : index
      %42 = vector.load %arg33[%c0_31, %c0_32] : memref<2x1xf32, #tpu.memory_space<vmem>>, vector<2x1xf32>
      %43 = arith.divf %41, %42 : vector<2x1xf32>
      %44 = vector.shape_cast %43 : vector<2x1xf32> to vector<1x2x1xf32>
      %45 = vector.broadcast %40 : vector<1x2x1xf32> to vector<2x2x128xf32>
      %46 = arith.subf %38, %45 : vector<2x2x128xf32>
      %47 = math.exp %46 : vector<2x2x128xf32>
      %48 = vector.broadcast %44 : vector<1x2x1xf32> to vector<2x2x128xf32>
      %49 = arith.mulf %47, %48 : vector<2x2x128xf32>
      %50 = tpu.iota {dimensions = array<i32: 0>} : vector<2x2x128xi32>
      %c128_i32 = arith.constant 128 : i32
      %51 = vector.broadcast %c128_i32 : i32 to vector<2x2x128xi32>
      %52 = arith.muli %50, %51 : vector<2x2x128xi32>
      %53 = tpu.iota {dimensions = array<i32: 2>} : vector<2x2x128xi32>
      %54 = arith.addi %52, %53 : vector<2x2x128xi32>
      %c200_i32 = arith.constant 200 : i32
      %55 = vector.broadcast %c200_i32 : i32 to vector<2x2x128xi32>
      %56 = arith.cmpi eq, %54, %55 : vector<2x2x128xi32>
      %c0_33 = arith.constant 0 : index
      %c0_34 = arith.constant 0 : index
      %57 = vector.load %arg8[%c0_33, %c0_34] : memref<2x8xf32, #tpu.memory_space<vmem>>, vector<2x1xf32>
      %58 = vector.shape_cast %57 : vector<2x1xf32> to vector<1x2x1xf32>
      %cst_35 = arith.constant 0.000000e+00 : f32
      %59 = vector.shape_cast %58 : vector<1x2x1xf32> to vector<1x2x1xf32>
      %60 = vector.broadcast %59 : vector<1x2x1xf32> to vector<2x2x128xf32>
      %61 = vector.broadcast %cst_35 : f32 to vector<2x2x128xf32>
      %62 = arith.select %56, %60, %61 : vector<2x2x128xi1>, vector<2x2x128xf32>
      %63 = arith.addf %49, %62 : vector<2x2x128xf32>
      %c201_i32 = arith.constant 201 : i32
      %64 = vector.broadcast %c201_i32 : i32 to vector<2x2x128xi32>
      %65 = arith.cmpi eq, %54, %64 : vector<2x2x128xi32>
      %c0_36 = arith.constant 0 : index
      %c1 = arith.constant 1 : index
      %66 = vector.load %arg8[%c0_36, %c1] : memref<2x8xf32, #tpu.memory_space<vmem>>, vector<2x1xf32>
      %67 = vector.shape_cast %66 : vector<2x1xf32> to vector<1x2x1xf32>
      %cst_37 = arith.constant 0.000000e+00 : f32
      %68 = vector.shape_cast %67 : vector<1x2x1xf32> to vector<1x2x1xf32>
      %69 = vector.broadcast %68 : vector<1x2x1xf32> to vector<2x2x128xf32>
      %70 = vector.broadcast %cst_37 : f32 to vector<2x2x128xf32>
      %71 = arith.select %65, %69, %70 : vector<2x2x128xi1>, vector<2x2x128xf32>
      %72 = arith.addf %63, %71 : vector<2x2x128xf32>
      %c202_i32 = arith.constant 202 : i32
      %73 = vector.broadcast %c202_i32 : i32 to vector<2x2x128xi32>
      %74 = arith.cmpi eq, %54, %73 : vector<2x2x128xi32>
      %c0_38 = arith.constant 0 : index
      %c2 = arith.constant 2 : index
      %75 = vector.load %arg8[%c0_38, %c2] : memref<2x8xf32, #tpu.memory_space<vmem>>, vector<2x1xf32>
      %76 = vector.shape_cast %75 : vector<2x1xf32> to vector<1x2x1xf32>
      %cst_39 = arith.constant 0.000000e+00 : f32
      %77 = vector.shape_cast %76 : vector<1x2x1xf32> to vector<1x2x1xf32>
      %78 = vector.broadcast %77 : vector<1x2x1xf32> to vector<2x2x128xf32>
      %79 = vector.broadcast %cst_39 : f32 to vector<2x2x128xf32>
      %80 = arith.select %74, %78, %79 : vector<2x2x128xi1>, vector<2x2x128xf32>
      %81 = arith.addf %72, %80 : vector<2x2x128xf32>
      %c203_i32 = arith.constant 203 : i32
      %82 = vector.broadcast %c203_i32 : i32 to vector<2x2x128xi32>
      %83 = arith.cmpi eq, %54, %82 : vector<2x2x128xi32>
      %c0_40 = arith.constant 0 : index
      %c3 = arith.constant 3 : index
      %84 = vector.load %arg8[%c0_40, %c3] : memref<2x8xf32, #tpu.memory_space<vmem>>, vector<2x1xf32>
      %85 = vector.shape_cast %84 : vector<2x1xf32> to vector<1x2x1xf32>
      %cst_41 = arith.constant 0.000000e+00 : f32
      %86 = vector.shape_cast %85 : vector<1x2x1xf32> to vector<1x2x1xf32>
      %87 = vector.broadcast %86 : vector<1x2x1xf32> to vector<2x2x128xf32>
      %88 = vector.broadcast %cst_41 : f32 to vector<2x2x128xf32>
      %89 = arith.select %83, %87, %88 : vector<2x2x128xi1>, vector<2x2x128xf32>
      %90 = arith.addf %81, %89 : vector<2x2x128xf32>
      %c204_i32 = arith.constant 204 : i32
      %91 = vector.broadcast %c204_i32 : i32 to vector<2x2x128xi32>
      %92 = arith.cmpi eq, %54, %91 : vector<2x2x128xi32>
      %c0_42 = arith.constant 0 : index
      %c4 = arith.constant 4 : index
      %93 = vector.load %arg8[%c0_42, %c4] : memref<2x8xf32, #tpu.memory_space<vmem>>, vector<2x1xf32>
      %94 = vector.shape_cast %93 : vector<2x1xf32> to vector<1x2x1xf32>
      %cst_43 = arith.constant 0.000000e+00 : f32
      %95 = vector.shape_cast %94 : vector<1x2x1xf32> to vector<1x2x1xf32>
      %96 = vector.broadcast %95 : vector<1x2x1xf32> to vector<2x2x128xf32>
      %97 = vector.broadcast %cst_43 : f32 to vector<2x2x128xf32>
      %98 = arith.select %92, %96, %97 : vector<2x2x128xi1>, vector<2x2x128xf32>
      %99 = arith.addf %90, %98 : vector<2x2x128xf32>
      %c205_i32 = arith.constant 205 : i32
      %100 = vector.broadcast %c205_i32 : i32 to vector<2x2x128xi32>
      %101 = arith.cmpi eq, %54, %100 : vector<2x2x128xi32>
      %c0_44 = arith.constant 0 : index
      %c5 = arith.constant 5 : index
      %102 = vector.load %arg8[%c0_44, %c5] : memref<2x8xf32, #tpu.memory_space<vmem>>, vector<2x1xf32>
      %103 = vector.shape_cast %102 : vector<2x1xf32> to vector<1x2x1xf32>
      %cst_45 = arith.constant 0.000000e+00 : f32
      %104 = vector.shape_cast %103 : vector<1x2x1xf32> to vector<1x2x1xf32>
      %105 = vector.broadcast %104 : vector<1x2x1xf32> to vector<2x2x128xf32>
      %106 = vector.broadcast %cst_45 : f32 to vector<2x2x128xf32>
      %107 = arith.select %101, %105, %106 : vector<2x2x128xi1>, vector<2x2x128xf32>
      %108 = arith.addf %99, %107 : vector<2x2x128xf32>
      %c206_i32 = arith.constant 206 : i32
      %109 = vector.broadcast %c206_i32 : i32 to vector<2x2x128xi32>
      %110 = arith.cmpi eq, %54, %109 : vector<2x2x128xi32>
      %c0_46 = arith.constant 0 : index
      %c6 = arith.constant 6 : index
      %111 = vector.load %arg8[%c0_46, %c6] : memref<2x8xf32, #tpu.memory_space<vmem>>, vector<2x1xf32>
      %112 = vector.shape_cast %111 : vector<2x1xf32> to vector<1x2x1xf32>
      %cst_47 = arith.constant 0.000000e+00 : f32
      %113 = vector.shape_cast %112 : vector<1x2x1xf32> to vector<1x2x1xf32>
      %114 = vector.broadcast %113 : vector<1x2x1xf32> to vector<2x2x128xf32>
      %115 = vector.broadcast %cst_47 : f32 to vector<2x2x128xf32>
      %116 = arith.select %110, %114, %115 : vector<2x2x128xi1>, vector<2x2x128xf32>
      %117 = arith.addf %108, %116 : vector<2x2x128xf32>
      %c207_i32 = arith.constant 207 : i32
      %118 = vector.broadcast %c207_i32 : i32 to vector<2x2x128xi32>
      %119 = arith.cmpi eq, %54, %118 : vector<2x2x128xi32>
      %c0_48 = arith.constant 0 : index
      %c7 = arith.constant 7 : index
      %120 = vector.load %arg8[%c0_48, %c7] : memref<2x8xf32, #tpu.memory_space<vmem>>, vector<2x1xf32>
      %121 = vector.shape_cast %120 : vector<2x1xf32> to vector<1x2x1xf32>
      %cst_49 = arith.constant 0.000000e+00 : f32
      %122 = vector.shape_cast %121 : vector<1x2x1xf32> to vector<1x2x1xf32>
      %123 = vector.broadcast %122 : vector<1x2x1xf32> to vector<2x2x128xf32>
      %124 = vector.broadcast %cst_49 : f32 to vector<2x2x128xf32>
      %125 = arith.select %119, %123, %124 : vector<2x2x128xi1>, vector<2x2x128xf32>
      %126 = arith.addf %117, %125 : vector<2x2x128xf32>
      %c0_50 = arith.constant 0 : index
      %c0_51 = arith.constant 0 : index
      %127 = vector.load %arg7[%c0_50, %c0_51] : memref<2x8xi32, #tpu.memory_space<vmem>>, vector<2x8xi32>
      %c0_52 = arith.constant 0 : index
      %c0_53 = arith.constant 0 : index
      %128 = vector.load %arg31[%c0_52, %c0_53] : memref<2x8xf32, #tpu.memory_space<vmem>>, vector<2x8xf32>
      %129 = vector.extract_strided_slice %127 {offsets = [0, 0], sizes = [2, 1], strides = [1, 1]} : vector<2x8xi32> to vector<2x1xi32>
      %130 = vector.shape_cast %129 : vector<2x1xi32> to vector<1x2x1xi32>
      %131 = vector.broadcast %130 : vector<1x2x1xi32> to vector<2x2x128xi32>
      %132 = arith.cmpi eq, %54, %131 : vector<2x2x128xi32>
      %133 = vector.extract_strided_slice %128 {offsets = [0, 0], sizes = [2, 1], strides = [1, 1]} : vector<2x8xf32> to vector<2x1xf32>
      %134 = vector.shape_cast %133 : vector<2x1xf32> to vector<1x2x1xf32>
      %cst_54 = arith.constant 0.000000e+00 : f32
      %135 = vector.shape_cast %134 : vector<1x2x1xf32> to vector<1x2x1xf32>
      %136 = vector.broadcast %135 : vector<1x2x1xf32> to vector<2x2x128xf32>
      %137 = vector.broadcast %cst_54 : f32 to vector<2x2x128xf32>
      %138 = arith.select %132, %136, %137 : vector<2x2x128xi1>, vector<2x2x128xf32>
      %139 = arith.addf %126, %138 : vector<2x2x128xf32>
      %140 = vector.extract_strided_slice %127 {offsets = [0, 1], sizes = [2, 1], strides = [1, 1]} : vector<2x8xi32> to vector<2x1xi32>
      %141 = vector.shape_cast %140 : vector<2x1xi32> to vector<1x2x1xi32>
      %142 = vector.broadcast %141 : vector<1x2x1xi32> to vector<2x2x128xi32>
      %143 = arith.cmpi eq, %54, %142 : vector<2x2x128xi32>
      %144 = vector.extract_strided_slice %128 {offsets = [0, 1], sizes = [2, 1], strides = [1, 1]} : vector<2x8xf32> to vector<2x1xf32>
      %145 = vector.shape_cast %144 : vector<2x1xf32> to vector<1x2x1xf32>
      %cst_55 = arith.constant 0.000000e+00 : f32
      %146 = vector.shape_cast %145 : vector<1x2x1xf32> to vector<1x2x1xf32>
      %147 = vector.broadcast %146 : vector<1x2x1xf32> to vector<2x2x128xf32>
      %148 = vector.broadcast %cst_55 : f32 to vector<2x2x128xf32>
      %149 = arith.select %143, %147, %148 : vector<2x2x128xi1>, vector<2x2x128xf32>
      %150 = arith.addf %139, %149 : vector<2x2x128xf32>
      %151 = vector.extract_strided_slice %127 {offsets = [0, 2], sizes = [2, 1], strides = [1, 1]} : vector<2x8xi32> to vector<2x1xi32>
      %152 = vector.shape_cast %151 : vector<2x1xi32> to vector<1x2x1xi32>
      %153 = vector.broadcast %152 : vector<1x2x1xi32> to vector<2x2x128xi32>
      %154 = arith.cmpi eq, %54, %153 : vector<2x2x128xi32>
      %155 = vector.extract_strided_slice %128 {offsets = [0, 2], sizes = [2, 1], strides = [1, 1]} : vector<2x8xf32> to vector<2x1xf32>
      %156 = vector.shape_cast %155 : vector<2x1xf32> to vector<1x2x1xf32>
      %cst_56 = arith.constant 0.000000e+00 : f32
      %157 = vector.shape_cast %156 : vector<1x2x1xf32> to vector<1x2x1xf32>
      %158 = vector.broadcast %157 : vector<1x2x1xf32> to vector<2x2x128xf32>
      %159 = vector.broadcast %cst_56 : f32 to vector<2x2x128xf32>
      %160 = arith.select %154, %158, %159 : vector<2x2x128xi1>, vector<2x2x128xf32>
      %161 = arith.addf %150, %160 : vector<2x2x128xf32>
      %162 = vector.extract_strided_slice %127 {offsets = [0, 3], sizes = [2, 1], strides = [1, 1]} : vector<2x8xi32> to vector<2x1xi32>
      %163 = vector.shape_cast %162 : vector<2x1xi32> to vector<1x2x1xi32>
      %164 = vector.broadcast %163 : vector<1x2x1xi32> to vector<2x2x128xi32>
      %165 = arith.cmpi eq, %54, %164 : vector<2x2x128xi32>
      %166 = vector.extract_strided_slice %128 {offsets = [0, 3], sizes = [2, 1], strides = [1, 1]} : vector<2x8xf32> to vector<2x1xf32>
      %167 = vector.shape_cast %166 : vector<2x1xf32> to vector<1x2x1xf32>
      %cst_57 = arith.constant 0.000000e+00 : f32
      %168 = vector.shape_cast %167 : vector<1x2x1xf32> to vector<1x2x1xf32>
      %169 = vector.broadcast %168 : vector<1x2x1xf32> to vector<2x2x128xf32>
      %170 = vector.broadcast %cst_57 : f32 to vector<2x2x128xf32>
      %171 = arith.select %165, %169, %170 : vector<2x2x128xi1>, vector<2x2x128xf32>
      %172 = arith.addf %161, %171 : vector<2x2x128xf32>
      %173 = vector.extract_strided_slice %127 {offsets = [0, 4], sizes = [2, 1], strides = [1, 1]} : vector<2x8xi32> to vector<2x1xi32>
      %174 = vector.shape_cast %173 : vector<2x1xi32> to vector<1x2x1xi32>
      %175 = vector.broadcast %174 : vector<1x2x1xi32> to vector<2x2x128xi32>
      %176 = arith.cmpi eq, %54, %175 : vector<2x2x128xi32>
      %177 = vector.extract_strided_slice %128 {offsets = [0, 4], sizes = [2, 1], strides = [1, 1]} : vector<2x8xf32> to vector<2x1xf32>
      %178 = vector.shape_cast %177 : vector<2x1xf32> to vector<1x2x1xf32>
      %cst_58 = arith.constant 0.000000e+00 : f32
      %179 = vector.shape_cast %178 : vector<1x2x1xf32> to vector<1x2x1xf32>
      %180 = vector.broadcast %179 : vector<1x2x1xf32> to vector<2x2x128xf32>
      %181 = vector.broadcast %cst_58 : f32 to vector<2x2x128xf32>
      %182 = arith.select %176, %180, %181 : vector<2x2x128xi1>, vector<2x2x128xf32>
      %183 = arith.addf %172, %182 : vector<2x2x128xf32>
      %184 = vector.extract_strided_slice %127 {offsets = [0, 5], sizes = [2, 1], strides = [1, 1]} : vector<2x8xi32> to vector<2x1xi32>
      %185 = vector.shape_cast %184 : vector<2x1xi32> to vector<1x2x1xi32>
      %186 = vector.broadcast %185 : vector<1x2x1xi32> to vector<2x2x128xi32>
      %187 = arith.cmpi eq, %54, %186 : vector<2x2x128xi32>
      %188 = vector.extract_strided_slice %128 {offsets = [0, 5], sizes = [2, 1], strides = [1, 1]} : vector<2x8xf32> to vector<2x1xf32>
      %189 = vector.shape_cast %188 : vector<2x1xf32> to vector<1x2x1xf32>
      %cst_59 = arith.constant 0.000000e+00 : f32
      %190 = vector.shape_cast %189 : vector<1x2x1xf32> to vector<1x2x1xf32>
      %191 = vector.broadcast %190 : vector<1x2x1xf32> to vector<2x2x128xf32>
      %192 = vector.broadcast %cst_59 : f32 to vector<2x2x128xf32>
      %193 = arith.select %187, %191, %192 : vector<2x2x128xi1>, vector<2x2x128xf32>
      %194 = arith.addf %183, %193 : vector<2x2x128xf32>
      %195 = vector.extract_strided_slice %127 {offsets = [0, 6], sizes = [2, 1], strides = [1, 1]} : vector<2x8xi32> to vector<2x1xi32>
      %196 = vector.shape_cast %195 : vector<2x1xi32> to vector<1x2x1xi32>
      %197 = vector.broadcast %196 : vector<1x2x1xi32> to vector<2x2x128xi32>
      %198 = arith.cmpi eq, %54, %197 : vector<2x2x128xi32>
      %199 = vector.extract_strided_slice %128 {offsets = [0, 6], sizes = [2, 1], strides = [1, 1]} : vector<2x8xf32> to vector<2x1xf32>
      %200 = vector.shape_cast %199 : vector<2x1xf32> to vector<1x2x1xf32>
      %cst_60 = arith.constant 0.000000e+00 : f32
      %201 = vector.shape_cast %200 : vector<1x2x1xf32> to vector<1x2x1xf32>
      %202 = vector.broadcast %201 : vector<1x2x1xf32> to vector<2x2x128xf32>
      %203 = vector.broadcast %cst_60 : f32 to vector<2x2x128xf32>
      %204 = arith.select %198, %202, %203 : vector<2x2x128xi1>, vector<2x2x128xf32>
      %205 = arith.addf %194, %204 : vector<2x2x128xf32>
      %206 = vector.extract_strided_slice %127 {offsets = [0, 7], sizes = [2, 1], strides = [1, 1]} : vector<2x8xi32> to vector<2x1xi32>
      %207 = vector.shape_cast %206 : vector<2x1xi32> to vector<1x2x1xi32>
      %208 = vector.broadcast %207 : vector<1x2x1xi32> to vector<2x2x128xi32>
      %209 = arith.cmpi eq, %54, %208 : vector<2x2x128xi32>
      %210 = vector.extract_strided_slice %128 {offsets = [0, 7], sizes = [2, 1], strides = [1, 1]} : vector<2x8xf32> to vector<2x1xf32>
      %211 = vector.shape_cast %210 : vector<2x1xf32> to vector<1x2x1xf32>
      %cst_61 = arith.constant 0.000000e+00 : f32
      %212 = vector.shape_cast %211 : vector<1x2x1xf32> to vector<1x2x1xf32>
      %213 = vector.broadcast %212 : vector<1x2x1xf32> to vector<2x2x128xf32>
      %214 = vector.broadcast %cst_61 : f32 to vector<2x2x128xf32>
      %215 = arith.select %209, %213, %214 : vector<2x2x128xi1>, vector<2x2x128xf32>
      %216 = arith.addf %205, %215 : vector<2x2x128xf32>
      %cst_62 = arith.constant 9.99999993E-9 : f32
      %217 = vector.broadcast %cst_62 : f32 to vector<2x2x128xf32>
      %218 = arith.maximumf %216, %217 : vector<2x2x128xf32>
      %219 = math.log %218 : vector<2x2x128xf32>
      %c0_63 = arith.constant 0 : index
      %c0_64 = arith.constant 0 : index
      %c0_65 = arith.constant 0 : index
      %220 = vector.load %arg22[%c0_63, %c0_64, %c0_65] : memref<2x2x128xf32, #tpu.memory_space<vmem>>, vector<2x2x128xf32>
      tpu.vector_store %arg22[%c0_63, %c0_64, %c0_65], %219 {strides = array<i32>} : memref<2x2x128xf32, #tpu.memory_space<vmem>>, vector<2x2x128xf32>,
      %c0_66 = arith.constant 0 : index
      %c0_67 = arith.constant 0 : index
      %221 = vector.load %arg27[%c0_66, %c0_67] : memref<2x32xf32, #tpu.memory_space<vmem>>, vector<2x32xf32>
      %c0_68 = arith.constant 0 : index
      %c0_69 = arith.constant 0 : index
      %222 = vector.load %arg23[%c0_68, %c0_69] : memref<2x32xf32, #tpu.memory_space<vmem>>, vector<2x32xf32>
      tpu.vector_store %arg23[%c0_68, %c0_69], %221 {strides = array<i32>} : memref<2x32xf32, #tpu.memory_space<vmem>>, vector<2x32xf32>,
      %c0_70 = arith.constant 0 : index
      %c0_71 = arith.constant 0 : index
      %223 = vector.load %arg28[%c0_70, %c0_71] : memref<2x32xf32, #tpu.memory_space<vmem>>, vector<2x32xf32>
      %c0_72 = arith.constant 0 : index
      %c0_73 = arith.constant 0 : index
      %224 = vector.load %arg24[%c0_72, %c0_73] : memref<2x32xf32, #tpu.memory_space<vmem>>, vector<2x32xf32>
      tpu.vector_store %arg24[%c0_72, %c0_73], %223 {strides = array<i32>} : memref<2x32xf32, #tpu.memory_space<vmem>>, vector<2x32xf32>,
    } else {
    }
    return
  }
  func.func @transform_0(%arg0: i32) -> i32 {
    %c0_i32 = arith.constant 0 : i32
    %c0_i32_0 = arith.constant 0 : i32
    return %c0_i32 : i32
  }
  func.func @transform_1(%arg0: i32) -> (i32, i32) {
    %c0_i32 = arith.constant 0 : i32
    %c0_i32_0 = arith.constant 0 : i32
    %c0_i32_1 = arith.constant 0 : i32
    return %c0_i32, %c0_i32_0 : i32, i32
  }
  func.func @transform_3(%arg0: i32) -> (i32, i32) {
    %c0_i32 = arith.constant 0 : i32
    %c0_i32_0 = arith.constant 0 : i32
    %c0_i32_1 = arith.constant 0 : i32
    return %c0_i32, %c0_i32_0 : i32, i32
  }
  func.func @transform_4(%arg0: i32) -> (i32, i32) {
    %c0_i32 = arith.constant 0 : i32
    %c0_i32_0 = arith.constant 0 : i32
    %c0_i32_1 = arith.constant 0 : i32
    return %c0_i32, %c0_i32_0 : i32, i32
  }
  func.func @transform_5(%arg0: i32) -> (i32, i32, i32) {
    %c0_i32 = arith.constant 0 : i32
    %c0_i32_0 = arith.constant 0 : i32
    %c0_i32_1 = arith.constant 0 : i32
    %c0_i32_2 = arith.constant 0 : i32
    return %c0_i32, %c0_i32_0, %c0_i32_1 : i32, i32, i32
  }
  func.func @transform_6(%arg0: i32) -> (i32, i32) {
    %c0_i32 = arith.constant 0 : i32
    %c0_i32_0 = arith.constant 0 : i32
    %c0_i32_1 = arith.constant 0 : i32
    return %c0_i32, %c0_i32_0 : i32, i32
  }
  func.func @transform_7(%arg0: i32) -> (i32, i32) {
    %c0_i32 = arith.constant 0 : i32
    %c0_i32_0 = arith.constant 0 : i32
    %c0_i32_1 = arith.constant 0 : i32
    return %c0_i32, %c0_i32_0 : i32, i32
  }
  func.func @transform_8(%arg0: i32) -> (i32, i32) {
    %c0_i32 = arith.constant 0 : i32
    %c0_i32_0 = arith.constant 0 : i32
    %c0_i32_1 = arith.constant 0 : i32
    return %c0_i32, %c0_i32_0 : i32, i32
  }
  func.func @transform_9(%arg0: i32) -> (i32, i32) {
    %c0_i32 = arith.constant 0 : i32
    %c0_i32_0 = arith.constant 0 : i32
    %c0_i32_1 = arith.constant 0 : i32
    return %c0_i32, %c0_i32_0 : i32, i32
  }
  func.func @transform_10(%arg0: i32) -> (i32, i32) {
    %c0_i32 = arith.constant 0 : i32
    %c0_i32_0 = arith.constant 0 : i32
    %c0_i32_1 = arith.constant 0 : i32
    return %c0_i32, %c0_i32_0 : i32, i32
  }
  func.func @transform_11(%arg0: i32) -> (i32, i32) {
    %c0_i32 = arith.constant 0 : i32
    %c0_i32_0 = arith.constant 0 : i32
    %c0_i32_1 = arith.constant 0 : i32
    return %c0_i32, %c0_i32_0 : i32, i32
  }
  func.func @transform_12(%arg0: i32) -> (i32, i32) {
    %c0_i32 = arith.constant 0 : i32
    %c0_i32_0 = arith.constant 0 : i32
    %c0_i32_1 = arith.constant 0 : i32
    return %c0_i32, %c0_i32_0 : i32, i32
  }
  func.func @transform_13(%arg0: i32) -> (i32, i32) {
    %c0_i32 = arith.constant 0 : i32
    %c0_i32_0 = arith.constant 0 : i32
    %c0_i32_1 = arith.constant 0 : i32
    return %c0_i32, %c0_i32_0 : i32, i32
  }
  func.func @transform_14(%arg0: i32) -> (i32, i32) {
    %c0_i32 = arith.constant 0 : i32
    %c0_i32_0 = arith.constant 0 : i32
    %c0_i32_1 = arith.constant 0 : i32
    return %c0_i32, %c0_i32_0 : i32, i32
  }
  func.func @transform_15(%arg0: i32) -> (i32, i32) {
    %c0_i32 = arith.constant 0 : i32
    %c0_i32_0 = arith.constant 0 : i32
    %c0_i32_1 = arith.constant 0 : i32
    return %c0_i32, %c0_i32_0 : i32, i32
  }
  func.func @transform_16(%arg0: i32) -> (i32, i32) {
    %c0_i32 = arith.constant 0 : i32
    %c0_i32_0 = arith.constant 0 : i32
    %c0_i32_1 = arith.constant 0 : i32
    return %c0_i32, %c0_i32_0 : i32, i32
  }
  func.func @transform_17(%arg0: i32) -> (i32, i32) {
    %c0_i32 = arith.constant 0 : i32
    %c0_i32_0 = arith.constant 0 : i32
    %c0_i32_1 = arith.constant 0 : i32
    return %c0_i32, %c0_i32_0 : i32, i32
  }
  func.func @transform_18(%arg0: i32) -> (i32, i32) {
    %c0_i32 = arith.constant 0 : i32
    %c0_i32_0 = arith.constant 0 : i32
    return %c0_i32, %arg0 : i32, i32
  }
  func.func @transform_19(%arg0: i32) -> (i32, i32) {
    %c0_i32 = arith.constant 0 : i32
    %c0_i32_0 = arith.constant 0 : i32
    return %c0_i32, %arg0 : i32, i32
  }
  func.func @transform_20(%arg0: i32) -> (i32, i32) {
    %c0_i32 = arith.constant 0 : i32
    %c0_i32_0 = arith.constant 0 : i32
    return %c0_i32, %arg0 : i32, i32
  }
  func.func @transform_21(%arg0: i32) -> (i32, i32, i32) {
    %c0_i32 = arith.constant 0 : i32
    %c0_i32_0 = arith.constant 0 : i32
    %c0_i32_1 = arith.constant 0 : i32
    %c0_i32_2 = arith.constant 0 : i32
    return %c0_i32, %c0_i32_0, %c0_i32_1 : i32, i32, i32
  }
  func.func @transform_22(%arg0: i32) -> (i32, i32) {
    %c0_i32 = arith.constant 0 : i32
    %c0_i32_0 = arith.constant 0 : i32
    %c0_i32_1 = arith.constant 0 : i32
    return %c0_i32, %c0_i32_0 : i32, i32
  }
  func.func @transform_23(%arg0: i32) -> (i32, i32) {
    %c0_i32 = arith.constant 0 : i32
    %c0_i32_0 = arith.constant 0 : i32
    %c0_i32_1 = arith.constant 0 : i32
    return %c0_i32, %c0_i32_0 : i32, i32
  }
}

</mosaic_0001>

<llo_original>
// kernel: tpu_custom_call.1
$region0: #{tpu_custom_call.1}
  #allocation0 [shape = 'u32[]', space=smem, size = 0x4, offset = 0x4, fixed_abs, tag = 'smem constant byte address 0x4 - core index']
  #allocation1 [shape = 'u32[144,128]{1,0:T(1,128)}', space=vmem, size = 0x12000, scoped, tag = 'internal scratch']
  #allocation2 [shape = 'f32[2,2,128]{2,1,0:T(2,128)}', space=vmem, size = 0x800, scoped, tag = 'scratch operand']
  #allocation3 [shape = 'f32[2,16]{1,0:T(2,128)}', space=vmem, size = 0x400, scoped, tag = 'scratch operand']
  #allocation4 [shape = 'f32[2,32]{1,0:T(2,128)}', space=vmem, size = 0x400, scoped, tag = 'scratch operand']
  #allocation5 [shape = 'f32[2,32]{1,0:T(2,128)}', space=vmem, size = 0x400, scoped, tag = 'scratch operand']
  #allocation6 [shape = 'f32[2,32]{1,0:T(2,128)}', space=vmem, size = 0x400, scoped, tag = 'scratch operand']
  #allocation7 [shape = 'f32[2,1]{1,0:T(2,128)}', space=vmem, size = 0x400, scoped, tag = 'scratch operand']
  #allocation8 [shape = 'f32[2,8]{1,0:T(2,128)}', space=vmem, size = 0x400, scoped, tag = 'scratch operand']
  #allocation9 [shape = 'f32[2,1]{1,0:T(2,128)}', space=vmem, size = 0x400, scoped, tag = 'scratch operand']
  #allocation10 [shape = 'f32[2,1]{1,0:T(2,128)}', space=vmem, size = 0x400, scoped, tag = 'scratch operand']
  #allocation11 [shape = 's32[2]{0}', space=sflag, size = 0x8, scoped, tag = 'scratch operand']
  #allocation12 [shape = 'f32[1,1]{1,0:T(1,128)S(6)}', space=smem, size = 0x200, scoped, tag = 'scoped memory for tpu_custom_call.1']
  #allocation22 [shape = 's32[]', space=sflag, size = 0x4, offset = 0, fixed_abs, tag = 'sflag constant byte address 0x0 - dummy sync flag']
  #allocation23 [shape = 's32[]', space=sflag, size = 0x4, offset = 0, fixed_abs, tag = 'sflag constant byte address 0x0 - dummy sync flag']
  %s0 = inlined_call_operand.vmem [shape: s32[2], index: 0, kind: input, shape index: {}]
  %s1 = inlined_call_operand.<no memory space> [shape: f32[1,1], index: 1, kind: input, shape index: {}]
  %s2 = inlined_call_operand.vmem [shape: f32[200,16], index: 2, kind: input, shape index: {}]
  %s3 = inlined_call_operand.vmem [shape: f32[2,32], index: 3, kind: input, shape index: {}]
  %s4 = inlined_call_operand.vmem [shape: f32[2,32], index: 4, kind: input, shape index: {}]
  %s5 = inlined_call_operand.vmem [shape: f32[2,8,32], index: 5, kind: input, shape index: {}]
  %s6 = inlined_call_operand.vmem [shape: s32[2,8], index: 6, kind: input, shape index: {}]
  %s7 = inlined_call_operand.vmem [shape: f32[2,8], index: 7, kind: input, shape index: {}]
  %s8 = inlined_call_operand.vmem [shape: f32[16,128], index: 8, kind: input, shape index: {}]
  %s9 = inlined_call_operand.vmem [shape: f32[32,128], index: 9, kind: input, shape index: {}]
  %s10 = inlined_call_operand.vmem [shape: f32[1,128], index: 10, kind: input, shape index: {}]
  %s11 = inlined_call_operand.vmem [shape: f32[32,32], index: 11, kind: input, shape index: {}]
  %s12 = inlined_call_operand.vmem [shape: f32[32,32], index: 12, kind: input, shape index: {}]
  %s13 = inlined_call_operand.vmem [shape: f32[1,32], index: 13, kind: input, shape index: {}]
  %s14 = inlined_call_operand.vmem [shape: f32[1,32], index: 14, kind: input, shape index: {}]
  %s15 = inlined_call_operand.vmem [shape: f32[1,32], index: 15, kind: input, shape index: {}]
  %s16 = inlined_call_operand.vmem [shape: f32[1,32], index: 16, kind: input, shape index: {}]
  %s17 = inlined_call_operand.vmem [shape: f32[1,16], index: 17, kind: input, shape index: {}]
  %s18 = inlined_call_operand.vmem [shape: bf16[32,256], index: 18, kind: input, shape index: {}]
  %s19 = inlined_call_operand.vmem [shape: bf16[32,256], index: 19, kind: input, shape index: {}]
  %s20 = inlined_call_operand.vmem [shape: f32[1,256], index: 20, kind: input, shape index: {}]
  %s21 = inlined_call_operand.hbm [shape: f32[2,2,128], index: 21, kind: output, shape index: {0}]
  %s22 = inlined_call_operand.hbm [shape: f32[2,32], index: 22, kind: output, shape index: {1}]
  %s23 = inlined_call_operand.hbm [shape: f32[2,32], index: 23, kind: output, shape index: {2}]
  %24 = xla_tuple %s21, %s22, %s23
  %s25 = sld [smem:[#allocation0]]
  $region283: #{tpu_custom_call.1} parent=0
    _
  %s27 = ssub.s32 1, %s25
  %s28 = scalar_select 0, %s27, %s25
  %29 = sst [smem:[#allocation12]] %s1
  $region1: #{tpu_custom_call.1} parent=0
    #allocation13 [shape = 'u8[512]{0}', space=smem, size = 0x200, scoped, tag = 'input window, operand 0, single buffered']
    #allocation14 [shape = 's32[2]{0}', space=sflag, size = 0x8, scoped, tag = 'scoped memory for tpu_custom_call.1']
    #allocation15 [shape = 's32[2]{0}', space=sflag, size = 0x8, scoped, tag = 'scoped memory for tpu_custom_call.1']
    #allocation16 [shape = 'u8[16384]{0}', space=vmem, size = 0x4000, scoped, tag = 'input window, operand 18']
    #allocation17 [shape = 'u8[16384]{0}', space=vmem, size = 0x4000, scoped, tag = 'input window, operand 19']
    #allocation18 [shape = 'u8[2048]{0}', space=vmem, size = 0x800, scoped, tag = 'output window, operand 0, single buffered']
    #allocation19 [shape = 'u8[1024]{0}', space=vmem, size = 0x400, scoped, tag = 'output window, operand 1, single buffered']
    #allocation20 [shape = 's32[1]{0}', space=sflag, size = 0x4, scoped, tag = 'scoped memory for tpu_custom_call.1']
    #allocation21 [shape = 'u8[1024]{0}', space=vmem, size = 0x400, scoped, tag = 'output window, operand 2, single buffered']
    %30 = vsyncpa [#allocation15], 0
    %31 = vsyncpa [#allocation14], 0
    %32 = vsyncpa [#allocation20], 0
    loop: start=0, step=1, limit=4
    $region2: #{tpu_custom_call.1} parent=1 // loop_pre_header
      _
    $region3: #{tpu_custom_call.1} parent=1 // loop_header
      %s34 = sphi 0, %s38
      %p35 = scmp.ge.s32.totalorder %s34, 4
      %s42 = sphi 0, %s42
      %s44 = sphi 0, %s42
      %s45 = sphi 0, %s44
      %s59 = sphi 0, %s45
      %s63 = sphi 0, %s63
      %s65 = sphi 0, %s63
      %s66 = sphi 0, %s65
      %s80 = sphi 0, %s66
      %s84 = sphi 0, %s84
      %s86 = sphi 0, %s84
      %s87 = sphi 0, %s86
      %s101 = sphi 0, %s87
      %s105 = sphi 0, %s105
      %s107 = sphi 0, %s105
      %s108 = sphi 0, %s107
      %s122 = sphi 0, %s108
      %s126 = sphi 0, %s126
      %s128 = sphi 0, %s126
      %s129 = sphi 0, %s128
      %s143 = sphi 0, %s129
      %s147 = sphi 0, %s147
      %s149 = sphi 0, %s147
      %s150 = sphi 0, %s149
      %s164 = sphi 0, %s150
      %s168 = sphi 0, %s168
      %s170 = sphi 0, %s168
      %s171 = sphi 0, %s170
      %s185 = sphi 0, %s171
      %s189 = sphi 0, %s189
      %s191 = sphi 0, %s189
      %s192 = sphi 0, %s191
      %s206 = sphi 0, %s192
      %s210 = sphi 0, %s210
      %s212 = sphi 0, %s210
      %s213 = sphi 0, %s212
      %s227 = sphi 0, %s213
      %s231 = sphi 0, %s231
      %s233 = sphi 0, %s231
      %s234 = sphi 0, %s233
      %s248 = sphi 0, %s234
      %s252 = sphi 0, %s252
      %s254 = sphi 0, %s252
      %s255 = sphi 0, %s254
      %s269 = sphi 0, %s255
      %s273 = sphi 0, %s273
      %s275 = sphi 0, %s273
      %s276 = sphi 0, %s275
      %s290 = sphi 0, %s276
      %s294 = sphi 0, %s294
      %s296 = sphi 0, %s294
      %s297 = sphi 0, %s296
      %s311 = sphi 0, %s297
      %s315 = sphi 0, %s315
      %s317 = sphi 0, %s315
      %s318 = sphi 0, %s317
      %s332 = sphi 0, %s318
      %s336 = sphi 0, %s336
      %s338 = sphi 0, %s336
      %s339 = sphi 0, %s338
      %s353 = sphi 0, %s339
      %s357 = sphi 0, %s357
      %s359 = sphi 0, %s357
      %s360 = sphi 0, %s359
      %s374 = sphi 0, %s360
      %s378 = sphi 0, %s378
      %s380 = sphi 0, %s378
      %s381 = sphi 0, %s380
      %s395 = sphi 0, %s381
      %s401 = sphi 0, %s403
      %s404 = sphi 0, %s401
      %s405 = sphi 0, %s404
      %s421 = sphi 0, %s405
      %s427 = sphi 0, %s429
      %s430 = sphi 0, %s427
      %s431 = sphi 0, %s430
      %s447 = sphi 0, %s431
      %s453 = sphi 0, %s455
      %s456 = sphi 0, %s453
      %s457 = sphi 0, %s456
      %s473 = sphi 0, %s457
      %s477 = sphi 0, %s477
      %s479 = sphi 0, %s477
      %s480 = sphi 0, %s479
      %s494 = sphi 0, %s480
      %s498 = sphi 0, %s498
      %s500 = sphi 0, %s498
      %s501 = sphi 0, %s500
      %s515 = sphi 0, %s501
      %s519 = sphi 0, %s519
      %s521 = sphi 0, %s519
      %s522 = sphi 0, %s521
      %s536 = sphi 0, %s522
    $region4: #{tpu_custom_call.1} parent=1 // loop_header_branch
      %37 = sbr.rel (%p35) target = $region8
    $region5: #{tpu_custom_call.1} parent=1 // loop_body
      %s39 = ssub.s32 %s34, 1
      %s40 = ssub.s32 %s34, 2
      %s41 = sadd.s32 %s34, 1
      %s43 = sadd.s32 %s42, 1
      %p46 = scmp.eq.s32.totalorder %s34, 1
      %p47 = scmp.ne.s32.totalorder %s42, %s44
      %p48 = scmp.eq.s32.totalorder %s34, 0
      %p49 = por %p47, %p48
      %p50 = scmp.ne.s32.totalorder %s42, %s44
      %p51 = scmp.eq.s32.totalorder %s39, 1
      %p52 = por %p50, %p51
      %p53 = scmp.ne.s32.totalorder %s44, %s45
      %p54 = scmp.eq.s32.totalorder %s39, 0
      %p55 = por %p53, %p54
      %p56 = scmp.ne.s32.totalorder %s44, %s45
      %p57 = scmp.eq.s32.totalorder %s40, 1
      %p58 = por %p56, %p57
      %p60 = scmp.ne.s32.totalorder %s45, %s59
      %p61 = scmp.eq.s32.totalorder %s40, 0
      %p62 = por %p60, %p61
      %s64 = sadd.s32 %s63, 1
      %p67 = scmp.eq.s32.totalorder %s34, 1
      %p68 = scmp.ne.s32.totalorder %s63, %s65
      %p69 = scmp.eq.s32.totalorder %s34, 0
      %p70 = por %p68, %p69
      %p71 = scmp.ne.s32.totalorder %s63, %s65
      %p72 = scmp.eq.s32.totalorder %s39, 1
      %p73 = por %p71, %p72
      %p74 = scmp.ne.s32.totalorder %s65, %s66
      %p75 = scmp.eq.s32.totalorder %s39, 0
      %p76 = por %p74, %p75
      %p77 = scmp.ne.s32.totalorder %s65, %s66
      %p78 = scmp.eq.s32.totalorder %s40, 1
      %p79 = por %p77, %p78
      %p81 = scmp.ne.s32.totalorder %s66, %s80
      %p82 = scmp.eq.s32.totalorder %s40, 0
      %p83 = por %p81, %p82
      %s85 = sadd.s32 %s84, 1
      %p88 = scmp.eq.s32.totalorder %s34, 1
      %p89 = scmp.ne.s32.totalorder %s84, %s86
      %p90 = scmp.eq.s32.totalorder %s34, 0
      %p91 = por %p89, %p90
      %p92 = scmp.ne.s32.totalorder %s84, %s86
      %p93 = scmp.eq.s32.totalorder %s39, 1
      %p94 = por %p92, %p93
      %p95 = scmp.ne.s32.totalorder %s86, %s87
      %p96 = scmp.eq.s32.totalorder %s39, 0
      %p97 = por %p95, %p96
      %p98 = scmp.ne.s32.totalorder %s86, %s87
      %p99 = scmp.eq.s32.totalorder %s40, 1
      %p100 = por %p98, %p99
      %p102 = scmp.ne.s32.totalorder %s87, %s101
      %p103 = scmp.eq.s32.totalorder %s40, 0
      %p104 = por %p102, %p103
      %s106 = sadd.s32 %s105, 1
      %p109 = scmp.eq.s32.totalorder %s34, 1
      %p110 = scmp.ne.s32.totalorder %s105, %s107
      %p111 = scmp.eq.s32.totalorder %s34, 0
      %p112 = por %p110, %p111
      %p113 = scmp.ne.s32.totalorder %s105, %s107
      %p114 = scmp.eq.s32.totalorder %s39, 1
      %p115 = por %p113, %p114
      %p116 = scmp.ne.s32.totalorder %s107, %s108
      %p117 = scmp.eq.s32.totalorder %s39, 0
      %p118 = por %p116, %p117
      %p119 = scmp.ne.s32.totalorder %s107, %s108
      %p120 = scmp.eq.s32.totalorder %s40, 1
      %p121 = por %p119, %p120
      %p123 = scmp.ne.s32.totalorder %s108, %s122
      %p124 = scmp.eq.s32.totalorder %s40, 0
      %p125 = por %p123, %p124
      %s127 = sadd.s32 %s126, 1
      %p130 = scmp.eq.s32.totalorder %s34, 1
      %p131 = scmp.ne.s32.totalorder %s126, %s128
      %p132 = scmp.eq.s32.totalorder %s34, 0
      %p133 = por %p131, %p132
      %p134 = scmp.ne.s32.totalorder %s126, %s128
      %p135 = scmp.eq.s32.totalorder %s39, 1
      %p136 = por %p134, %p135
      %p137 = scmp.ne.s32.totalorder %s128, %s129
      %p138 = scmp.eq.s32.totalorder %s39, 0
      %p139 = por %p137, %p138
      %p140 = scmp.ne.s32.totalorder %s128, %s129
      %p141 = scmp.eq.s32.totalorder %s40, 1
      %p142 = por %p140, %p141
      %p144 = scmp.ne.s32.totalorder %s129, %s143
      %p145 = scmp.eq.s32.totalorder %s40, 0
      %p146 = por %p144, %p145
      %s148 = sadd.s32 %s147, 1
      %p151 = scmp.eq.s32.totalorder %s34, 1
      %p152 = scmp.ne.s32.totalorder %s147, %s149
      %p153 = scmp.eq.s32.totalorder %s34, 0
      %p154 = por %p152, %p153
      %p155 = scmp.ne.s32.totalorder %s147, %s149
      %p156 = scmp.eq.s32.totalorder %s39, 1
      %p157 = por %p155, %p156
      %p158 = scmp.ne.s32.totalorder %s149, %s150
      %p159 = scmp.eq.s32.totalorder %s39, 0
      %p160 = por %p158, %p159
      %p161 = scmp.ne.s32.totalorder %s149, %s150
      %p162 = scmp.eq.s32.totalorder %s40, 1
      %p163 = por %p161, %p162
      %p165 = scmp.ne.s32.totalorder %s150, %s164
      %p166 = scmp.eq.s32.totalorder %s40, 0
      %p167 = por %p165, %p166
      %s169 = sadd.s32 %s168, 1
      %p172 = scmp.eq.s32.totalorder %s34, 1
      %p173 = scmp.ne.s32.totalorder %s168, %s170
      %p174 = scmp.eq.s32.totalorder %s34, 0
      %p175 = por %p173, %p174
      %p176 = scmp.ne.s32.totalorder %s168, %s170
      %p177 = scmp.eq.s32.totalorder %s39, 1
      %p178 = por %p176, %p177
      %p179 = scmp.ne.s32.totalorder %s170, %s171
      %p180 = scmp.eq.s32.totalorder %s39, 0
      %p181 = por %p179, %p180
      %p182 = scmp.ne.s32.totalorder %s170, %s171
      %p183 = scmp.eq.s32.totalorder %s40, 1
      %p184 = por %p182, %p183
      %p186 = scmp.ne.s32.totalorder %s171, %s185
      %p187 = scmp.eq.s32.totalorder %s40, 0
      %p188 = por %p186, %p187
      %s190 = sadd.s32 %s189, 1
      %p193 = scmp.eq.s32.totalorder %s34, 1
      %p194 = scmp.ne.s32.totalorder %s189, %s191
      %p195 = scmp.eq.s32.totalorder %s34, 0
      %p196 = por %p194, %p195
      %p197 = scmp.ne.s32.totalorder %s189, %s191
      %p198 = scmp.eq.s32.totalorder %s39, 1
      %p199 = por %p197, %p198
      %p200 = scmp.ne.s32.totalorder %s191, %s192
      %p201 = scmp.eq.s32.totalorder %s39, 0
      %p202 = por %p200, %p201
      %p203 = scmp.ne.s32.totalorder %s191, %s192
      %p204 = scmp.eq.s32.totalorder %s40, 1
      %p205 = por %p203, %p204
      %p207 = scmp.ne.s32.totalorder %s192, %s206
      %p208 = scmp.eq.s32.totalorder %s40, 0
      %p209 = por %p207, %p208
      %s211 = sadd.s32 %s210, 1
      %p214 = scmp.eq.s32.totalorder %s34, 1
      %p215 = scmp.ne.s32.totalorder %s210, %s212
      %p216 = scmp.eq.s32.totalorder %s34, 0
      %p217 = por %p215, %p216
      %p218 = scmp.ne.s32.totalorder %s210, %s212
      %p219 = scmp.eq.s32.totalorder %s39, 1
      %p220 = por %p218, %p219
      %p221 = scmp.ne.s32.totalorder %s212, %s213
      %p222 = scmp.eq.s32.totalorder %s39, 0
      %p223 = por %p221, %p222
      %p224 = scmp.ne.s32.totalorder %s212, %s213
      %p225 = scmp.eq.s32.totalorder %s40, 1
      %p226 = por %p224, %p225
      %p228 = scmp.ne.s32.totalorder %s213, %s227
      %p229 = scmp.eq.s32.totalorder %s40, 0
      %p230 = por %p228, %p229
      %s232 = sadd.s32 %s231, 1
      %p235 = scmp.eq.s32.totalorder %s34, 1
      %p236 = scmp.ne.s32.totalorder %s231, %s233
      %p237 = scmp.eq.s32.totalorder %s34, 0
      %p238 = por %p236, %p237
      %p239 = scmp.ne.s32.totalorder %s231, %s233
      %p240 = scmp.eq.s32.totalorder %s39, 1
      %p241 = por %p239, %p240
      %p242 = scmp.ne.s32.totalorder %s233, %s234
      %p243 = scmp.eq.s32.totalorder %s39, 0
      %p244 = por %p242, %p243
      %p245 = scmp.ne.s32.totalorder %s233, %s234
      %p246 = scmp.eq.s32.totalorder %s40, 1
      %p247 = por %p245, %p246
      %p249 = scmp.ne.s32.totalorder %s234, %s248
      %p250 = scmp.eq.s32.totalorder %s40, 0
      %p251 = por %p249, %p250
      %s253 = sadd.s32 %s252, 1
      %p256 = scmp.eq.s32.totalorder %s34, 1
      %p257 = scmp.ne.s32.totalorder %s252, %s254
      %p258 = scmp.eq.s32.totalorder %s34, 0
      %p259 = por %p257, %p258
      %p260 = scmp.ne.s32.totalorder %s252, %s254
      %p261 = scmp.eq.s32.totalorder %s39, 1
      %p262 = por %p260, %p261
      %p263 = scmp.ne.s32.totalorder %s254, %s255
      %p264 = scmp.eq.s32.totalorder %s39, 0
      %p265 = por %p263, %p264
      %p266 = scmp.ne.s32.totalorder %s254, %s255
      %p267 = scmp.eq.s32.totalorder %s40, 1
      %p268 = por %p266, %p267
      %p270 = scmp.ne.s32.totalorder %s255, %s269
      %p271 = scmp.eq.s32.totalorder %s40, 0
      %p272 = por %p270, %p271
      %s274 = sadd.s32 %s273, 1
      %p277 = scmp.eq.s32.totalorder %s34, 1
      %p278 = scmp.ne.s32.totalorder %s273, %s275
      %p279 = scmp.eq.s32.totalorder %s34, 0
      %p280 = por %p278, %p279
      %p281 = scmp.ne.s32.totalorder %s273, %s275
      %p282 = scmp.eq.s32.totalorder %s39, 1
      %p283 = por %p281, %p282
      %p284 = scmp.ne.s32.totalorder %s275, %s276
      %p285 = scmp.eq.s32.totalorder %s39, 0
      %p286 = por %p284, %p285
      %p287 = scmp.ne.s32.totalorder %s275, %s276
      %p288 = scmp.eq.s32.totalorder %s40, 1
      %p289 = por %p287, %p288
      %p291 = scmp.ne.s32.totalorder %s276, %s290
      %p292 = scmp.eq.s32.totalorder %s40, 0
      %p293 = por %p291, %p292
      %s295 = sadd.s32 %s294, 1
      %p298 = scmp.eq.s32.totalorder %s34, 1
      %p299 = scmp.ne.s32.totalorder %s294, %s296
      %p300 = scmp.eq.s32.totalorder %s34, 0
      %p301 = por %p299, %p300
      %p302 = scmp.ne.s32.totalorder %s294, %s296
      %p303 = scmp.eq.s32.totalorder %s39, 1
      %p304 = por %p302, %p303
      %p305 = scmp.ne.s32.totalorder %s296, %s297
      %p306 = scmp.eq.s32.totalorder %s39, 0
      %p307 = por %p305, %p306
      %p308 = scmp.ne.s32.totalorder %s296, %s297
      %p309 = scmp.eq.s32.totalorder %s40, 1
      %p310 = por %p308, %p309
      %p312 = scmp.ne.s32.totalorder %s297, %s311
      %p313 = scmp.eq.s32.totalorder %s40, 0
      %p314 = por %p312, %p313
      %s316 = sadd.s32 %s315, 1
      %p319 = scmp.eq.s32.totalorder %s34, 1
      %p320 = scmp.ne.s32.totalorder %s315, %s317
      %p321 = scmp.eq.s32.totalorder %s34, 0
      %p322 = por %p320, %p321
      %p323 = scmp.ne.s32.totalorder %s315, %s317
      %p324 = scmp.eq.s32.totalorder %s39, 1
      %p325 = por %p323, %p324
      %p326 = scmp.ne.s32.totalorder %s317, %s318
      %p327 = scmp.eq.s32.totalorder %s39, 0
      %p328 = por %p326, %p327
      %p329 = scmp.ne.s32.totalorder %s317, %s318
      %p330 = scmp.eq.s32.totalorder %s40, 1
      %p331 = por %p329, %p330
      %p333 = scmp.ne.s32.totalorder %s318, %s332
      %p334 = scmp.eq.s32.totalorder %s40, 0
      %p335 = por %p333, %p334
      %s337 = sadd.s32 %s336, 1
      %p340 = scmp.eq.s32.totalorder %s34, 1
      %p341 = scmp.ne.s32.totalorder %s336, %s338
      %p342 = scmp.eq.s32.totalorder %s34, 0
      %p343 = por %p341, %p342
      %p344 = scmp.ne.s32.totalorder %s336, %s338
      %p345 = scmp.eq.s32.totalorder %s39, 1
      %p346 = por %p344, %p345
      %p347 = scmp.ne.s32.totalorder %s338, %s339
      %p348 = scmp.eq.s32.totalorder %s39, 0
      %p349 = por %p347, %p348
      %p350 = scmp.ne.s32.totalorder %s338, %s339
      %p351 = scmp.eq.s32.totalorder %s40, 1
      %p352 = por %p350, %p351
      %p354 = scmp.ne.s32.totalorder %s339, %s353
      %p355 = scmp.eq.s32.totalorder %s40, 0
      %p356 = por %p354, %p355
      %s358 = sadd.s32 %s357, 1
      %p361 = scmp.eq.s32.totalorder %s34, 1
      %p362 = scmp.ne.s32.totalorder %s357, %s359
      %p363 = scmp.eq.s32.totalorder %s34, 0
      %p364 = por %p362, %p363
      %p365 = scmp.ne.s32.totalorder %s357, %s359
      %p366 = scmp.eq.s32.totalorder %s39, 1
      %p367 = por %p365, %p366
      %p368 = scmp.ne.s32.totalorder %s359, %s360
      %p369 = scmp.eq.s32.totalorder %s39, 0
      %p370 = por %p368, %p369
      %p371 = scmp.ne.s32.totalorder %s359, %s360
      %p372 = scmp.eq.s32.totalorder %s40, 1
      %p373 = por %p371, %p372
      %p375 = scmp.ne.s32.totalorder %s360, %s374
      %p376 = scmp.eq.s32.totalorder %s40, 0
      %p377 = por %p375, %p376
      %s379 = sadd.s32 %s378, 1
      %p382 = scmp.eq.s32.totalorder %s34, 1
      %p383 = scmp.ne.s32.totalorder %s378, %s380
      %p384 = scmp.eq.s32.totalorder %s34, 0
      %p385 = por %p383, %p384
      %p386 = scmp.ne.s32.totalorder %s378, %s380
      %p387 = scmp.eq.s32.totalorder %s39, 1
      %p388 = por %p386, %p387
      %p389 = scmp.ne.s32.totalorder %s380, %s381
      %p390 = scmp.eq.s32.totalorder %s39, 0
      %p391 = por %p389, %p390
      %p392 = scmp.ne.s32.totalorder %s380, %s381
      %p393 = scmp.eq.s32.totalorder %s40, 1
      %p394 = por %p392, %p393
      %p396 = scmp.ne.s32.totalorder %s381, %s395
      %p397 = scmp.eq.s32.totalorder %s40, 0
      %p398 = por %p396, %p397
      %s399 = ssub.s32 %s34, %s41
      %p400 = scmp.eq.s32.totalorder %s399, 0
      %s402 = sadd.s32 %s401, 1
      %s403 = scalar_select %p400, %s401, %s402
      %p406 = pneg %p400
      %p407 = scmp.eq.s32.totalorder %s34, 1
      %p408 = por %p406, %p407
      %p409 = scmp.ne.s32.totalorder %s401, %s404
      %p410 = scmp.eq.s32.totalorder %s34, 0
      %p411 = por %p409, %p410
      %p412 = scmp.ne.s32.totalorder %s401, %s404
      %p413 = scmp.eq.s32.totalorder %s39, 1
      %p414 = por %p412, %p413
      %p415 = scmp.ne.s32.totalorder %s404, %s405
      %p416 = scmp.eq.s32.totalorder %s39, 0
      %p417 = por %p415, %p416
      %p418 = scmp.ne.s32.totalorder %s404, %s405
      %p419 = scmp.eq.s32.totalorder %s40, 1
      %p420 = por %p418, %p419
      %p422 = scmp.ne.s32.totalorder %s405, %s421
      %p423 = scmp.eq.s32.totalorder %s40, 0
      %p424 = por %p422, %p423
      %s425 = ssub.s32 %s34, %s41
      %p426 = scmp.eq.s32.totalorder %s425, 0
      %s428 = sadd.s32 %s427, 1
      %s429 = scalar_select %p426, %s427, %s428
      %p432 = pneg %p426
      %p433 = scmp.eq.s32.totalorder %s34, 1
      %p434 = por %p432, %p433
      %p435 = scmp.ne.s32.totalorder %s427, %s430
      %p436 = scmp.eq.s32.totalorder %s34, 0
      %p437 = por %p435, %p436
      %p438 = scmp.ne.s32.totalorder %s427, %s430
      %p439 = scmp.eq.s32.totalorder %s39, 1
      %p440 = por %p438, %p439
      %p441 = scmp.ne.s32.totalorder %s430, %s431
      %p442 = scmp.eq.s32.totalorder %s39, 0
      %p443 = por %p441, %p442
      %p444 = scmp.ne.s32.totalorder %s430, %s431
      %p445 = scmp.eq.s32.totalorder %s40, 1
      %p446 = por %p444, %p445
      %p448 = scmp.ne.s32.totalorder %s431, %s447
      %p449 = scmp.eq.s32.totalorder %s40, 0
      %p450 = por %p448, %p449
      %s451 = ssub.s32 %s34, %s41
      %p452 = scmp.eq.s32.totalorder %s451, 0
      %s454 = sadd.s32 %s453, 1
      %s455 = scalar_select %p452, %s453, %s454
      %p458 = pneg %p452
      %p459 = scmp.eq.s32.totalorder %s34, 1
      %p460 = por %p458, %p459
      %p461 = scmp.ne.s32.totalorder %s453, %s456
      %p462 = scmp.eq.s32.totalorder %s34, 0
      %p463 = por %p461, %p462
      %p464 = scmp.ne.s32.totalorder %s453, %s456
      %p465 = scmp.eq.s32.totalorder %s39, 1
      %p466 = por %p464, %p465
      %p467 = scmp.ne.s32.totalorder %s456, %s457
      %p468 = scmp.eq.s32.totalorder %s39, 0
      %p469 = por %p467, %p468
      %p470 = scmp.ne.s32.totalorder %s456, %s457
      %p471 = scmp.eq.s32.totalorder %s40, 1
      %p472 = por %p470, %p471
      %p474 = scmp.ne.s32.totalorder %s457, %s473
      %p475 = scmp.eq.s32.totalorder %s40, 0
      %p476 = por %p474, %p475
      %s478 = sadd.s32 %s477, 1
      %p481 = scmp.eq.s32.totalorder %s34, 1
      %p482 = scmp.ne.s32.totalorder %s477, %s479
      %p483 = scmp.eq.s32.totalorder %s34, 0
      %p484 = por %p482, %p483
      %p485 = scmp.ne.s32.totalorder %s477, %s479
      %p486 = scmp.eq.s32.totalorder %s39, 1
      %p487 = por %p485, %p486
      %p488 = scmp.ne.s32.totalorder %s479, %s480
      %p489 = scmp.eq.s32.totalorder %s39, 0
      %p490 = por %p488, %p489
      %p491 = scmp.ne.s32.totalorder %s479, %s480
      %p492 = scmp.eq.s32.totalorder %s40, 1
      %p493 = por %p491, %p492
      %p495 = scmp.ne.s32.totalorder %s480, %s494
      %p496 = scmp.eq.s32.totalorder %s40, 0
      %p497 = por %p495, %p496
      %s499 = sadd.s32 %s498, 1
      %p502 = scmp.eq.s32.totalorder %s34, 1
      %p503 = scmp.ne.s32.totalorder %s498, %s500
      %p504 = scmp.eq.s32.totalorder %s34, 0
      %p505 = por %p503, %p504
      %p506 = scmp.ne.s32.totalorder %s498, %s500
      %p507 = scmp.eq.s32.totalorder %s39, 1
      %p508 = por %p506, %p507
      %p509 = scmp.ne.s32.totalorder %s500, %s501
      %p510 = scmp.eq.s32.totalorder %s39, 0
      %p511 = por %p509, %p510
      %p512 = scmp.ne.s32.totalorder %s500, %s501
      %p513 = scmp.eq.s32.totalorder %s40, 1
      %p514 = por %p512, %p513
      %p516 = scmp.ne.s32.totalorder %s501, %s515
      %p517 = scmp.eq.s32.totalorder %s40, 0
      %p518 = por %p516, %p517
      %s520 = sadd.s32 %s519, 1
      %p523 = scmp.eq.s32.totalorder %s34, 1
      %p524 = scmp.ne.s32.totalorder %s519, %s521
      %p525 = scmp.eq.s32.totalorder %s34, 0
      %p526 = por %p524, %p525
      %p527 = scmp.ne.s32.totalorder %s519, %s521
      %p528 = scmp.eq.s32.totalorder %s39, 1
      %p529 = por %p527, %p528
      %p530 = scmp.ne.s32.totalorder %s521, %s522
      %p531 = scmp.eq.s32.totalorder %s39, 0
      %p532 = por %p530, %p531
      %p533 = scmp.ne.s32.totalorder %s521, %s522
      %p534 = scmp.eq.s32.totalorder %s40, 1
      %p535 = por %p533, %p534
      %p537 = scmp.ne.s32.totalorder %s522, %s536
      %p538 = scmp.eq.s32.totalorder %s40, 0
      %p539 = por %p537, %p538
      %p540 = scmp.le.s32.totalorder 1, %s34
      %p541 = scmp.lt.s32.totalorder %s34, 3
      %p542 = pnand %p540, %p541
      %p543 = pneg %p542
      // Predicated region
      $region9: #{tpu_custom_call.1} parent=5 // pred_check
        _
      $region10: #{tpu_custom_call.1} parent=5 // pred_check_branch
        %545 = sbr.rel (%p542) target = $region12
      $region11: #{tpu_custom_call.1} parent=5 // pred_region
        %s546 = ssub.s32 %s34, 1
        // Predicated region
        $region13: #{tpu_custom_call.1} parent=11 // pred_check
          %p547 = pneg %p55
        $region14: #{tpu_custom_call.1} parent=11 // pred_check_branch
          %549 = sbr.rel (%p547) target = $region16
        $region15: #{tpu_custom_call.1} parent=11 // pred_region
          %s551 = ssub.s32 16, 16
          %552 = vsyncadd [#allocation15], %s551
          %s554 = sshll.u32 %s0, 4
          %s555 = int_to_ptr.vmem [resolvable:$true] %s554
          %557 = dma.vmem_to_smem %s555, 16, [#allocation13], [#allocation15]
        $region16: #{tpu_custom_call.1} parent=11 // pred_fallthru
          _
        // Predicated region
        $region17: #{tpu_custom_call.1} parent=11 // pred_check
          %p558 = pneg %p76
        $region18: #{tpu_custom_call.1} parent=11 // pred_check_branch
          %560 = sbr.rel (%p558) target = $region20
        $region19: #{tpu_custom_call.1} parent=11 // pred_region
          _
        $region20: #{tpu_custom_call.1} parent=11 // pred_fallthru
          _
        // Predicated region
        $region21: #{tpu_custom_call.1} parent=11 // pred_check
          %p561 = pneg %p97
        $region22: #{tpu_custom_call.1} parent=11 // pred_check_branch
          %563 = sbr.rel (%p561) target = $region24
        $region23: #{tpu_custom_call.1} parent=11 // pred_region
          _
        $region24: #{tpu_custom_call.1} parent=11 // pred_fallthru
          _
        // Predicated region
        $region25: #{tpu_custom_call.1} parent=11 // pred_check
          %p564 = pneg %p118
        $region26: #{tpu_custom_call.1} parent=11 // pred_check_branch
          %566 = sbr.rel (%p564) target = $region28
        $region27: #{tpu_custom_call.1} parent=11 // pred_region
          _
        $region28: #{tpu_custom_call.1} parent=11 // pred_fallthru
          _
        // Predicated region
        $region29: #{tpu_custom_call.1} parent=11 // pred_check
          %p567 = pneg %p139
        $region30: #{tpu_custom_call.1} parent=11 // pred_check_branch
          %569 = sbr.rel (%p567) target = $region32
        $region31: #{tpu_custom_call.1} parent=11 // pred_region
          _
        $region32: #{tpu_custom_call.1} parent=11 // pred_fallthru
          _
        // Predicated region
        $region33: #{tpu_custom_call.1} parent=11 // pred_check
          %p570 = pneg %p160
        $region34: #{tpu_custom_call.1} parent=11 // pred_check_branch
          %572 = sbr.rel (%p570) target = $region36
        $region35: #{tpu_custom_call.1} parent=11 // pred_region
          _
        $region36: #{tpu_custom_call.1} parent=11 // pred_fallthru
          _
        // Predicated region
        $region37: #{tpu_custom_call.1} parent=11 // pred_check
          %p573 = pneg %p181
        $region38: #{tpu_custom_call.1} parent=11 // pred_check_branch
          %575 = sbr.rel (%p573) target = $region40
        $region39: #{tpu_custom_call.1} parent=11 // pred_region
          _
        $region40: #{tpu_custom_call.1} parent=11 // pred_fallthru
          _
        // Predicated region
        $region41: #{tpu_custom_call.1} parent=11 // pred_check
          %p576 = pneg %p202
        $region42: #{tpu_custom_call.1} parent=11 // pred_check_branch
          %578 = sbr.rel (%p576) target = $region44
        $region43: #{tpu_custom_call.1} parent=11 // pred_region
          _
        $region44: #{tpu_custom_call.1} parent=11 // pred_fallthru
          _
        // Predicated region
        $region45: #{tpu_custom_call.1} parent=11 // pred_check
          %p579 = pneg %p223
        $region46: #{tpu_custom_call.1} parent=11 // pred_check_branch
          %581 = sbr.rel (%p579) target = $region48
        $region47: #{tpu_custom_call.1} parent=11 // pred_region
          _
        $region48: #{tpu_custom_call.1} parent=11 // pred_fallthru
          _
        // Predicated region
        $region49: #{tpu_custom_call.1} parent=11 // pred_check
          %p582 = pneg %p244
        $region50: #{tpu_custom_call.1} parent=11 // pred_check_branch
          %584 = sbr.rel (%p582) target = $region52
        $region51: #{tpu_custom_call.1} parent=11 // pred_region
          _
        $region52: #{tpu_custom_call.1} parent=11 // pred_fallthru
          _
        // Predicated region
        $region53: #{tpu_custom_call.1} parent=11 // pred_check
          %p585 = pneg %p265
        $region54: #{tpu_custom_call.1} parent=11 // pred_check_branch
          %587 = sbr.rel (%p585) target = $region56
        $region55: #{tpu_custom_call.1} parent=11 // pred_region
          _
        $region56: #{tpu_custom_call.1} parent=11 // pred_fallthru
          _
        // Predicated region
        $region57: #{tpu_custom_call.1} parent=11 // pred_check
          %p588 = pneg %p286
        $region58: #{tpu_custom_call.1} parent=11 // pred_check_branch
          %590 = sbr.rel (%p588) target = $region60
        $region59: #{tpu_custom_call.1} parent=11 // pred_region
          _
        $region60: #{tpu_custom_call.1} parent=11 // pred_fallthru
          _
        // Predicated region
        $region61: #{tpu_custom_call.1} parent=11 // pred_check
          %p591 = pneg %p307
        $region62: #{tpu_custom_call.1} parent=11 // pred_check_branch
          %593 = sbr.rel (%p591) target = $region64
        $region63: #{tpu_custom_call.1} parent=11 // pred_region
          _
        $region64: #{tpu_custom_call.1} parent=11 // pred_fallthru
          _
        // Predicated region
        $region65: #{tpu_custom_call.1} parent=11 // pred_check
          %p594 = pneg %p328
        $region66: #{tpu_custom_call.1} parent=11 // pred_check_branch
          %596 = sbr.rel (%p594) target = $region68
        $region67: #{tpu_custom_call.1} parent=11 // pred_region
          _
        $region68: #{tpu_custom_call.1} parent=11 // pred_fallthru
          _
        // Predicated region
        $region69: #{tpu_custom_call.1} parent=11 // pred_check
          %p597 = pneg %p349
        $region70: #{tpu_custom_call.1} parent=11 // pred_check_branch
          %599 = sbr.rel (%p597) target = $region72
        $region71: #{tpu_custom_call.1} parent=11 // pred_region
          _
        $region72: #{tpu_custom_call.1} parent=11 // pred_fallthru
          _
        // Predicated region
        $region73: #{tpu_custom_call.1} parent=11 // pred_check
          %p600 = pneg %p370
        $region74: #{tpu_custom_call.1} parent=11 // pred_check_branch
          %602 = sbr.rel (%p600) target = $region76
        $region75: #{tpu_custom_call.1} parent=11 // pred_region
          _
        $region76: #{tpu_custom_call.1} parent=11 // pred_fallthru
          _
        // Predicated region
        $region77: #{tpu_custom_call.1} parent=11 // pred_check
          %p603 = pneg %p391
        $region78: #{tpu_custom_call.1} parent=11 // pred_check_branch
          %605 = sbr.rel (%p603) target = $region80
        $region79: #{tpu_custom_call.1} parent=11 // pred_region
          _
        $region80: #{tpu_custom_call.1} parent=11 // pred_fallthru
          _
      $region12: #{tpu_custom_call.1} parent=5 // pred_fallthru
        _
      %p606 = scmp.lt.s32.totalorder %s34, 2
      // Predicated region
      $region81: #{tpu_custom_call.1} parent=5 // pred_check
        %p607 = pneg %p606
      $region82: #{tpu_custom_call.1} parent=5 // pred_check_branch
        %609 = sbr.rel (%p607) target = $region84
      $region83: #{tpu_custom_call.1} parent=5 // pred_region
        // Predicated region
        $region85: #{tpu_custom_call.1} parent=83 // pred_check
          %p610 = pneg %p411
        $region86: #{tpu_custom_call.1} parent=83 // pred_check_branch
          %612 = sbr.rel (%p610) target = $region88
        $region87: #{tpu_custom_call.1} parent=83 // pred_region
          %s613 = sand.u32 %s401, 1
          %s614 = sand.u32 %s401, 1
          %s615 = smul.addr %s614, 16
          %s616 = scalar_lea.vmem [#allocation16], %s615
          %s617 = smul.addr %s34, 4
          %s618 = scalar_lea.vmem %s18, %s617
          // Predicated region
          $region89: #{tpu_custom_call.1} parent=87 // pred_check
            _
          $region90: #{tpu_custom_call.1} parent=87 // pred_check_branch
            %620 = sbr.rel (0) target = $region92
          $region91: #{tpu_custom_call.1} parent=87 // pred_region
            // Predicated region
            $region93: #{tpu_custom_call.1} parent=91 // pred_check
              _
            $region94: #{tpu_custom_call.1} parent=91 // pred_check_branch
              %622 = sbr.rel target = $region96
            $region95: #{tpu_custom_call.1} parent=91 // pred_region
              // Predicated region
              $region108: #{tpu_custom_call.1} parent=95 // pred_check
                _
              $region109: #{tpu_custom_call.1} parent=95 // pred_check_branch
                %644 = sbr.rel (0) target = $region111
              $region110: #{tpu_custom_call.1} parent=95 // pred_region
                loop: start=0, step=1, limit=1
                $region112: #{tpu_custom_call.1} parent=110 // loop_pre_header
                  _
                $region113: #{tpu_custom_call.1} parent=110 // loop_header
                  %s646 = sphi 0, %s650
                  %p647 = scmp.ge.s32.totalorder %s646, 1
                  %s651 = sphi %s618, %s618
                  %s652 = sphi %s616, %s616
                $region114: #{tpu_custom_call.1} parent=110 // loop_header_branch
                  %649 = sbr.rel (%p647) target = $region118
                $region115: #{tpu_custom_call.1} parent=110 // loop_body
                  _
                $region116: #{tpu_custom_call.1} parent=110 // loop_footer
                  %s650 = sadd.s32 1, %s646
                $region117: #{tpu_custom_call.1} parent=110 // loop_footer_branch
                  %645 = sbr.rel target = $region113
                $region118: #{tpu_custom_call.1} parent=110 // loop_exit
                  _
                %s654 = ssub.s32 16, 1
                loop: start=0, step=1, limit=1
                $region119: #{tpu_custom_call.1} parent=110 // loop_pre_header
                  _
                $region120: #{tpu_custom_call.1} parent=110 // loop_header
                  %s656 = sphi 0, %s660
                  %p657 = scmp.ge.s32.totalorder %s656, 1
                  %s661 = sphi %s618, %s618
                  %s662 = sphi %s616, %s616
                $region121: #{tpu_custom_call.1} parent=110 // loop_header_branch
                  %659 = sbr.rel (%p657) target = $region125
                $region122: #{tpu_custom_call.1} parent=110 // loop_body
                  %v663 = vld [vmem:[%s661] sm:%s654]
                  %664 = vst [vmem:[%s662] sm:%s654] %v663
                  %v665 = vld [vmem:[%s661 + $0x8] sm:%s654]
                  %666 = vst [vmem:[%s662 + $0x4] sm:%s654] %v665
                  %v667 = vld [vmem:[%s661 + $0x10] sm:%s654]
                  %668 = vst [vmem:[%s662 + $0x8] sm:%s654] %v667
                  %v669 = vld [vmem:[%s661 + $0x18] sm:%s654]
                  %670 = vst [vmem:[%s662 + $0xc] sm:%s654] %v669
                $region123: #{tpu_custom_call.1} parent=110 // loop_footer
                  %s660 = sadd.s32 1, %s656
                $region124: #{tpu_custom_call.1} parent=110 // loop_footer_branch
                  %655 = sbr.rel target = $region120
                $region125: #{tpu_custom_call.1} parent=110 // loop_exit
                  _
              $region111: #{tpu_custom_call.1} parent=95 // pred_fallthru
                _
            $region96: #{tpu_custom_call.1} parent=91 // pred_fallthru
              _
            // Predicated region
            $region97: #{tpu_custom_call.1} parent=91 // pred_check
              _
            $region98: #{tpu_custom_call.1} parent=91 // pred_check_branch
              %624 = sbr.rel (0) target = $region100
            $region99: #{tpu_custom_call.1} parent=91 // pred_region
              %s626 = ssub.s32 16, 1
              loop: start=0, step=1, limit=1
              $region101: #{tpu_custom_call.1} parent=99 // loop_pre_header
                _
              $region102: #{tpu_custom_call.1} parent=99 // loop_header
                %s628 = sphi 0, %s632
                %p629 = scmp.ge.s32.totalorder %s628, 1
                %s633 = sphi %s618, %s618
                %s634 = sphi %s616, %s616
              $region103: #{tpu_custom_call.1} parent=99 // loop_header_branch
                %631 = sbr.rel (%p629) target = $region107
              $region104: #{tpu_custom_call.1} parent=99 // loop_body
                %v635 = vld [vmem:[%s633] sm:%s626]
                %636 = vst [vmem:[%s634] sm:%s626] %v635
                %v637 = vld [vmem:[%s633 + $0x8] sm:%s626]
                %638 = vst [vmem:[%s634 + $0x4] sm:%s626] %v637
                %v639 = vld [vmem:[%s633 + $0x10] sm:%s626]
                %640 = vst [vmem:[%s634 + $0x8] sm:%s626] %v639
                %v641 = vld [vmem:[%s633 + $0x18] sm:%s626]
                %642 = vst [vmem:[%s634 + $0xc] sm:%s626] %v641
              $region105: #{tpu_custom_call.1} parent=99 // loop_footer
                %s632 = sadd.s32 1, %s628
              $region106: #{tpu_custom_call.1} parent=99 // loop_footer_branch
                %627 = sbr.rel target = $region102
              $region107: #{tpu_custom_call.1} parent=99 // loop_exit
                _
            $region100: #{tpu_custom_call.1} parent=91 // pred_fallthru
              _
          $region92: #{tpu_custom_call.1} parent=87 // pred_fallthru
            _
          %671 = vnop
        $region88: #{tpu_custom_call.1} parent=83 // pred_fallthru
          _
        // Predicated region
        $region126: #{tpu_custom_call.1} parent=83 // pred_check
          %p672 = pneg %p437
        $region127: #{tpu_custom_call.1} parent=83 // pred_check_branch
          %674 = sbr.rel (%p672) target = $region129
        $region128: #{tpu_custom_call.1} parent=83 // pred_region
          %s675 = sand.u32 %s427, 1
          %s676 = sand.u32 %s427, 1
          %s677 = smul.addr %s676, 16
          %s678 = scalar_lea.vmem [#allocation17], %s677
          %s679 = smul.addr %s34, 4
          %s680 = scalar_lea.vmem %s19, %s679
          // Predicated region
          $region130: #{tpu_custom_call.1} parent=128 // pred_check
            _
          $region131: #{tpu_custom_call.1} parent=128 // pred_check_branch
            %682 = sbr.rel (0) target = $region133
          $region132: #{tpu_custom_call.1} parent=128 // pred_region
            // Predicated region
            $region134: #{tpu_custom_call.1} parent=132 // pred_check
              _
            $region135: #{tpu_custom_call.1} parent=132 // pred_check_branch
              %684 = sbr.rel target = $region137
            $region136: #{tpu_custom_call.1} parent=132 // pred_region
              // Predicated region
              $region149: #{tpu_custom_call.1} parent=136 // pred_check
                _
              $region150: #{tpu_custom_call.1} parent=136 // pred_check_branch
                %706 = sbr.rel (0) target = $region152
              $region151: #{tpu_custom_call.1} parent=136 // pred_region
                loop: start=0, step=1, limit=1
                $region153: #{tpu_custom_call.1} parent=151 // loop_pre_header
                  _
                $region154: #{tpu_custom_call.1} parent=151 // loop_header
                  %s708 = sphi 0, %s712
                  %p709 = scmp.ge.s32.totalorder %s708, 1
                  %s713 = sphi %s680, %s680
                  %s714 = sphi %s678, %s678
                $region155: #{tpu_custom_call.1} parent=151 // loop_header_branch
                  %711 = sbr.rel (%p709) target = $region159
                $region156: #{tpu_custom_call.1} parent=151 // loop_body
                  _
                $region157: #{tpu_custom_call.1} parent=151 // loop_footer
                  %s712 = sadd.s32 1, %s708
                $region158: #{tpu_custom_call.1} parent=151 // loop_footer_branch
                  %707 = sbr.rel target = $region154
                $region159: #{tpu_custom_call.1} parent=151 // loop_exit
                  _
                %s716 = ssub.s32 16, 1
                loop: start=0, step=1, limit=1
                $region160: #{tpu_custom_call.1} parent=151 // loop_pre_header
                  _
                $region161: #{tpu_custom_call.1} parent=151 // loop_header
                  %s718 = sphi 0, %s722
                  %p719 = scmp.ge.s32.totalorder %s718, 1
                  %s723 = sphi %s680, %s680
                  %s724 = sphi %s678, %s678
                $region162: #{tpu_custom_call.1} parent=151 // loop_header_branch
                  %721 = sbr.rel (%p719) target = $region166
                $region163: #{tpu_custom_call.1} parent=151 // loop_body
                  %v725 = vld [vmem:[%s723] sm:%s716]
                  %726 = vst [vmem:[%s724] sm:%s716] %v725
                  %v727 = vld [vmem:[%s723 + $0x8] sm:%s716]
                  %728 = vst [vmem:[%s724 + $0x4] sm:%s716] %v727
                  %v729 = vld [vmem:[%s723 + $0x10] sm:%s716]
                  %730 = vst [vmem:[%s724 + $0x8] sm:%s716] %v729
                  %v731 = vld [vmem:[%s723 + $0x18] sm:%s716]
                  %732 = vst [vmem:[%s724 + $0xc] sm:%s716] %v731
                $region164: #{tpu_custom_call.1} parent=151 // loop_footer
                  %s722 = sadd.s32 1, %s718
                $region165: #{tpu_custom_call.1} parent=151 // loop_footer_branch
                  %717 = sbr.rel target = $region161
                $region166: #{tpu_custom_call.1} parent=151 // loop_exit
                  _
              $region152: #{tpu_custom_call.1} parent=136 // pred_fallthru
                _
            $region137: #{tpu_custom_call.1} parent=132 // pred_fallthru
              _
            // Predicated region
            $region138: #{tpu_custom_call.1} parent=132 // pred_check
              _
            $region139: #{tpu_custom_call.1} parent=132 // pred_check_branch
              %686 = sbr.rel (0) target = $region141
            $region140: #{tpu_custom_call.1} parent=132 // pred_region
              %s688 = ssub.s32 16, 1
              loop: start=0, step=1, limit=1
              $region142: #{tpu_custom_call.1} parent=140 // loop_pre_header
                _
              $region143: #{tpu_custom_call.1} parent=140 // loop_header
                %s690 = sphi 0, %s694
                %p691 = scmp.ge.s32.totalorder %s690, 1
                %s695 = sphi %s680, %s680
                %s696 = sphi %s678, %s678
              $region144: #{tpu_custom_call.1} parent=140 // loop_header_branch
                %693 = sbr.rel (%p691) target = $region148
              $region145: #{tpu_custom_call.1} parent=140 // loop_body
                %v697 = vld [vmem:[%s695] sm:%s688]
                %698 = vst [vmem:[%s696] sm:%s688] %v697
                %v699 = vld [vmem:[%s695 + $0x8] sm:%s688]
                %700 = vst [vmem:[%s696 + $0x4] sm:%s688] %v699
                %v701 = vld [vmem:[%s695 + $0x10] sm:%s688]
                %702 = vst [vmem:[%s696 + $0x8] sm:%s688] %v701
                %v703 = vld [vmem:[%s695 + $0x18] sm:%s688]
                %704 = vst [vmem:[%s696 + $0xc] sm:%s688] %v703
              $region146: #{tpu_custom_call.1} parent=140 // loop_footer
                %s694 = sadd.s32 1, %s690
              $region147: #{tpu_custom_call.1} parent=140 // loop_footer_branch
                %689 = sbr.rel target = $region143
              $region148: #{tpu_custom_call.1} parent=140 // loop_exit
                _
            $region141: #{tpu_custom_call.1} parent=132 // pred_fallthru
              _
          $region133: #{tpu_custom_call.1} parent=128 // pred_fallthru
            _
          %733 = vnop
        $region129: #{tpu_custom_call.1} parent=83 // pred_fallthru
          _
        // Predicated region
        $region167: #{tpu_custom_call.1} parent=83 // pred_check
          %p734 = pneg %p463
        $region168: #{tpu_custom_call.1} parent=83 // pred_check_branch
          %736 = sbr.rel (%p734) target = $region170
        $region169: #{tpu_custom_call.1} parent=83 // pred_region
          %p737 = scmp.lt.s32.totalorder %s34, 1
          %s738 = scalar_select %p737, %s34, 1
          %s739 = scalar_lea.vmem %s20, %s738
        $region170: #{tpu_custom_call.1} parent=83 // pred_fallthru
          _
      $region84: #{tpu_custom_call.1} parent=5 // pred_fallthru
        _
      %p740 = scmp.le.s32.totalorder 1, %s34
      %p741 = scmp.lt.s32.totalorder %s34, 3
      %p742 = pnand %p740, %p741
      %p743 = pneg %p742
      // Predicated region
      $region171: #{tpu_custom_call.1} parent=5 // pred_check
        _
      $region172: #{tpu_custom_call.1} parent=5 // pred_check_branch
        %745 = sbr.rel (%p742) target = $region174
      $region173: #{tpu_custom_call.1} parent=5 // pred_region
        %s746 = ssub.s32 %s34, 1
        // Predicated region
        $region175: #{tpu_custom_call.1} parent=173 // pred_check
          %p747 = pneg %p55
        $region176: #{tpu_custom_call.1} parent=173 // pred_check_branch
          %749 = sbr.rel (%p747) target = $region178
        $region177: #{tpu_custom_call.1} parent=173 // pred_region
          %750 = dma.done [#allocation15], 16
        $region178: #{tpu_custom_call.1} parent=173 // pred_fallthru
          _
        %s751 = sand.u32 %s404, 1
        %s752 = sand.u32 %s404, 1
        %s753 = smul.addr %s752, 16
        %s754 = scalar_lea.vmem [#allocation16], %s753
        // Predicated region
        $region179: #{tpu_custom_call.1} parent=173 // pred_check
          %p755 = pneg %p417
        $region180: #{tpu_custom_call.1} parent=173 // pred_check_branch
          %757 = sbr.rel (%p755) target = $region182
        $region181: #{tpu_custom_call.1} parent=173 // pred_region
          _
        $region182: #{tpu_custom_call.1} parent=173 // pred_fallthru
          _
        %s758 = sand.u32 %s430, 1
        %s759 = sand.u32 %s430, 1
        %s760 = smul.addr %s759, 16
        %s761 = scalar_lea.vmem [#allocation17], %s760
        // Predicated region
        $region183: #{tpu_custom_call.1} parent=173 // pred_check
          %p762 = pneg %p443
        $region184: #{tpu_custom_call.1} parent=173 // pred_check_branch
          %764 = sbr.rel (%p762) target = $region186
        $region185: #{tpu_custom_call.1} parent=173 // pred_region
          _
        $region186: #{tpu_custom_call.1} parent=173 // pred_fallthru
          _
        %765 = sfence
        %p766 = pneg %p55
        %p767 = pneg %p52
        %p768 = pneg %p76
        %p769 = pneg %p73
        %p770 = pneg %p97
        %p771 = pneg %p94
        %p772 = pneg %p118
        %p773 = pneg %p115
        %p774 = pneg %p139
        %p775 = pneg %p136
        %p776 = pneg %p160
        %p777 = pneg %p157
        %p778 = pneg %p181
        %p779 = pneg %p178
        %p780 = pneg %p202
        %p781 = pneg %p199
        %p782 = pneg %p223
        %p783 = pneg %p220
        %p784 = pneg %p244
        %p785 = pneg %p241
        %p786 = pneg %p265
        %p787 = pneg %p262
        %p788 = pneg %p286
        %p789 = pneg %p283
        %p790 = pneg %p307
        %p791 = pneg %p304
        %p792 = pneg %p328
        %p793 = pneg %p325
        %p794 = pneg %p349
        %p795 = pneg %p346
        %p796 = pneg %p370
        %p797 = pneg %p367
        %p798 = pneg %p391
        %p799 = pneg %p388
        %s800 = sand.u32 %s404, 1
        %s801 = sand.u32 %s404, 1
        %s802 = smul.addr %s801, 16
        %s803 = scalar_lea.vmem [#allocation16], %s802
        %p804 = pneg %p417
        %p805 = pneg %p414
        %s806 = sand.u32 %s430, 1
        %s807 = sand.u32 %s430, 1
        %s808 = smul.addr %s807, 16
        %s809 = scalar_lea.vmem [#allocation17], %s808
        %p810 = pneg %p443
        %p811 = pneg %p440
        %p812 = scmp.lt.s32.totalorder %s39, 1
        %s813 = scalar_select %p812, %s39, 1
        %s814 = scalar_lea.vmem %s20, %s813
        %p815 = pneg %p469
        %p816 = pneg %p466
        %p817 = pneg %p490
        %p818 = pneg %p487
        %p819 = pneg %p511
        %p820 = pneg %p508
        %p821 = pneg %p532
        %p822 = pneg %p529
        %p823 = scmp.lt.s32.totalorder %s39, 1
        %s824 = scalar_select %p823, %s39, 1
        %s825 = scalar_lea.vmem %s20, %s824
        %p827 = scmp.eq.s32.totalorder %s39, 0
        // Predicated region
        $region187: #{tpu_custom_call.1} parent=173 // pred_check
          %p828 = pneg %p827
        $region188: #{tpu_custom_call.1} parent=173 // pred_check_branch
          %830 = sbr.rel (%p828) target = $region190
        $region189: #{tpu_custom_call.1} parent=173 // pred_region
          %s831 = sld [smem:[#allocation13]]
          %s832 = scalar_lea.vmem %s2, %s831
          %p834 = scmp.lt.u32.totalorder 1, 8
          %p835 = pneg %p834
          // Predicated region
          $region191: #{tpu_custom_call.1} parent=189 // pred_check
            _
          $region192: #{tpu_custom_call.1} parent=189 // pred_check_branch
            %837 = sbr.rel (%p834) target = $region194
          $region193: #{tpu_custom_call.1} parent=189 // pred_region
            %s853 = sand.u32 1, 7
            %p854 = scmp.eq.s32.totalorder %s853, 0
            %p855 = pneg %p854
            // Predicated region
            $region206: #{tpu_custom_call.1} parent=193 // pred_check
              _
            $region207: #{tpu_custom_call.1} parent=193 // pred_check_branch
              %857 = sbr.rel (%p854) target = $region209
            $region208: #{tpu_custom_call.1} parent=193 // pred_region
              %s858 = sand.u32 1, 7
              %s859 = ssub.s32 1, %s858
              %s860 = scalar_lea.vmem %s832, %s859
              %s861 = ssub.s32 1, %s858
              %s862 = scalar_lea.vmem [#allocation3], %s861
              %s863 = sshll.u32 1, %s858
              %s864 = ssub.s32 %s863, 1
              loop: start=0, step=1, limit=1
              $region210: #{tpu_custom_call.1} parent=208 // loop_pre_header
                _
              $region211: #{tpu_custom_call.1} parent=208 // loop_header
                %s866 = sphi 0, %s870
                %p867 = scmp.ge.s32.totalorder %s866, 1
                %s871 = sphi %s860, %s860
                %s872 = sphi %s862, %s862
              $region212: #{tpu_custom_call.1} parent=208 // loop_header_branch
                %869 = sbr.rel (%p867) target = $region216
              $region213: #{tpu_custom_call.1} parent=208 // loop_body
                %v873 = vld [vmem:[%s871] sm:%s864]
                %874 = vst [vmem:[%s872] sm:%s864] %v873
              $region214: #{tpu_custom_call.1} parent=208 // loop_footer
                %s870 = sadd.s32 1, %s866
              $region215: #{tpu_custom_call.1} parent=208 // loop_footer_branch
                %865 = sbr.rel target = $region211
              $region216: #{tpu_custom_call.1} parent=208 // loop_exit
                _
            $region209: #{tpu_custom_call.1} parent=193 // pred_fallthru
              _
          $region194: #{tpu_custom_call.1} parent=189 // pred_fallthru
            _
          // Predicated region
          $region195: #{tpu_custom_call.1} parent=189 // pred_check
            %p838 = pneg %p834
          $region196: #{tpu_custom_call.1} parent=189 // pred_check_branch
            %840 = sbr.rel (%p838) target = $region198
          $region197: #{tpu_custom_call.1} parent=189 // pred_region
            %s841 = sshll.u32 1, 1
            %s842 = ssub.s32 %s841, 1
            loop: start=0, step=1, limit=1
            $region199: #{tpu_custom_call.1} parent=197 // loop_pre_header
              _
            $region200: #{tpu_custom_call.1} parent=197 // loop_header
              %s844 = sphi 0, %s848
              %p845 = scmp.ge.s32.totalorder %s844, 1
              %s849 = sphi %s832, %s832
              %s850 = sphi [#allocation3], [#allocation3]
            $region201: #{tpu_custom_call.1} parent=197 // loop_header_branch
              %847 = sbr.rel (%p845) target = $region205
            $region202: #{tpu_custom_call.1} parent=197 // loop_body
              %v851 = vld [vmem:[%s849] sm:%s842]
              %852 = vst [vmem:[%s850] sm:%s842] %v851
            $region203: #{tpu_custom_call.1} parent=197 // loop_footer
              %s848 = sadd.s32 1, %s844
            $region204: #{tpu_custom_call.1} parent=197 // loop_footer_branch
              %843 = sbr.rel target = $region200
            $region205: #{tpu_custom_call.1} parent=197 // loop_exit
              _
          $region198: #{tpu_custom_call.1} parent=189 // pred_fallthru
            _
          // Predicated region
          $region217: #{tpu_custom_call.1} parent=189 // pred_check
            _
          $region218: #{tpu_custom_call.1} parent=189 // pred_check_branch
            %877 = sbr.rel (0) target = $region220
          $region219: #{tpu_custom_call.1} parent=189 // pred_region
            %878 = vsyncadd [#allocation11], 16
          $region220: #{tpu_custom_call.1} parent=189 // pred_fallthru
            _
          %s879 = sld [smem:[#allocation13 + $0x1]]
          %s880 = scalar_lea.vmem %s2, %s879
          %s881 = scalar_lea.vmem [#allocation3], 1
          %s882 = scalar_lea.sflag [#allocation11], 1
          %p884 = scmp.lt.u32.totalorder 1, 8
          %p885 = pneg %p884
          // Predicated region
          $region221: #{tpu_custom_call.1} parent=189 // pred_check
            _
          $region222: #{tpu_custom_call.1} parent=189 // pred_check_branch
            %887 = sbr.rel (%p884) target = $region224
          $region223: #{tpu_custom_call.1} parent=189 // pred_region
            %s903 = sand.u32 1, 7
            %p904 = scmp.eq.s32.totalorder %s903, 0
            %p905 = pneg %p904
            // Predicated region
            $region236: #{tpu_custom_call.1} parent=223 // pred_check
              _
            $region237: #{tpu_custom_call.1} parent=223 // pred_check_branch
              %907 = sbr.rel (%p904) target = $region239
            $region238: #{tpu_custom_call.1} parent=223 // pred_region
              %s908 = sand.u32 1, 7
              %s909 = ssub.s32 1, %s908
              %s910 = scalar_lea.vmem %s880, %s909
              %s911 = ssub.s32 1, %s908
              %s912 = scalar_lea.vmem %s881, %s911 [#allocation3]
              %s913 = sshll.u32 1, %s908
              %s914 = ssub.s32 %s913, 1
              loop: start=0, step=1, limit=1
              $region240: #{tpu_custom_call.1} parent=238 // loop_pre_header
                _
              $region241: #{tpu_custom_call.1} parent=238 // loop_header
                %s916 = sphi 0, %s920
                %p917 = scmp.ge.s32.totalorder %s916, 1
                %s921 = sphi %s910, %s910
                %s922 = sphi %s912, %s912
              $region242: #{tpu_custom_call.1} parent=238 // loop_header_branch
                %919 = sbr.rel (%p917) target = $region246
              $region243: #{tpu_custom_call.1} parent=238 // loop_body
                %v923 = vld [vmem:[%s921] sm:%s914]
                %924 = vst [vmem:[%s922] sm:%s914] %v923
              $region244: #{tpu_custom_call.1} parent=238 // loop_footer
                %s920 = sadd.s32 1, %s916
              $region245: #{tpu_custom_call.1} parent=238 // loop_footer_branch
                %915 = sbr.rel target = $region241
              $region246: #{tpu_custom_call.1} parent=238 // loop_exit
                _
            $region239: #{tpu_custom_call.1} parent=223 // pred_fallthru
              _
          $region224: #{tpu_custom_call.1} parent=189 // pred_fallthru
            _
          // Predicated region
          $region225: #{tpu_custom_call.1} parent=189 // pred_check
            %p888 = pneg %p884
          $region226: #{tpu_custom_call.1} parent=189 // pred_check_branch
            %890 = sbr.rel (%p888) target = $region228
          $region227: #{tpu_custom_call.1} parent=189 // pred_region
            %s891 = sshll.u32 1, 1
            %s892 = ssub.s32 %s891, 1
            loop: start=0, step=1, limit=1
            $region229: #{tpu_custom_call.1} parent=227 // loop_pre_header
              _
            $region230: #{tpu_custom_call.1} parent=227 // loop_header
              %s894 = sphi 0, %s898
              %p895 = scmp.ge.s32.totalorder %s894, 1
              %s899 = sphi %s880, %s880
              %s900 = sphi %s881, %s881
            $region231: #{tpu_custom_call.1} parent=227 // loop_header_branch
              %897 = sbr.rel (%p895) target = $region235
            $region232: #{tpu_custom_call.1} parent=227 // loop_body
              %v901 = vld [vmem:[%s899] sm:%s892]
              %902 = vst [vmem:[%s900] sm:%s892] %v901
            $region233: #{tpu_custom_call.1} parent=227 // loop_footer
              %s898 = sadd.s32 1, %s894
            $region234: #{tpu_custom_call.1} parent=227 // loop_footer_branch
              %893 = sbr.rel target = $region230
            $region235: #{tpu_custom_call.1} parent=227 // loop_exit
              _
          $region228: #{tpu_custom_call.1} parent=189 // pred_fallthru
            _
          // Predicated region
          $region247: #{tpu_custom_call.1} parent=189 // pred_check
            _
          $region248: #{tpu_custom_call.1} parent=189 // pred_check_branch
            %927 = sbr.rel (0) target = $region250
          $region249: #{tpu_custom_call.1} parent=189 // pred_region
            %928 = vsyncadd %s882, 16
          $region250: #{tpu_custom_call.1} parent=189 // pred_fallthru
            _
          %s929 = sld [smem:[#allocation13]]
          %s930 = smul.u32 1, 1
          %s931 = sshll.u32 %s930, 4
          %932 = dma.done [#allocation11], %s931
          %s933 = sld [smem:[#allocation13 + $0x1]]
          %s934 = sshll.u32 %s930, 4
          %935 = dma.done %s882, %s934
          %v936 = vld [vmem:[#allocation3] sm:$0x3]
          %v937 = vld [vmem:[%s3] sm:$0x3]
          %v938 = vld [vmem:[%s4] sm:$0x3]
          %v939 = vld [vmem:[%s8] sm:$0xff]
          %v940 = vld [vmem:[%s8 + $0x8] sm:$0xff]
          %v941 = vld [vmem:[%s9] sm:$0xff]
          %v942 = vld [vmem:[%s9 + $0x8] sm:$0xff]
          %v943 = vld [vmem:[%s9 + $0x10] sm:$0xff]
          %v944 = vld [vmem:[%s9 + $0x18] sm:$0xff]
          %vm945 = vcmask 261120
          %v947 = vsel %vm945, %v937, 0
          %949 = vmatprep.subr.mxu0 0.0
          %950 = vmatpush1.msra.mxu0 0.0
          %951 = vmatprep.subr.mxu0 0.0
          %952 = vmatpush1.msra.mxu0 0.0
          %953 = vmatprep.subr.mxu0 0.0
          %954 = vmatpush1.msra.mxu0 0.0
          %955 = vmatprep.subr.mxu0 0.0
          %956 = vmatpush1.msra.mxu0 0.0
          %957 = vmatprep.subr.mxu0 0.0
          %958 = vmatpush1.msra.mxu0 0.0
          %959 = vmatprep.subr.mxu0 0.0
          %960 = vmatpush1.msra.mxu0 0.0
          %961 = vmatprep.subr.mxu0 0.0
          %962 = vmatpush1.msra.mxu0 0.0
          %963 = vmatprep.subr.mxu0 0.0
          %964 = vmatpush1.msra.mxu0 0.0
          %965 = vmatprep.subr.mxu0 0.0
          %966 = vmatpush1.msra.mxu0 0.0
          %967 = vmatprep.subr.mxu0 0.0
          %968 = vmatpush1.msra.mxu0 0.0
          %969 = vmatprep.subr.mxu0 0.0
          %970 = vmatpush1.msra.mxu0 0.0
          %971 = vmatprep.subr.mxu0 0.0
          %972 = vmatpush1.msra.mxu0 0.0
          %973 = vmatprep.subr.mxu0 0.0
          %974 = vmatpush1.msra.mxu0 %v944
          %975 = vmatprep.subr.mxu0 0.0
          %976 = vmatpush1.msra.mxu0 %v943
          %977 = vmatprep.subr.mxu0 0.0
          %978 = vmatpush1.msra.mxu0 %v942
          %979 = vmatprep.subr.mxu0 0.0
          %980 = vmatpush1.msra.mxu0 %v941
          %981 = vmatprep.subr.mxu0 0.0
          %982 = vmatpush2.msra.mxu0 0.0
          %983 = vmatprep.subr.mxu0 0.0
          %984 = vmatpush2.msra.mxu0 0.0
          %985 = vmatprep.subr.mxu0 0.0
          %986 = vmatpush2.msra.mxu0 0.0
          %987 = vmatprep.subr.mxu0 0.0
          %988 = vmatpush2.msra.mxu0 0.0
          %989 = vmatprep.subr.mxu0 0.0
          %990 = vmatpush2.msra.mxu0 0.0
          %991 = vmatprep.subr.mxu0 0.0
          %992 = vmatpush2.msra.mxu0 0.0
          %993 = vmatprep.subr.mxu0 0.0
          %994 = vmatpush2.msra.mxu0 0.0
          %995 = vmatprep.subr.mxu0 0.0
          %996 = vmatpush2.msra.mxu0 0.0
          %997 = vmatprep.subr.mxu0 0.0
          %998 = vmatpush2.msra.mxu0 0.0
          %999 = vmatprep.subr.mxu0 0.0
          %1000 = vmatpush2.msra.mxu0 0.0
          %1001 = vmatprep.subr.mxu0 0.0
          %1002 = vmatpush2.msra.mxu0 0.0
          %1003 = vmatprep.subr.mxu0 0.0
          %1004 = vmatpush2.msra.mxu0 0.0
          %1005 = vmatprep.subr.mxu0 0.0
          %1006 = vmatpush2.msra.mxu0 0.0
          %1007 = vmatprep.subr.mxu0 0.0
          %1008 = vmatpush2.msra.mxu0 0.0
          %1009 = vmatprep.subr.mxu0 0.0
          %1010 = vmatpush2.msra.mxu0 0.0
          %1011 = vmatprep.subr.mxu0 0.0
          %1012 = vmatpush2.msra.mxu0 0.0
          %1013 = vmatprep.mubr.f32.mxu0 0.0
          %1014 = vmatmul.mubr.f32.gmra.mxu0 %v947
          %v1015 = vpop.f32.mrf.mxu0
          %v1016 = vadd.f32 0.0, %v1015
          %v1017 = vpop.f32.mrf.mxu0
          %1018 = vdwg.mxu0
          %vm1019 = vcmask 130048
          %v1021 = vsel %vm1019, %v936, 0
          %1023 = vmatprep.subr.mxu0 0.0
          %1024 = vmatpush1.msra.mxu0 0.0
          %1025 = vmatprep.subr.mxu0 0.0
          %1026 = vmatpush1.msra.mxu0 0.0
          %1027 = vmatprep.subr.mxu0 0.0
          %1028 = vmatpush1.msra.mxu0 0.0
          %1029 = vmatprep.subr.mxu0 0.0
          %1030 = vmatpush1.msra.mxu0 0.0
          %1031 = vmatprep.subr.mxu0 0.0
          %1032 = vmatpush1.msra.mxu0 0.0
          %1033 = vmatprep.subr.mxu0 0.0
          %1034 = vmatpush1.msra.mxu0 0.0
          %1035 = vmatprep.subr.mxu0 0.0
          %1036 = vmatpush1.msra.mxu0 0.0
          %1037 = vmatprep.subr.mxu0 0.0
          %1038 = vmatpush1.msra.mxu0 0.0
          %1039 = vmatprep.subr.mxu0 0.0
          %1040 = vmatpush1.msra.mxu0 0.0
          %1041 = vmatprep.subr.mxu0 0.0
          %1042 = vmatpush1.msra.mxu0 0.0
          %1043 = vmatprep.subr.mxu0 0.0
          %1044 = vmatpush1.msra.mxu0 0.0
          %1045 = vmatprep.subr.mxu0 0.0
          %1046 = vmatpush1.msra.mxu0 0.0
          %1047 = vmatprep.subr.mxu0 0.0
          %1048 = vmatpush1.msra.mxu0 0.0
          %1049 = vmatprep.subr.mxu0 0.0
          %1050 = vmatpush1.msra.mxu0 0.0
          %1051 = vmatprep.subr.mxu0 0.0
          %1052 = vmatpush1.msra.mxu0 %v940
          %1053 = vmatprep.subr.mxu0 0.0
          %1054 = vmatpush1.msra.mxu0 %v939
          %1055 = vmatprep.subr.mxu0 0.0
          %1056 = vmatpush2.msra.mxu0 0.0
          %1057 = vmatprep.subr.mxu0 0.0
          %1058 = vmatpush2.msra.mxu0 0.0
          %1059 = vmatprep.subr.mxu0 0.0
          %1060 = vmatpush2.msra.mxu0 0.0
          %1061 = vmatprep.subr.mxu0 0.0
          %1062 = vmatpush2.msra.mxu0 0.0
          %1063 = vmatprep.subr.mxu0 0.0
          %1064 = vmatpush2.msra.mxu0 0.0
          %1065 = vmatprep.subr.mxu0 0.0
          %1066 = vmatpush2.msra.mxu0 0.0
          %1067 = vmatprep.subr.mxu0 0.0
          %1068 = vmatpush2.msra.mxu0 0.0
          %1069 = vmatprep.subr.mxu0 0.0
          %1070 = vmatpush2.msra.mxu0 0.0
          %1071 = vmatprep.subr.mxu0 0.0
          %1072 = vmatpush2.msra.mxu0 0.0
          %1073 = vmatprep.subr.mxu0 0.0
          %1074 = vmatpush2.msra.mxu0 0.0
          %1075 = vmatprep.subr.mxu0 0.0
          %1076 = vmatpush2.msra.mxu0 0.0
          %1077 = vmatprep.subr.mxu0 0.0
          %1078 = vmatpush2.msra.mxu0 0.0
          %1079 = vmatprep.subr.mxu0 0.0
          %1080 = vmatpush2.msra.mxu0 0.0
          %1081 = vmatprep.subr.mxu0 0.0
          %1082 = vmatpush2.msra.mxu0 0.0
          %1083 = vmatprep.subr.mxu0 0.0
          %1084 = vmatpush2.msra.mxu0 0.0
          %1085 = vmatprep.subr.mxu0 0.0
          %1086 = vmatpush2.msra.mxu0 0.0
          %1087 = vmatprep.mubr.f32.mxu0 0.0
          %1088 = vmatmul.mubr.f32.gmra.mxu0 %v1021
          %v1089 = vpop.f32.mrf.mxu0
          %v1090 = vadd.f32 %v1016, %v1089
          %v1091 = vpop.f32.mrf.mxu0
          %1092 = vdwg.mxu0
          %v1093 = vld [vmem:[%s10] sm:$0x1]
          %v1095 = vlaneseq
          %v1096 = vshrl.u32 %v1095, 7
          %v1097 = vsub.s32 0, %v1096
          %v1098 = vrot.slane %v1093, %v1097
          %v1100 = vadd.f32 %v1090, %v1098
          %v1101 = vxor.u32 %v1100, 2147483648
          %v1102 = vmul.f32 %v1101, 1.442695
          %v1103 = vpow.pop %v1102
          %v1104 = vadd.f32 %v1103, 1.0
          %v1105 = vrcp.pop %v1104
          %v1106 = vmul.f32 1.0, %v1105
          %v1107 = vtanh.pop %v1100
          %1109 = vrot.lane.b32.xlu0 %v938, 32
          %v1110 = vpop.permute.xlu0 %1109
          %v1112 = vmul.f32 %v1106, %v1110
          %1114 = vrot.lane.b32.xlu0 %v1107, 64
          %v1115 = vpop.permute.xlu0 %1114
          %v1117 = vmul.f32 %v1106, %v1115
          %1119 = vrot.lane.b32.xlu0 %v1117, 32
          %v1120 = vpop.permute.xlu0 %1119
          %v1122 = vadd.f32 %v1112, %v1120
          %v1123 = vtanh.pop %v1122
          %1125 = vrot.lane.b32.xlu0 %v1123, 64
          %v1126 = vpop.permute.xlu0 %1125
          %v1128 = vmul.f32 %v1106, %v1126
          %1130 = vrot.lane.b32.xlu0 %v1128, 32
          %v1131 = vpop.permute.xlu0 %1130
          %vm1133 = vcmask 254976
          %1134 = vst.msk [vmem:[#allocation4] sm:$0x3] %vm1133, %v1131
          %1136 = vrot.lane.b32.xlu0 %v1122, 96
          %v1137 = vpop.permute.xlu0 %1136
          %1139 = vst.msk [vmem:[#allocation5] sm:$0x3] %vm1133, %v1137
          %v1140 = vld [vmem:[%s5] sm:$0xff]
          %v1141 = vld [vmem:[%s5 + $0x8] sm:$0xff]
          %v1142 = vld [vmem:[%s12] sm:$0xff]
          %v1143 = vld [vmem:[%s12 + $0x8] sm:$0xff]
          %v1144 = vld [vmem:[%s12 + $0x10] sm:$0xff]
          %v1145 = vld [vmem:[%s12 + $0x18] sm:$0xff]
          %v1147 = vsel %vm945, %v1140, 0
          %v1150 = vsel %vm945, %v1141, 0
          %1152 = vmatprep.subr.mxu0 0.0
          %1153 = vmatpush1.msra.mxu0 0.0
          %1154 = vmatprep.subr.mxu0 0.0
          %1155 = vmatpush1.msra.mxu0 0.0
          %1156 = vmatprep.subr.mxu0 0.0
          %1157 = vmatpush1.msra.mxu0 0.0
          %1158 = vmatprep.subr.mxu0 0.0
          %1159 = vmatpush1.msra.mxu0 0.0
          %1160 = vmatprep.subr.mxu0 0.0
          %1161 = vmatpush1.msra.mxu0 0.0
          %1162 = vmatprep.subr.mxu0 0.0
          %1163 = vmatpush1.msra.mxu0 0.0
          %1164 = vmatprep.subr.mxu0 0.0
          %1165 = vmatpush1.msra.mxu0 0.0
          %1166 = vmatprep.subr.mxu0 0.0
          %1167 = vmatpush1.msra.mxu0 0.0
          %1168 = vmatprep.subr.mxu0 0.0
          %1169 = vmatpush1.msra.mxu0 0.0
          %1170 = vmatprep.subr.mxu0 0.0
          %1171 = vmatpush1.msra.mxu0 0.0
          %1172 = vmatprep.subr.mxu0 0.0
          %1173 = vmatpush1.msra.mxu0 0.0
          %1174 = vmatprep.subr.mxu0 0.0
          %1175 = vmatpush1.msra.mxu0 0.0
          %1176 = vmatprep.subr.mxu0 0.0
          %1177 = vmatpush1.msra.mxu0 %v1145
          %1178 = vmatprep.subr.mxu0 0.0
          %1179 = vmatpush1.msra.mxu0 %v1144
          %1180 = vmatprep.subr.mxu0 0.0
          %1181 = vmatpush1.msra.mxu0 %v1143
          %1182 = vmatprep.subr.mxu0 0.0
          %1183 = vmatpush1.msra.mxu0 %v1142
          %1184 = vmatprep.subr.mxu0 0.0
          %1185 = vmatpush2.msra.mxu0 0.0
          %1186 = vmatprep.subr.mxu0 0.0
          %1187 = vmatpush2.msra.mxu0 0.0
          %1188 = vmatprep.subr.mxu0 0.0
          %1189 = vmatpush2.msra.mxu0 0.0
          %1190 = vmatprep.subr.mxu0 0.0
          %1191 = vmatpush2.msra.mxu0 0.0
          %1192 = vmatprep.subr.mxu0 0.0
          %1193 = vmatpush2.msra.mxu0 0.0
          %1194 = vmatprep.subr.mxu0 0.0
          %1195 = vmatpush2.msra.mxu0 0.0
          %1196 = vmatprep.subr.mxu0 0.0
          %1197 = vmatpush2.msra.mxu0 0.0
          %1198 = vmatprep.subr.mxu0 0.0
          %1199 = vmatpush2.msra.mxu0 0.0
          %1200 = vmatprep.subr.mxu0 0.0
          %1201 = vmatpush2.msra.mxu0 0.0
          %1202 = vmatprep.subr.mxu0 0.0
          %1203 = vmatpush2.msra.mxu0 0.0
          %1204 = vmatprep.subr.mxu0 0.0
          %1205 = vmatpush2.msra.mxu0 0.0
          %1206 = vmatprep.subr.mxu0 0.0
          %1207 = vmatpush2.msra.mxu0 0.0
          %1208 = vmatprep.subr.mxu0 0.0
          %1209 = vmatpush2.msra.mxu0 0.0
          %1210 = vmatprep.subr.mxu0 0.0
          %1211 = vmatpush2.msra.mxu0 0.0
          %1212 = vmatprep.subr.mxu0 0.0
          %1213 = vmatpush2.msra.mxu0 0.0
          %1214 = vmatprep.subr.mxu0 0.0
          %1215 = vmatpush2.msra.mxu0 0.0
          %1216 = vmatprep.mubr.f32.mxu0 0.0
          %1217 = vmatmul.mubr.f32.gmra.mxu0 %v1147
          %v1218 = vpop.f32.mrf.mxu0
          %v1219 = vadd.f32 0.0, %v1218
          %v1220 = vpop.f32.mrf.mxu0
          %1221 = vmatprep.mubr.f32.mxu0 0.0
          %1222 = vmatmul.mubr.f32.gmra.mxu0 %v1150
          %v1223 = vpop.f32.mrf.mxu0
          %v1224 = vadd.f32 0.0, %v1223
          %v1225 = vpop.f32.mrf.mxu0
          %1226 = vdwg.mxu0
          %v1227 = vld [vmem:[%s11] sm:$0xff]
          %v1228 = vld [vmem:[%s11 + $0x8] sm:$0xff]
          %v1229 = vld [vmem:[%s11 + $0x10] sm:$0xff]
          %v1230 = vld [vmem:[%s11 + $0x18] sm:$0xff]
          %v1231 = vsel %vm945, %v1131, 0
          %1233 = vmatprep.subr.mxu0 0.0
          %1234 = vmatpush1.msra.mxu0 0.0
          %1235 = vmatprep.subr.mxu0 0.0
          %1236 = vmatpush1.msra.mxu0 0.0
          %1237 = vmatprep.subr.mxu0 0.0
          %1238 = vmatpush1.msra.mxu0 0.0
          %1239 = vmatprep.subr.mxu0 0.0
          %1240 = vmatpush1.msra.mxu0 0.0
          %1241 = vmatprep.subr.mxu0 0.0
          %1242 = vmatpush1.msra.mxu0 0.0
          %1243 = vmatprep.subr.mxu0 0.0
          %1244 = vmatpush1.msra.mxu0 0.0
          %1245 = vmatprep.subr.mxu0 0.0
          %1246 = vmatpush1.msra.mxu0 0.0
          %1247 = vmatprep.subr.mxu0 0.0
          %1248 = vmatpush1.msra.mxu0 0.0
          %1249 = vmatprep.subr.mxu0 0.0
          %1250 = vmatpush1.msra.mxu0 0.0
          %1251 = vmatprep.subr.mxu0 0.0
          %1252 = vmatpush1.msra.mxu0 0.0
          %1253 = vmatprep.subr.mxu0 0.0
          %1254 = vmatpush1.msra.mxu0 0.0
          %1255 = vmatprep.subr.mxu0 0.0
          %1256 = vmatpush1.msra.mxu0 0.0
          %1257 = vmatprep.subr.mxu0 0.0
          %1258 = vmatpush1.msra.mxu0 %v1230
          %1259 = vmatprep.subr.mxu0 0.0
          %1260 = vmatpush1.msra.mxu0 %v1229
          %1261 = vmatprep.subr.mxu0 0.0
          %1262 = vmatpush1.msra.mxu0 %v1228
          %1263 = vmatprep.subr.mxu0 0.0
          %1264 = vmatpush1.msra.mxu0 %v1227
          %1265 = vmatprep.subr.mxu0 0.0
          %1266 = vmatpush2.msra.mxu0 0.0
          %1267 = vmatprep.subr.mxu0 0.0
          %1268 = vmatpush2.msra.mxu0 0.0
          %1269 = vmatprep.subr.mxu0 0.0
          %1270 = vmatpush2.msra.mxu0 0.0
          %1271 = vmatprep.subr.mxu0 0.0
          %1272 = vmatpush2.msra.mxu0 0.0
          %1273 = vmatprep.subr.mxu0 0.0
          %1274 = vmatpush2.msra.mxu0 0.0
          %1275 = vmatprep.subr.mxu0 0.0
          %1276 = vmatpush2.msra.mxu0 0.0
          %1277 = vmatprep.subr.mxu0 0.0
          %1278 = vmatpush2.msra.mxu0 0.0
          %1279 = vmatprep.subr.mxu0 0.0
          %1280 = vmatpush2.msra.mxu0 0.0
          %1281 = vmatprep.subr.mxu0 0.0
          %1282 = vmatpush2.msra.mxu0 0.0
          %1283 = vmatprep.subr.mxu0 0.0
          %1284 = vmatpush2.msra.mxu0 0.0
          %1285 = vmatprep.subr.mxu0 0.0
          %1286 = vmatpush2.msra.mxu0 0.0
          %1287 = vmatprep.subr.mxu0 0.0
          %1288 = vmatpush2.msra.mxu0 0.0
          %1289 = vmatprep.subr.mxu0 0.0
          %1290 = vmatpush2.msra.mxu0 0.0
          %1291 = vmatprep.subr.mxu0 0.0
          %1292 = vmatpush2.msra.mxu0 0.0
          %1293 = vmatprep.subr.mxu0 0.0
          %1294 = vmatpush2.msra.mxu0 0.0
          %1295 = vmatprep.subr.mxu0 0.0
          %1296 = vmatpush2.msra.mxu0 0.0
          %1297 = vmatprep.mubr.f32.mxu0 0.0
          %1298 = vmatmul.mubr.f32.gmra.mxu0 %v1231
          %v1299 = vpop.f32.mrf.mxu0
          %v1300 = vadd.f32 0.0, %v1299
          %v1301 = vpop.f32.mrf.mxu0
          %1302 = vdwg.mxu0
          %v1305 = vunpack.c.l.s4 1966171168
          %v1306 = vunpack.c.0.s8 %v1305
          %v1307 = vlaneseq
          %v1308 = vshrl.u32 %v1307, 7
          %v1309 = vsub.s32 %v1306, %v1308
          %v1310 = vrot.slane %v1300, %v1309
          %v1311 = vcombine.high %v1310, %v1310
          %v1313 = vunpack.c.l.s4 1966171168
          %v1314 = vunpack.c.0.s8 %v1313
          %v1315 = vlaneseq
          %v1316 = vshrl.u32 %v1315, 7
          %v1317 = vsub.s32 %v1314, %v1316
          %v1318 = vrot.slane %v1310, %v1317
          %v1320 = vunpack.c.l.s4 1966171168
          %v1321 = vunpack.c.0.s8 %v1320
          %v1322 = vlaneseq
          %v1323 = vshrl.u32 %v1322, 7
          %v1324 = vsub.s32 %v1321, %v1323
          %v1325 = vrot.slane %v1311, %v1324
          %v1326 = vlaneseq
          %v1327 = vshrl.u32 %v1326, 7
          %v1328 = vsub.s32 0, %v1327
          %v1329 = vrot.slane %v1318, %v1328
          %v1330 = vlaneseq
          %v1331 = vshrl.u32 %v1330, 7
          %v1332 = vsub.s32 0, %v1331
          %v1333 = vrot.slane %v1325, %v1332
          %v1336 = vadd.f32 %v1329, %v1219
          %v1337 = vadd.f32 %v1333, %v1224
          %v1338 = vld [vmem:[%s13] sm:$0x1]
          %v1340 = vlaneseq
          %v1341 = vshrl.u32 %v1340, 7
          %v1342 = vsub.s32 0, %v1341
          %v1343 = vrot.slane %v1338, %v1342
          %v1345 = vadd.f32 %v1336, %v1343
          %v1346 = vadd.f32 %v1337, %v1343
          %v1347 = vtanh.pop %v1345
          %v1348 = vtanh.pop %v1346
          %v1349 = vld [vmem:[%s14] sm:$0x1]
          %v1351 = vlaneseq
          %v1352 = vshrl.u32 %v1351, 7
          %v1353 = vsub.s32 0, %v1352
          %v1354 = vrot.slane %v1349, %v1353
          %v1356 = vmul.f32 %v1347, %v1354
          %v1357 = vmul.f32 %v1348, %v1354
          %v1358 = vsel %vm945, %v1356, 0.0
          %1359 = vadd.xlane.f32.xlu0 %v1358
          %v1360 = vpop.xlane.xlu0 %1359
          %v1361 = vsel %vm945, %v1357, 0.0
          %1362 = vadd.xlane.f32.xlu0 %v1361
          %v1363 = vpop.xlane.xlu0 %1362
          %v1366 = vlaneseq
          %v1367 = vand.u32 %v1366, 127
          %v1368 = vlaneseq
          %v1369 = vshrl.u32 %v1368, 7
          %v1370 = vsub.s32 %v1367, %v1369
          %v1371 = vrot.slane %v1360, %v1370
          %v1372 = vlaneseq
          %v1373 = vshrl.u32 %v1372, 7
          %v1374 = vsub.s32 %v1367, %v1373
          %v1375 = vrot.slane %v1363, %v1374
          %vm1376 = vcmask 1041409
          %v1377 = vsel %vm1376, %v1375, %v1371
          %vm1379 = vcmask 58368
          %v1380 = vsel %vm1379, %v1377, -inf
          %1381 = vmax.xlane.f32.xlu0 %v1380
          %v1382 = vpop.xlane.xlu0 %1381
          %v1384 = vlaneseq
          %v1385 = vshrl.u32 %v1384, 7
          %v1386 = vsub.s32 0, %v1385
          %v1387 = vrot.slane %v1382, %v1386
          %v1388 = vlaneseq
          %v1389 = vshrl.u32 %v1388, 7
          %v1390 = vsub.s32 1, %v1389
          %v1391 = vrot.slane %v1382, %v1390
          %v1394 = vsub.f32 %v1360, %v1387
          %v1395 = vsub.f32 %v1363, %v1391
          %v1396 = vmul.f32 %v1394, 1.442695
          %v1397 = vpow.pop %v1396
          %v1398 = vmul.f32 %v1395, 1.442695
          %v1399 = vpow.pop %v1398
          %1402 = vset.pattern.permute.xlu0 0
          %1403 = vperm.xlu0 %1402, %v1397
          %v1404 = vpop.permute.xlu0 %1403
          %1405 = vset.pattern.permute.xlu0 0
          %1406 = vperm.xlu0 %1405, %v1399
          %v1407 = vpop.permute.xlu0 %1406
          %v1408 = vlaneseq
          %v1409 = vshrl.u32 %v1408, 7
          %v1410 = vsub.s32 %v1367, %v1409
          %v1411 = vrot.slane %v1404, %v1410
          %v1412 = vlaneseq
          %v1413 = vshrl.u32 %v1412, 7
          %v1414 = vsub.s32 %v1367, %v1413
          %v1415 = vrot.slane %v1407, %v1414
          %v1416 = vsel %vm1376, %v1415, %v1411
          %v1418 = vsel %vm1379, %v1416, 0.0
          %1419 = vadd.xlane.f32.xlu0 %v1418
          %v1420 = vpop.xlane.xlu0 %1419
          %v1422 = vlaneseq
          %v1423 = vshrl.u32 %v1422, 7
          %v1424 = vsub.s32 0, %v1423
          %v1425 = vrot.slane %v1420, %v1424
          %v1426 = vlaneseq
          %v1427 = vshrl.u32 %v1426, 7
          %v1428 = vsub.s32 1, %v1427
          %v1429 = vrot.slane %v1420, %v1428
          %v1432 = vrcp.pop %v1425
          %v1433 = vmul.f32 %v1397, %v1432
          %v1434 = vrcp.pop %v1429
          %v1435 = vmul.f32 %v1399, %v1434
          %1437 = vset.pattern.permute.xlu0 0
          %1438 = vperm.xlu0 %1437, %v1433
          %v1439 = vpop.permute.xlu0 %1438
          %v1440 = vlaneseq
          %v1441 = vshrl.u32 %v1440, 7
          %v1442 = vsub.s32 %v1367, %v1441
          %v1443 = vrot.slane %v1439, %v1442
          %vm1444 = vcmask 64512
          %v1445 = vsel %vm1444, %v1443, 0
          %1447 = vmatprep.subr.mxu0 0.0
          %1448 = vmatpush1.msra.mxu0 0.0
          %1449 = vmatprep.subr.mxu0 0.0
          %1450 = vmatpush1.msra.mxu0 0.0
          %1451 = vmatprep.subr.mxu0 0.0
          %1452 = vmatpush1.msra.mxu0 0.0
          %1453 = vmatprep.subr.mxu0 0.0
          %1454 = vmatpush1.msra.mxu0 0.0
          %1455 = vmatprep.subr.mxu0 0.0
          %1456 = vmatpush1.msra.mxu0 0.0
          %1457 = vmatprep.subr.mxu0 0.0
          %1458 = vmatpush1.msra.mxu0 0.0
          %1459 = vmatprep.subr.mxu0 0.0
          %1460 = vmatpush1.msra.mxu0 0.0
          %1461 = vmatprep.subr.mxu0 0.0
          %1462 = vmatpush1.msra.mxu0 0.0
          %1463 = vmatprep.subr.mxu0 0.0
          %1464 = vmatpush1.msra.mxu0 0.0
          %1465 = vmatprep.subr.mxu0 0.0
          %1466 = vmatpush1.msra.mxu0 0.0
          %1467 = vmatprep.subr.mxu0 0.0
          %1468 = vmatpush1.msra.mxu0 0.0
          %1469 = vmatprep.subr.mxu0 0.0
          %1470 = vmatpush1.msra.mxu0 0.0
          %1471 = vmatprep.subr.mxu0 0.0
          %1472 = vmatpush1.msra.mxu0 0.0
          %1473 = vmatprep.subr.mxu0 0.0
          %1474 = vmatpush1.msra.mxu0 0.0
          %1475 = vmatprep.subr.mxu0 0.0
          %1476 = vmatpush1.msra.mxu0 0.0
          %1477 = vmatprep.subr.mxu0 0.0
          %1478 = vmatpush1.msra.mxu0 %v1140
          %1479 = vmatprep.subr.mxu0 0.0
          %1480 = vmatpush2.msra.mxu0 0.0
          %1481 = vmatprep.subr.mxu0 0.0
          %1482 = vmatpush2.msra.mxu0 0.0
          %1483 = vmatprep.subr.mxu0 0.0
          %1484 = vmatpush2.msra.mxu0 0.0
          %1485 = vmatprep.subr.mxu0 0.0
          %1486 = vmatpush2.msra.mxu0 0.0
          %1487 = vmatprep.subr.mxu0 0.0
          %1488 = vmatpush2.msra.mxu0 0.0
          %1489 = vmatprep.subr.mxu0 0.0
          %1490 = vmatpush2.msra.mxu0 0.0
          %1491 = vmatprep.subr.mxu0 0.0
          %1492 = vmatpush2.msra.mxu0 0.0
          %1493 = vmatprep.subr.mxu0 0.0
          %1494 = vmatpush2.msra.mxu0 0.0
          %1495 = vmatprep.subr.mxu0 0.0
          %1496 = vmatpush2.msra.mxu0 0.0
          %1497 = vmatprep.subr.mxu0 0.0
          %1498 = vmatpush2.msra.mxu0 0.0
          %1499 = vmatprep.subr.mxu0 0.0
          %1500 = vmatpush2.msra.mxu0 0.0
          %1501 = vmatprep.subr.mxu0 0.0
          %1502 = vmatpush2.msra.mxu0 0.0
          %1503 = vmatprep.subr.mxu0 0.0
          %1504 = vmatpush2.msra.mxu0 0.0
          %1505 = vmatprep.subr.mxu0 0.0
          %1506 = vmatpush2.msra.mxu0 0.0
          %1507 = vmatprep.subr.mxu0 0.0
          %1508 = vmatpush2.msra.mxu0 0.0
          %1509 = vmatprep.subr.mxu0 0.0
          %1510 = vmatpush2.msra.mxu0 0.0
          %1511 = vmatprep.mubr.f32.mxu0 0.0
          %1512 = vmatmul.mubr.f32.gmra.mxu0 %v1445
          %v1513 = vpop.f32.mrf.mxu0
          %v1514 = vadd.f32 0.0, %v1513
          %v1515 = vpop.f32.mrf.mxu0
          %1516 = vdwg.mxu0
          %1518 = vset.pattern.permute.xlu0 0
          %1519 = vperm.xlu0 %1518, %v1435
          %v1520 = vpop.permute.xlu0 %1519
          %v1521 = vlaneseq
          %v1522 = vshrl.u32 %v1521, 7
          %v1523 = vsub.s32 %v1367, %v1522
          %v1524 = vrot.slane %v1520, %v1523
          %v1525 = vsel %vm1444, %v1524, 0
          %1527 = vmatprep.subr.mxu0 0.0
          %1528 = vmatpush1.msra.mxu0 0.0
          %1529 = vmatprep.subr.mxu0 0.0
          %1530 = vmatpush1.msra.mxu0 0.0
          %1531 = vmatprep.subr.mxu0 0.0
          %1532 = vmatpush1.msra.mxu0 0.0
          %1533 = vmatprep.subr.mxu0 0.0
          %1534 = vmatpush1.msra.mxu0 0.0
          %1535 = vmatprep.subr.mxu0 0.0
          %1536 = vmatpush1.msra.mxu0 0.0
          %1537 = vmatprep.subr.mxu0 0.0
          %1538 = vmatpush1.msra.mxu0 0.0
          %1539 = vmatprep.subr.mxu0 0.0
          %1540 = vmatpush1.msra.mxu0 0.0
          %1541 = vmatprep.subr.mxu0 0.0
          %1542 = vmatpush1.msra.mxu0 0.0
          %1543 = vmatprep.subr.mxu0 0.0
          %1544 = vmatpush1.msra.mxu0 0.0
          %1545 = vmatprep.subr.mxu0 0.0
          %1546 = vmatpush1.msra.mxu0 0.0
          %1547 = vmatprep.subr.mxu0 0.0
          %1548 = vmatpush1.msra.mxu0 0.0
          %1549 = vmatprep.subr.mxu0 0.0
          %1550 = vmatpush1.msra.mxu0 0.0
          %1551 = vmatprep.subr.mxu0 0.0
          %1552 = vmatpush1.msra.mxu0 0.0
          %1553 = vmatprep.subr.mxu0 0.0
          %1554 = vmatpush1.msra.mxu0 0.0
          %1555 = vmatprep.subr.mxu0 0.0
          %1556 = vmatpush1.msra.mxu0 0.0
          %1557 = vmatprep.subr.mxu0 0.0
          %1558 = vmatpush1.msra.mxu0 %v1141
          %1559 = vmatprep.subr.mxu0 0.0
          %1560 = vmatpush2.msra.mxu0 0.0
          %1561 = vmatprep.subr.mxu0 0.0
          %1562 = vmatpush2.msra.mxu0 0.0
          %1563 = vmatprep.subr.mxu0 0.0
          %1564 = vmatpush2.msra.mxu0 0.0
          %1565 = vmatprep.subr.mxu0 0.0
          %1566 = vmatpush2.msra.mxu0 0.0
          %1567 = vmatprep.subr.mxu0 0.0
          %1568 = vmatpush2.msra.mxu0 0.0
          %1569 = vmatprep.subr.mxu0 0.0
          %1570 = vmatpush2.msra.mxu0 0.0
          %1571 = vmatprep.subr.mxu0 0.0
          %1572 = vmatpush2.msra.mxu0 0.0
          %1573 = vmatprep.subr.mxu0 0.0
          %1574 = vmatpush2.msra.mxu0 0.0
          %1575 = vmatprep.subr.mxu0 0.0
          %1576 = vmatpush2.msra.mxu0 0.0
          %1577 = vmatprep.subr.mxu0 0.0
          %1578 = vmatpush2.msra.mxu0 0.0
          %1579 = vmatprep.subr.mxu0 0.0
          %1580 = vmatpush2.msra.mxu0 0.0
          %1581 = vmatprep.subr.mxu0 0.0
          %1582 = vmatpush2.msra.mxu0 0.0
          %1583 = vmatprep.subr.mxu0 0.0
          %1584 = vmatpush2.msra.mxu0 0.0
          %1585 = vmatprep.subr.mxu0 0.0
          %1586 = vmatpush2.msra.mxu0 0.0
          %1587 = vmatprep.subr.mxu0 0.0
          %1588 = vmatpush2.msra.mxu0 0.0
          %1589 = vmatprep.subr.mxu0 0.0
          %1590 = vmatpush2.msra.mxu0 0.0
          %1591 = vmatprep.mubr.f32.mxu0 0.0
          %1592 = vmatmul.mubr.f32.gmra.mxu0 %v1525
          %v1593 = vpop.f32.mrf.mxu0
          %v1594 = vadd.f32 0.0, %v1593
          %v1595 = vpop.f32.mrf.mxu0
          %1596 = vdwg.mxu0
          %v1599 = vrot.slane %v1594, 7
          %v1600 = vsel %vm1376, %v1599, %v1514
          %1602 = vst.msk [vmem:[#allocation6] sm:$0x3] %vm1133, %v1600
          %v1603 = vld [vmem:[%s15] sm:$0x1]
          %v1605 = vlaneseq
          %v1606 = vshrl.u32 %v1605, 7
          %v1607 = vsub.s32 0, %v1606
          %v1608 = vrot.slane %v1603, %v1607
          %v1610 = vmul.f32 %v1514, %v1608
          %v1611 = vmul.f32 %v1594, %v1608
          %v1614 = vrot.slane %v1611, 7
          %v1615 = vsel %vm1376, %v1614, %v1610
          %v1617 = vsel %vm1133, %v1615, 0.0
          %1618 = vadd.xlane.f32.xlu0 %v1617
          %v1619 = vpop.xlane.xlu0 %1618
          %v1620 = vld [vmem:[%s16] sm:$0x1]
          %v1622 = vlaneseq
          %v1623 = vshrl.u32 %v1622, 7
          %v1624 = vsub.s32 0, %v1623
          %v1625 = vrot.slane %v1620, %v1624
          %1626 = vrot.lane.b32.xlu0 %v1625, 96
          %v1627 = vpop.permute.xlu0 %1626
          %v1629 = vmul.f32 %v1128, %v1627
          %1631 = vrot.lane.b32.xlu0 %v1629, 32
          %v1632 = vpop.permute.xlu0 %1631
          %v1634 = vsel %vm1133, %v1632, 0.0
          %1635 = vadd.xlane.f32.xlu0 %v1634
          %v1636 = vpop.xlane.xlu0 %1635
          %v1637 = vadd.f32 %v1619, %v1636
          %v1638 = vld [vmem:[%s17] sm:$0x1]
          %v1640 = vlaneseq
          %v1641 = vshrl.u32 %v1640, 7
          %v1642 = vsub.s32 0, %v1641
          %v1643 = vrot.slane %v1638, %v1642
          %v1645 = vmul.f32 %v936, %v1643
          %vm1646 = vcmask 123904
          %v1647 = vsel %vm1646, %v1645, 0.0
          %1648 = vadd.xlane.f32.xlu0 %v1647
          %v1649 = vpop.xlane.xlu0 %1648
          %v1650 = vadd.f32 %v1637, %v1649
          %s1651 = sld [smem:[#allocation12]]
          %v1652 = vstv %s1651
          %v1653 = vadd.f32 %v1650, %v1652
          %v1654 = vxor.u32 %v1653, 2147483648
          %v1655 = vmul.f32 %v1654, 1.442695
          %v1656 = vpow.pop %v1655
          %v1657 = vadd.f32 %v1656, 1.0
          %v1658 = vrcp.pop %v1657
          %v1659 = vmul.f32 1.0, %v1658
          %v1660 = vmax.f32 %v1659, 1e-08
          %vm1661 = vcmask 1024
          %1662 = vst.msk [vmem:[#allocation7] sm:$0x3] %vm1661, %v1660
          %v1663 = vsub.f32 1.0, %v1660
          %v1664 = vsel %vm1376, %v1524, %v1443
          %v1666 = vmul.f32 %v1663, %v1664
          %1667 = vst.msk [vmem:[#allocation8] sm:$0x3] %vm1379, %v1666
          %1668 = vst.msk [vmem:[#allocation9] sm:$0x3] %vm1661, -1e+30
          %1669 = vst.msk [vmem:[#allocation10] sm:$0x3] %vm1661, 0.0
        $region190: #{tpu_custom_call.1} parent=173 // pred_fallthru
          _
        %v1670 = vld [vmem:[#allocation4] sm:$0x3]
        %v1671 = vld [vmem:[#allocation6] sm:$0x3]
        %v1672 = vpack.c.bf16 %v1670, %v1670
        %v1673 = vld [vmem:[%s754] sm:$0xf]
        %v1674 = vld [vmem:[%s754 + $0x4] sm:$0xf]
        %v1675 = vld [vmem:[%s754 + $0x8] sm:$0xf]
        %v1676 = vld [vmem:[%s754 + $0xc] sm:$0xf]
        %v1677 = vpack.c.bf16 %v1671, %v1671
        %v1678 = vld [vmem:[%s761] sm:$0xf]
        %v1679 = vld [vmem:[%s761 + $0x4] sm:$0xf]
        %v1680 = vld [vmem:[%s761 + $0x8] sm:$0xf]
        %v1681 = vld [vmem:[%s761 + $0xc] sm:$0xf]
        %v1686 = vunpack.c.l.b16 %v1678
        %v1687 = vunpack.c.l.b16 %v1679
        %v1688 = vunpack.c.l.b16 %v1680
        %v1689 = vunpack.c.l.b16 %v1681
        %v1690 = vpack.c.b16 %v1687, %v1686
        %v1691 = vpack.c.b16 %v1689, %v1688
        %vm1694 = vcmask 261120
        %v1696 = vsel %vm1694, %v1677, 0
        %1698 = vmatprep.subr.bf16.mxu0 0
        %1699 = vmatpush1.bf16.msra.mxu0 0
        %1700 = vmatprep.subr.bf16.mxu0 0
        %1701 = vmatpush1.bf16.msra.mxu0 0
        %1702 = vmatprep.subr.bf16.mxu0 0
        %1703 = vmatpush1.bf16.msra.mxu0 0
        %1704 = vmatprep.subr.bf16.mxu0 0
        %1705 = vmatpush1.bf16.msra.mxu0 0
        %1706 = vmatprep.subr.bf16.mxu0 0
        %1707 = vmatpush1.bf16.msra.mxu0 0
        %1708 = vmatprep.subr.bf16.mxu0 0
        %1709 = vmatpush1.bf16.msra.mxu0 0
        %1710 = vmatprep.subr.bf16.mxu0 0
        %1711 = vmatpush1.bf16.msra.mxu0 %v1691
        %1712 = vmatprep.subr.bf16.mxu0 0
        %1713 = vmatpush1.bf16.msra.mxu0 %v1690
        %1714 = vmatprep.subr.bf16.mxu0 0
        %1715 = vmatpush2.bf16.msra.mxu0 0
        %1716 = vmatprep.subr.bf16.mxu0 0
        %1717 = vmatpush2.bf16.msra.mxu0 0
        %1718 = vmatprep.subr.bf16.mxu0 0
        %1719 = vmatpush2.bf16.msra.mxu0 0
        %1720 = vmatprep.subr.bf16.mxu0 0
        %1721 = vmatpush2.bf16.msra.mxu0 0
        %1722 = vmatprep.subr.bf16.mxu0 0
        %1723 = vmatpush2.bf16.msra.mxu0 0
        %1724 = vmatprep.subr.bf16.mxu0 0
        %1725 = vmatpush2.bf16.msra.mxu0 0
        %1726 = vmatprep.subr.bf16.mxu0 0
        %1727 = vmatpush2.bf16.msra.mxu0 0
        %1728 = vmatprep.subr.bf16.mxu0 0
        %1729 = vmatpush2.bf16.msra.mxu0 0
        %1730 = vmatprep.mubr.bf16.mxu0 0
        %1731 = vmatmul.mubr.bf16.gmra.mxu0 %v1696
        %v1732 = vpop.f32.mrf.mxu0
        %v1733 = vadd.f32 0.0, %v1732
        %v1734 = vpop.f32.mrf.mxu0
        %v1735 = vpop.f32.mrf.mxu0
        %v1736 = vpop.f32.mrf.mxu0
        %1737 = vdwg.mxu0
        %v1742 = vunpack.c.l.b16 %v1673
        %v1743 = vunpack.c.l.b16 %v1674
        %v1744 = vunpack.c.l.b16 %v1675
        %v1745 = vunpack.c.l.b16 %v1676
        %v1746 = vpack.c.b16 %v1743, %v1742
        %v1747 = vpack.c.b16 %v1745, %v1744
        %v1751 = vsel %vm1694, %v1672, 0
        %1753 = vmatprep.subr.bf16.mxu0 0
        %1754 = vmatpush1.bf16.msra.mxu0 0
        %1755 = vmatprep.subr.bf16.mxu0 0
        %1756 = vmatpush1.bf16.msra.mxu0 0
        %1757 = vmatprep.subr.bf16.mxu0 0
        %1758 = vmatpush1.bf16.msra.mxu0 0
        %1759 = vmatprep.subr.bf16.mxu0 0
        %1760 = vmatpush1.bf16.msra.mxu0 0
        %1761 = vmatprep.subr.bf16.mxu0 0
        %1762 = vmatpush1.bf16.msra.mxu0 0
        %1763 = vmatprep.subr.bf16.mxu0 0
        %1764 = vmatpush1.bf16.msra.mxu0 0
        %1765 = vmatprep.subr.bf16.mxu0 0
        %1766 = vmatpush1.bf16.msra.mxu0 %v1747
        %1767 = vmatprep.subr.bf16.mxu0 0
        %1768 = vmatpush1.bf16.msra.mxu0 %v1746
        %1769 = vmatprep.subr.bf16.mxu0 0
        %1770 = vmatpush2.bf16.msra.mxu0 0
        %1771 = vmatprep.subr.bf16.mxu0 0
        %1772 = vmatpush2.bf16.msra.mxu0 0
        %1773 = vmatprep.subr.bf16.mxu0 0
        %1774 = vmatpush2.bf16.msra.mxu0 0
        %1775 = vmatprep.subr.bf16.mxu0 0
        %1776 = vmatpush2.bf16.msra.mxu0 0
        %1777 = vmatprep.subr.bf16.mxu0 0
        %1778 = vmatpush2.bf16.msra.mxu0 0
        %1779 = vmatprep.subr.bf16.mxu0 0
        %1780 = vmatpush2.bf16.msra.mxu0 0
        %1781 = vmatprep.subr.bf16.mxu0 0
        %1782 = vmatpush2.bf16.msra.mxu0 0
        %1783 = vmatprep.subr.bf16.mxu0 0
        %1784 = vmatpush2.bf16.msra.mxu0 0
        %1785 = vmatprep.mubr.bf16.mxu0 0
        %1786 = vmatmul.mubr.bf16.gmra.mxu0 %v1751
        %v1787 = vpop.f32.mrf.mxu0
        %v1788 = vadd.f32 %v1733, %v1787
        %v1789 = vpop.f32.mrf.mxu0
        %v1790 = vpop.f32.mrf.mxu0
        %v1791 = vpop.f32.mrf.mxu0
        %1792 = vdwg.mxu0
        %v1793 = vld [vmem:[%s825] sm:$0x1]
        %v1795 = vlaneseq
        %v1796 = vshrl.u32 %v1795, 7
        %v1797 = vsub.s32 0, %v1796
        %v1798 = vrot.slane %v1793, %v1797
        %v1800 = vadd.f32 %v1788, %v1798
        %s1801 = smul.u32 %s39, 2
        %s1802 = scalar_lea.vmem [#allocation2], %s1801
        %1803 = vst [vmem:[%s1802] sm:$0x3] %v1800
        %vm1804 = vcmask 1041408
        %v1805 = vsel %vm1804, %v1800, -inf
        %1806 = vmax.xlane.f32.xlu0 %v1805
        %v1807 = vpop.xlane.xlu0 %1806
        %v1808 = vld [vmem:[#allocation9] sm:$0x3]
        %v1809 = vmax.f32 %v1808, %v1807
        %v1810 = vld [vmem:[#allocation10] sm:$0x3]
        %v1811 = vsub.f32 %v1808, %v1809
        %v1812 = vmul.f32 %v1811, 1.442695
        %v1813 = vpow.pop %v1812
        %v1814 = vmul.f32 %v1810, %v1813
        %1816 = vset.pattern.permute.xlu0 0
        %1817 = vperm.xlu0 %1816, %v1809
        %v1818 = vpop.permute.xlu0 %1817
        %v1820 = vsub.f32 %v1800, %v1818
        %v1821 = vmul.f32 %v1820, 1.442695
        %v1822 = vpow.pop %v1821
        %v1823 = vsel %vm1804, %v1822, 0.0
        %1824 = vadd.xlane.f32.xlu0 %v1823
        %v1825 = vpop.xlane.xlu0 %1824
        %v1826 = vadd.f32 %v1814, %v1825
        %vm1827 = vcmask 1024
        %1828 = vst.msk [vmem:[#allocation10] sm:$0x3] %vm1827, %v1826
        %1829 = vst.msk [vmem:[#allocation9] sm:$0x3] %vm1827, %v1809
        %p1830 = scmp.eq.s32.totalorder %s39, 1
        // Predicated region
        $region251: #{tpu_custom_call.1} parent=173 // pred_check
          %p1831 = pneg %p1830
        $region252: #{tpu_custom_call.1} parent=173 // pred_check_branch
          %1833 = sbr.rel (%p1831) target = $region254
        $region253: #{tpu_custom_call.1} parent=173 // pred_region
          %v1834 = vld [vmem:[#allocation2] sm:$0x3]
          %v1835 = vld [vmem:[#allocation2 + $0x2] sm:$0x3]
          %v1836 = vld [vmem:[#allocation9] sm:$0x3]
          %v1837 = vld [vmem:[#allocation7] sm:$0x3]
          %v1838 = vld [vmem:[#allocation10] sm:$0x3]
          %v1839 = vrcp.pop %v1838
          %v1840 = vmul.f32 %v1837, %v1839
          %1842 = vset.pattern.permute.xlu0 0
          %1843 = vperm.xlu0 %1842, %v1836
          %v1844 = vpop.permute.xlu0 %1843
          %v1846 = vsub.f32 %v1834, %v1844
          %v1847 = vsub.f32 %v1835, %v1844
          %v1848 = vmul.f32 %v1846, 1.442695
          %v1849 = vpow.pop %v1848
          %v1850 = vmul.f32 %v1847, 1.442695
          %v1851 = vpow.pop %v1850
          %1853 = vset.pattern.permute.xlu0 0
          %1854 = vperm.xlu0 %1853, %v1840
          %v1855 = vpop.permute.xlu0 %1854
          %v1857 = vmul.f32 %v1849, %v1855
          %v1858 = vmul.f32 %v1851, %v1855
          %v1859 = vlaneseq
          %v1860 = vand.u32 %v1859, 127
          %v1861 = vadd.s32 %v1860, 128
          %vm1862 = vcmp.eq.s32.totalorder %v1860, 200
          %vm1863 = vcmp.eq.s32.totalorder %v1861, 200
          %v1864 = vld [vmem:[%s7] sm:$0x3]
          %1866 = vset.pattern.permute.xlu0 0
          %1867 = vperm.xlu0 %1866, %v1864
          %v1868 = vpop.permute.xlu0 %1867
          %v1870 = vsel %vm1862, %v1868, 0.0
          %v1871 = vsel %vm1863, %v1868, 0.0
          %v1872 = vadd.f32 %v1857, %v1870
          %v1873 = vadd.f32 %v1858, %v1871
          %vm1874 = vcmp.eq.s32.totalorder %v1860, 201
          %vm1875 = vcmp.eq.s32.totalorder %v1861, 201
          %1876 = vset.pattern.permute.xlu0 1
          %1877 = vperm.xlu0 %1876, %v1864
          %v1878 = vpop.permute.xlu0 %1877
          %v1880 = vsel %vm1874, %v1878, 0.0
          %v1881 = vsel %vm1875, %v1878, 0.0
          %v1882 = vadd.f32 %v1872, %v1880
          %v1883 = vadd.f32 %v1873, %v1881
          %vm1884 = vcmp.eq.s32.totalorder %v1860, 202
          %vm1885 = vcmp.eq.s32.totalorder %v1861, 202
          %1886 = vset.pattern.permute.xlu0 2
          %1887 = vperm.xlu0 %1886, %v1864
          %v1888 = vpop.permute.xlu0 %1887
          %v1890 = vsel %vm1884, %v1888, 0.0
          %v1891 = vsel %vm1885, %v1888, 0.0
          %v1892 = vadd.f32 %v1882, %v1890
          %v1893 = vadd.f32 %v1883, %v1891
          %vm1894 = vcmp.eq.s32.totalorder %v1860, 203
          %vm1895 = vcmp.eq.s32.totalorder %v1861, 203
          %1896 = vset.pattern.permute.xlu0 3
          %1897 = vperm.xlu0 %1896, %v1864
          %v1898 = vpop.permute.xlu0 %1897
          %v1900 = vsel %vm1894, %v1898, 0.0
          %v1901 = vsel %vm1895, %v1898, 0.0
          %v1902 = vadd.f32 %v1892, %v1900
          %v1903 = vadd.f32 %v1893, %v1901
          %vm1904 = vcmp.eq.s32.totalorder %v1860, 204
          %vm1905 = vcmp.eq.s32.totalorder %v1861, 204
          %1906 = vset.pattern.permute.xlu0 4
          %1907 = vperm.xlu0 %1906, %v1864
          %v1908 = vpop.permute.xlu0 %1907
          %v1910 = vsel %vm1904, %v1908, 0.0
          %v1911 = vsel %vm1905, %v1908, 0.0
          %v1912 = vadd.f32 %v1902, %v1910
          %v1913 = vadd.f32 %v1903, %v1911
          %vm1914 = vcmp.eq.s32.totalorder %v1860, 205
          %vm1915 = vcmp.eq.s32.totalorder %v1861, 205
          %1916 = vset.pattern.permute.xlu0 5
          %1917 = vperm.xlu0 %1916, %v1864
          %v1918 = vpop.permute.xlu0 %1917
          %v1920 = vsel %vm1914, %v1918, 0.0
          %v1921 = vsel %vm1915, %v1918, 0.0
          %v1922 = vadd.f32 %v1912, %v1920
          %v1923 = vadd.f32 %v1913, %v1921
          %vm1924 = vcmp.eq.s32.totalorder %v1860, 206
          %vm1925 = vcmp.eq.s32.totalorder %v1861, 206
          %1926 = vset.pattern.permute.xlu0 6
          %1927 = vperm.xlu0 %1926, %v1864
          %v1928 = vpop.permute.xlu0 %1927
          %v1930 = vsel %vm1924, %v1928, 0.0
          %v1931 = vsel %vm1925, %v1928, 0.0
          %v1932 = vadd.f32 %v1922, %v1930
          %v1933 = vadd.f32 %v1923, %v1931
          %vm1934 = vcmp.eq.s32.totalorder %v1860, 207
          %vm1935 = vcmp.eq.s32.totalorder %v1861, 207
          %1936 = vset.pattern.permute.xlu0 7
          %1937 = vperm.xlu0 %1936, %v1864
          %v1938 = vpop.permute.xlu0 %1937
          %v1940 = vsel %vm1934, %v1938, 0.0
          %v1941 = vsel %vm1935, %v1938, 0.0
          %v1942 = vadd.f32 %v1932, %v1940
          %v1943 = vadd.f32 %v1933, %v1941
          %v1944 = vld [vmem:[%s6] sm:$0x3]
          %v1945 = vld [vmem:[#allocation8] sm:$0x3]
          %1946 = vset.pattern.permute.xlu0 0
          %1947 = vperm.xlu0 %1946, %v1944
          %v1948 = vpop.permute.xlu0 %1947
          %vm1949 = vcmp.eq.s32.totalorder %v1860, %v1948
          %vm1950 = vcmp.eq.s32.totalorder %v1861, %v1948
          %1952 = vset.pattern.permute.xlu0 0
          %1953 = vperm.xlu0 %1952, %v1945
          %v1954 = vpop.permute.xlu0 %1953
          %v1956 = vsel %vm1949, %v1954, 0.0
          %v1957 = vsel %vm1950, %v1954, 0.0
          %v1958 = vadd.f32 %v1942, %v1956
          %v1959 = vadd.f32 %v1943, %v1957
          %1960 = vset.pattern.permute.xlu0 1
          %1961 = vperm.xlu0 %1960, %v1944
          %v1962 = vpop.permute.xlu0 %1961
          %vm1963 = vcmp.eq.s32.totalorder %v1860, %v1962
          %vm1964 = vcmp.eq.s32.totalorder %v1861, %v1962
          %1965 = vset.pattern.permute.xlu0 1
          %1966 = vperm.xlu0 %1965, %v1945
          %v1967 = vpop.permute.xlu0 %1966
          %v1969 = vsel %vm1963, %v1967, 0.0
          %v1970 = vsel %vm1964, %v1967, 0.0
          %v1971 = vadd.f32 %v1958, %v1969
          %v1972 = vadd.f32 %v1959, %v1970
          %1973 = vset.pattern.permute.xlu0 2
          %1974 = vperm.xlu0 %1973, %v1944
          %v1975 = vpop.permute.xlu0 %1974
          %vm1976 = vcmp.eq.s32.totalorder %v1860, %v1975
          %vm1977 = vcmp.eq.s32.totalorder %v1861, %v1975
          %1978 = vset.pattern.permute.xlu0 2
          %1979 = vperm.xlu0 %1978, %v1945
          %v1980 = vpop.permute.xlu0 %1979
          %v1982 = vsel %vm1976, %v1980, 0.0
          %v1983 = vsel %vm1977, %v1980, 0.0
          %v1984 = vadd.f32 %v1971, %v1982
          %v1985 = vadd.f32 %v1972, %v1983
          %1986 = vset.pattern.permute.xlu0 3
          %1987 = vperm.xlu0 %1986, %v1944
          %v1988 = vpop.permute.xlu0 %1987
          %vm1989 = vcmp.eq.s32.totalorder %v1860, %v1988
          %vm1990 = vcmp.eq.s32.totalorder %v1861, %v1988
          %1991 = vset.pattern.permute.xlu0 3
          %1992 = vperm.xlu0 %1991, %v1945
          %v1993 = vpop.permute.xlu0 %1992
          %v1995 = vsel %vm1989, %v1993, 0.0
          %v1996 = vsel %vm1990, %v1993, 0.0
          %v1997 = vadd.f32 %v1984, %v1995
          %v1998 = vadd.f32 %v1985, %v1996
          %1999 = vset.pattern.permute.xlu0 4
          %2000 = vperm.xlu0 %1999, %v1944
          %v2001 = vpop.permute.xlu0 %2000
          %vm2002 = vcmp.eq.s32.totalorder %v1860, %v2001
          %vm2003 = vcmp.eq.s32.totalorder %v1861, %v2001
          %2004 = vset.pattern.permute.xlu0 4
          %2005 = vperm.xlu0 %2004, %v1945
          %v2006 = vpop.permute.xlu0 %2005
          %v2008 = vsel %vm2002, %v2006, 0.0
          %v2009 = vsel %vm2003, %v2006, 0.0
          %v2010 = vadd.f32 %v1997, %v2008
          %v2011 = vadd.f32 %v1998, %v2009
          %2012 = vset.pattern.permute.xlu0 5
          %2013 = vperm.xlu0 %2012, %v1944
          %v2014 = vpop.permute.xlu0 %2013
          %vm2015 = vcmp.eq.s32.totalorder %v1860, %v2014
          %vm2016 = vcmp.eq.s32.totalorder %v1861, %v2014
          %2017 = vset.pattern.permute.xlu0 5
          %2018 = vperm.xlu0 %2017, %v1945
          %v2019 = vpop.permute.xlu0 %2018
          %v2021 = vsel %vm2015, %v2019, 0.0
          %v2022 = vsel %vm2016, %v2019, 0.0
          %v2023 = vadd.f32 %v2010, %v2021
          %v2024 = vadd.f32 %v2011, %v2022
          %2025 = vset.pattern.permute.xlu0 6
          %2026 = vperm.xlu0 %2025, %v1944
          %v2027 = vpop.permute.xlu0 %2026
          %vm2028 = vcmp.eq.s32.totalorder %v1860, %v2027
          %vm2029 = vcmp.eq.s32.totalorder %v1861, %v2027
          %2030 = vset.pattern.permute.xlu0 6
          %2031 = vperm.xlu0 %2030, %v1945
          %v2032 = vpop.permute.xlu0 %2031
          %v2034 = vsel %vm2028, %v2032, 0.0
          %v2035 = vsel %vm2029, %v2032, 0.0
          %v2036 = vadd.f32 %v2023, %v2034
          %v2037 = vadd.f32 %v2024, %v2035
          %2038 = vset.pattern.permute.xlu0 7
          %2039 = vperm.xlu0 %2038, %v1944
          %v2040 = vpop.permute.xlu0 %2039
          %vm2041 = vcmp.eq.s32.totalorder %v1860, %v2040
          %vm2042 = vcmp.eq.s32.totalorder %v1861, %v2040
          %2043 = vset.pattern.permute.xlu0 7
          %2044 = vperm.xlu0 %2043, %v1945
          %v2045 = vpop.permute.xlu0 %2044
          %v2047 = vsel %vm2041, %v2045, 0.0
          %v2048 = vsel %vm2042, %v2045, 0.0
          %v2049 = vadd.f32 %v2036, %v2047
          %v2050 = vadd.f32 %v2037, %v2048
          %v2051 = vmax.f32 %v2049, 1e-08
          %v2052 = vmax.f32 %v2050, 1e-08
          %v2053 = vlog2.pop %v2051
          %v2054 = vmul.f32 %v2053, 0.6931472
          %v2055 = vlog2.pop %v2052
          %v2056 = vmul.f32 %v2055, 0.6931472
          %2057 = vst [vmem:[#allocation18] sm:$0x3] %v2054
          %2058 = vst [vmem:[#allocation18 + $0x2] sm:$0x3] %v2056
          %v2059 = vld [vmem:[#allocation4] sm:$0x3]
          %vm2060 = vcmask 254976
          %2061 = vst.msk [vmem:[#allocation19] sm:$0x3] %vm2060, %v2059
          %v2062 = vld [vmem:[#allocation5] sm:$0x3]
          %2063 = vst.msk [vmem:[#allocation21] sm:$0x3] %vm2060, %v2062
        $region254: #{tpu_custom_call.1} parent=173 // pred_fallthru
          _
        // Predicated region
        $region255: #{tpu_custom_call.1} parent=173 // pred_check
          %p2064 = pneg %p487
        $region256: #{tpu_custom_call.1} parent=173 // pred_check_branch
          %2066 = sbr.rel (%p2064) target = $region258
        $region257: #{tpu_custom_call.1} parent=173 // pred_region
          %s2068 = ssub.s32 64, 64
          %2069 = vsyncadd [#allocation14], %s2068
          %s2070 = sshll.u32 [#allocation18], 4
          %s2071 = int_to_ptr.vmem [resolvable:$true] %s2070
          %2076 = dma.vmem_to_hbm [thread:$0]  %s2071, 64, %s21, [#allocation14], 32, 32, 2
        $region258: #{tpu_custom_call.1} parent=173 // pred_fallthru
          _
        // Predicated region
        $region259: #{tpu_custom_call.1} parent=173 // pred_check
          %p2077 = pneg %p508
        $region260: #{tpu_custom_call.1} parent=173 // pred_check_branch
          %2079 = sbr.rel (%p2077) target = $region262
        $region261: #{tpu_custom_call.1} parent=173 // pred_region
          %s2081 = ssub.s32 32, 32
          %2082 = vsyncadd [#allocation20], %s2081
          %s2084 = sshll.u32 [#allocation19], 4
          %s2085 = int_to_ptr.vmem [resolvable:$true] %s2084
          %2087 = dma.vmem_to_hbm [thread:$0]  %s2085, 32, %s22, [#allocation20]
        $region262: #{tpu_custom_call.1} parent=173 // pred_fallthru
          _
        // Predicated region
        $region263: #{tpu_custom_call.1} parent=173 // pred_check
          %p2088 = pneg %p529
        $region264: #{tpu_custom_call.1} parent=173 // pred_check_branch
          %2090 = sbr.rel (%p2088) target = $region266
        $region265: #{tpu_custom_call.1} parent=173 // pred_region
          %s2092 = ssub.s32 32, 32
          %2093 = vsyncadd [#allocation20], %s2092
          %s2095 = sshll.u32 [#allocation21], 4
          %s2096 = int_to_ptr.vmem [resolvable:$true] %s2095
          %2098 = dma.vmem_to_hbm [thread:$0]  %s2096, 32, %s23, [#allocation20]
        $region266: #{tpu_custom_call.1} parent=173 // pred_fallthru
          _
        // Predicated region
        $region267: #{tpu_custom_call.1} parent=173 // pred_check
          %p2099 = pneg %p487
        $region268: #{tpu_custom_call.1} parent=173 // pred_check_branch
          %2101 = sbr.rel (%p2099) target = $region270
        $region269: #{tpu_custom_call.1} parent=173 // pred_region
          %2102 = dma.done [#allocation14], 64
        $region270: #{tpu_custom_call.1} parent=173 // pred_fallthru
          _
        // Predicated region
        $region271: #{tpu_custom_call.1} parent=173 // pred_check
          %p2103 = pneg %p508
        $region272: #{tpu_custom_call.1} parent=173 // pred_check_branch
          %2105 = sbr.rel (%p2103) target = $region274
        $region273: #{tpu_custom_call.1} parent=173 // pred_region
          %2106 = dma.done [#allocation20], 32
        $region274: #{tpu_custom_call.1} parent=173 // pred_fallthru
          _
        // Predicated region
        $region275: #{tpu_custom_call.1} parent=173 // pred_check
          %p2107 = pneg %p529
        $region276: #{tpu_custom_call.1} parent=173 // pred_check_branch
          %2109 = sbr.rel (%p2107) target = $region278
        $region277: #{tpu_custom_call.1} parent=173 // pred_region
          %2110 = dma.done [#allocation20], 32
        $region278: #{tpu_custom_call.1} parent=173 // pred_fallthru
          _
      $region174: #{tpu_custom_call.1} parent=5 // pred_fallthru
        _
      %p2111 = scmp.le.s32.totalorder 2, %s34
      // Predicated region
      $region279: #{tpu_custom_call.1} parent=5 // pred_check
        %p2112 = pneg %p2111
      $region280: #{tpu_custom_call.1} parent=5 // pred_check_branch
        %2114 = sbr.rel (%p2112) target = $region282
      $region281: #{tpu_custom_call.1} parent=5 // pred_region
        %s2115 = ssub.s32 %s34, 2
      $region282: #{tpu_custom_call.1} parent=5 // pred_fallthru
        _
    $region6: #{tpu_custom_call.1} parent=1 // loop_footer
      %s38 = sadd.s32 1, %s34
    $region7: #{tpu_custom_call.1} parent=1 // loop_footer_branch
      %33 = sbr.rel target = $region3
    $region8: #{tpu_custom_call.1} parent=1 // loop_exit
      _
    %2116 = vsyncpa [#allocation14], 1
    %s2117 = scalar_lea.sflag [#allocation14], 1
    %2118 = vsyncpa %s2117, 1
    %2119 = vsyncpa [#allocation20], 1
    %2120 = vsyncpa [#allocation15], 1
    %s2121 = scalar_lea.sflag [#allocation15], 1
    %2122 = vsyncpa %s2121, 1
  %2123 = vsyncmov [#allocation11]
  %s2124 = vpop.sfrf %2123
  %p2125 = scmp.eq.s32.totalorder %s2124, 0
  %p2126 = pneg %p2125
  %2128 = shalt.err (%p2126)
  %s2129 = scalar_lea.sflag [#allocation11], 1
  %2130 = vsyncmov %s2129
  %s2131 = vpop.sfrf %2130
  %p2132 = scmp.eq.s32.totalorder %s2131, 0
  %p2133 = pneg %p2132
  %2135 = shalt.err (%p2133)

</llo_original>
